<compile_context>
chip_gen: v7x
topology: tpu7x:2x2x1
jax: 0.10.0
libtpu: 0.0.40
codegen_flags: <defaults>
</compile_context>

<pallas_src>
import math

import jax
import jax.numpy as jnp
from jax.experimental import pallas as pl
from jax.experimental.pallas import tpu as pltpu

# Module constants (from DynamicServiceEncoder / Duel_Q_Net __init__)
HIDDEN = 64            # encoder hidden_dim == attention embed_dim (== T, module quirk)
C1 = 32                # first conv channels
NUM_HEADS = 2
HEAD_DIM = HIDDEN // NUM_HEADS
N_NETS = 2             # Double_Duel_Q_Net = two independent Duel_Q_Net


def init_params(key, feat_dim, fc_width, action_dim):
    """Deterministic synthetic parameters, stacked over the two Q networks."""
    ks = jax.random.split(key, 14)

    def rnd(k, shape, scale=0.1):
        return jax.random.normal(k, shape, dtype=jnp.float32) * scale

    return {
        # Conv1d(feat_dim, 32, 3, pad=1), Conv1d(32, 64, 3, pad=1)
        "conv1_w": rnd(ks[0], (N_NETS, C1, feat_dim, 3)),
        "conv1_b": rnd(ks[1], (N_NETS, C1)),
        "conv2_w": rnd(ks[2], (N_NETS, HIDDEN, C1, 3)),
        "conv2_b": rnd(ks[3], (N_NETS, HIDDEN)),
        # nn.MultiheadAttention(64, 2)
        "in_proj_w": rnd(ks[4], (N_NETS, 3 * HIDDEN, HIDDEN)),
        "in_proj_b": rnd(ks[5], (N_NETS, 3 * HIDDEN)),
        "out_proj_w": rnd(ks[6], (N_NETS, HIDDEN, HIDDEN)),
        "out_proj_b": rnd(ks[7], (N_NETS, HIDDEN)),
        # fc / A / V heads
        "fc_w": rnd(ks[8], (N_NETS, fc_width, HIDDEN)),
        "fc_b": rnd(ks[9], (N_NETS, fc_width)),
        "A_w": rnd(ks[10], (N_NETS, action_dim, fc_width)),
        "A_b": rnd(ks[11], (N_NETS, action_dim)),
        "V_w": rnd(ks[12], (N_NETS, 1, fc_width)),
        "V_b": rnd(ks[13], (N_NETS, 1)),
    }


def double_duel_q_net(obs, params):
    """Pallas forward of Double_Duel_Q_Net: obs (B,S,T,F) -> (q1, q2), each (B, action_dim)."""
    B, S, T, Fd = obs.shape
    L = B * S
    fc_width = params["fc_w"].shape[1]
    action_dim = params["A_w"].shape[1]
    assert T == HIDDEN, "original module requires time_steps == hidden_dim (64)"

    f32, bf16 = jnp.float32, jnp.bfloat16
    scale = 1.0 / math.sqrt(HEAD_DIM)

    # ----------------- wrapper glue: batched / lane-dense re-layout ---------
    # Activations: X_T[t, l*F + f] = obs[l, t, f]; the 3 conv-1 taps (t-1,t,t+1)
    # are pre-shifted here so the kernel does no input shifting at all.
    x3 = obs.reshape(L, T, Fd).astype(f32)
    xT = jnp.transpose(x3, (1, 0, 2)).reshape(T, L * Fd)
    xpad = jnp.pad(xT, ((1, 1), (0, 0)))
    xtaps = jnp.stack([xpad[0:T], xpad[1:T + 1], xpad[2:T + 2]], axis=0).astype(bf16)

    # Conv weights -> L-block-diagonal matrices: one matmul handles all B*S.
    eye_l = jnp.eye(L, dtype=f32)
    w1t = jnp.transpose(params["conv1_w"], (0, 3, 2, 1))            # (N,3,F,32)
    w1bd = jnp.einsum("ab,nkfo->nkafbo", eye_l, w1t).reshape(
        N_NETS, 3, L * Fd, L * C1).astype(bf16)                     # (N,3,L*F,L*32)
    w2t = jnp.transpose(params["conv2_w"], (0, 3, 2, 1))            # (N,3,32,64)
    w2bd = jnp.einsum("ab,nkco->nkacbo", eye_l, w2t).reshape(
        N_NETS, 3, L * C1, L * HIDDEN).astype(bf16)                 # (N,3,L*32,L*64)
    b1t = jnp.tile(params["conv1_b"], (1, L))[:, None, :]           # (N,1,L*32) f32
    b2t = jnp.tile(params["conv2_b"], (1, L))[:, None, :]           # (N,1,L*64) f32

    wqkv = params["in_proj_w"].astype(bf16)                         # (N,192,64)
    bqkv = params["in_proj_b"][:, :, None]                          # (N,192,1)
    wo = jnp.transpose(
        params["out_proj_w"].reshape(N_NETS, HIDDEN, NUM_HEADS, HEAD_DIM),
        (0, 2, 1, 3)).astype(bf16)                                  # (N,2,64,32) per-head out proj
    bo = params["out_proj_b"][:, :, None]                           # (N,64,1)

    # Pooling matrix: mean over conv channels (the attention "batch") and over
    # the S services, done as a single MXU matmul in the kernel.
    member = ((jnp.arange(L) // S)[:, None] == jnp.arange(B)[None, :]).astype(f32)
    pool = jnp.repeat(member / (S * HIDDEN), HIDDEN, axis=0).astype(bf16)   # (L*64, B)

    fcw = params["fc_w"].astype(bf16)                               # (N,fc,64)
    fcb = params["fc_b"][:, :, None]                                # (N,fc,1)
    aw = params["A_w"].astype(bf16)                                 # (N,A,fc)
    ab = params["A_b"][:, :, None]                                  # (N,A,1)
    vw = params["V_w"].astype(bf16)                                 # (N,1,fc)
    vb = params["V_b"][:, :, None]                                  # (N,1,1)

    def kernel(x_ref, w1_ref, b1_ref, w2_ref, b2_ref, wqkv_ref, bqkv_ref,
               wo_ref, bo_ref, pool_ref, fcw_ref, fcb_ref, aw_ref, ab_ref,
               vw_ref, vb_ref, q_ref, qkv_sc):

        def mm(a, b):  # bf16 MXU matmul with f32 accumulation
            return jnp.dot(a.astype(bf16), b.astype(bf16),
                           preferred_element_type=f32)

        # ---- conv1: three pre-shifted taps @ block-diag weights ------------
        c1 = (mm(x_ref[0], w1_ref[0, 0]) + mm(x_ref[1], w1_ref[0, 1])
              + mm(x_ref[2], w1_ref[0, 2]) + b1_ref[0])             # (T, L*32)
        c1 = jnp.maximum(c1, 0.0)

        # ---- conv2: whole-tile time shifts (l lives on lanes, so no per-l
        # boundary masks are needed; 2 concats total, direction-unambiguous) --
        zrow = jnp.zeros((1, L * C1), f32)
        c1_prev = jnp.concatenate([zrow, c1[:T - 1, :]], axis=0)
        c1_next = jnp.concatenate([c1[1:, :], zrow], axis=0)
        c2 = (mm(c1_prev, w2_ref[0, 0]) + mm(c1, w2_ref[0, 1])
              + mm(c1_next, w2_ref[0, 2]) + b2_ref[0])              # (T=E, L*64)

        # ---- fused Q/K/V projection: one (192,64)@(64,L*64) matmul ----------
        qkv_sc[...] = mm(wqkv_ref[0], c2) + bqkv_ref[0]             # (192, L*64)

        # ---- multi-head attention over the B*S axis, all queries at once ----
        # Lane rotation by s*64 pairs query block i with key block (i +/- s)
        # mod L; softmax is permutation-invariant per lane and V uses the same
        # rotation as K, so the result is independent of the roll convention.
        yT = jnp.zeros((HIDDEN, L * HIDDEN), f32) + bo_ref[0]       # (64, L*64)
        for h in range(NUM_HEADS):
            qh = qkv_sc[pl.ds(h * HEAD_DIM, HEAD_DIM), :]                    # (32, L*64)
            kh = qkv_sc[pl.ds(HIDDEN + h * HEAD_DIM, HEAD_DIM), :]
            vh = qkv_sc[pl.ds(2 * HIDDEN + h * HEAD_DIM, HEAD_DIM), :]
            svals = []
            for s in range(L):
                kr = kh if s == 0 else pltpu.roll(kh, (L - s) * HIDDEN, axis=1)
                svals.append(jnp.sum(qh * kr, axis=0, keepdims=True) * scale)  # (1, L*64)
            m = svals[0]
            for s in range(1, L):
                m = jnp.maximum(m, svals[s])
            es = [jnp.exp(sv - m) for sv in svals]
            denom = es[0]
            for s in range(1, L):
                denom = denom + es[s]
            inv = pl.reciprocal(denom, approx=True)                 # EUP slot, not VPU divide
            oh = (es[0] * inv) * vh
            for s in range(1, L):
                vr = pltpu.roll(vh, (L - s) * HIDDEN, axis=1)
                oh = oh + (es[s] * inv) * vr                        # (32, L*64)
            yT = yT + mm(wo_ref[0, h], oh)                          # (64, L*64)

        # ---- channel & service mean as one matmul, then dueling head --------
        sencT = mm(yT, pool_ref[...])                               # (64, B)
        fcT = jnp.maximum(mm(fcw_ref[0], sencT) + fcb_ref[0], 0.0)  # (fc, B)
        advT = mm(aw_ref[0], fcT) + ab_ref[0]                       # (A, B)
        valT = mm(vw_ref[0], fcT) + vb_ref[0]                       # (1, B)
        q_ref[0] = valT + advT - jnp.mean(advT, axis=0, keepdims=True)

    out = pl.pallas_call(
        kernel,
        grid=(N_NETS,),
        in_specs=[
            pl.BlockSpec((3, T, L * Fd), lambda n: (0, 0, 0)),
            pl.BlockSpec((1, 3, L * Fd, L * C1), lambda n: (n, 0, 0, 0)),
            pl.BlockSpec((1, 1, L * C1), lambda n: (n, 0, 0)),
            pl.BlockSpec((1, 3, L * C1, L * HIDDEN), lambda n: (n, 0, 0, 0)),
            pl.BlockSpec((1, 1, L * HIDDEN), lambda n: (n, 0, 0)),
            pl.BlockSpec((1, 3 * HIDDEN, HIDDEN), lambda n: (n, 0, 0)),
            pl.BlockSpec((1, 3 * HIDDEN, 1), lambda n: (n, 0, 0)),
            pl.BlockSpec((1, NUM_HEADS, HIDDEN, HEAD_DIM), lambda n: (n, 0, 0, 0)),
            pl.BlockSpec((1, HIDDEN, 1), lambda n: (n, 0, 0)),
            pl.BlockSpec((L * HIDDEN, B), lambda n: (0, 0)),
            pl.BlockSpec((1, fc_width, HIDDEN), lambda n: (n, 0, 0)),
            pl.BlockSpec((1, fc_width, 1), lambda n: (n, 0, 0)),
            pl.BlockSpec((1, action_dim, fc_width), lambda n: (n, 0, 0)),
            pl.BlockSpec((1, action_dim, 1), lambda n: (n, 0, 0)),
            pl.BlockSpec((1, 1, fc_width), lambda n: (n, 0, 0)),
            pl.BlockSpec((1, 1, 1), lambda n: (n, 0, 0)),
        ],
        out_specs=pl.BlockSpec((1, action_dim, B), lambda n: (n, 0, 0)),
        out_shape=jax.ShapeDtypeStruct((N_NETS, action_dim, B), jnp.float32),
        scratch_shapes=[pltpu.VMEM((3 * HIDDEN, L * HIDDEN), jnp.float32)],
        # The two Q-nets are independent: one per TensorCore on v7x.
        compiler_params=pltpu.CompilerParams(dimension_semantics=("parallel",)),
    )(xtaps, w1bd, b1t, w2bd, b2t, wqkv, bqkv, wo, bo, pool,
      fcw, fcb, aw, ab, vw, vb)

    q1 = out[0].T       # (B, action_dim)
    q2 = out[1].T
    return q1, q2


def reference_forward(obs, params):
    """Pure-JAX re-implementation of the PyTorch forward (correctness check)."""
    B, S, T, Fd = obs.shape
    L = B * S
    x = obs.reshape(L, T, Fd)
    outs = []
    for n in range(N_NETS):
        w1, b1 = params["conv1_w"][n], params["conv1_b"][n]
        w2, b2 = params["conv2_w"][n], params["conv2_b"][n]
        xp = jnp.pad(x, ((0, 0), (1, 1), (0, 0)))
        c1 = sum(jnp.einsum("ltf,of->lto", xp[:, k:k + T, :], w1[:, :, k]) for k in range(3)) + b1
        c1 = jax.nn.relu(c1)
        c1p = jnp.pad(c1, ((0, 0), (1, 1), (0, 0)))
        c2 = sum(jnp.einsum("ltc,oc->lto", c1p[:, k:k + T, :], w2[:, :, k]) for k in range(3)) + b2
        # MultiheadAttention applied on (L, N=channels, E=time), exactly as the PyTorch code
        xa = jnp.transpose(c2, (0, 2, 1))                              # (L, 64, T=64)
        W, bqkv = params["in_proj_w"][n], params["in_proj_b"][n]
        q = xa @ W[:HIDDEN].T + bqkv[:HIDDEN]
        k_ = xa @ W[HIDDEN:2 * HIDDEN].T + bqkv[HIDDEN:2 * HIDDEN]
        v = xa @ W[2 * HIDDEN:].T + bqkv[2 * HIDDEN:]
        N = xa.shape[1]
        qh = q.reshape(L, N, NUM_HEADS, HEAD_DIM)
        kh = k_.reshape(L, N, NUM_HEADS, HEAD_DIM)
        vh = v.reshape(L, N, NUM_HEADS, HEAD_DIM)
        scores = jnp.einsum("inhd,jnhd->nhij", qh, kh) / math.sqrt(HEAD_DIM)
        attn = jax.nn.softmax(scores, axis=-1)
        oh = jnp.einsum("nhij,jnhd->inhd", attn, vh)
        o = oh.reshape(L, N, HIDDEN) @ params["out_proj_w"][n].T + params["out_proj_b"][n]
        enc = o.mean(axis=1).reshape(B, S, HIDDEN).mean(axis=1)        # (B, 64)
        h1 = jax.nn.relu(enc @ params["fc_w"][n].T + params["fc_b"][n])
        adv = h1 @ params["A_w"][n].T + params["A_b"][n]
        val = h1 @ params["V_w"][n].T + params["V_b"][n]
        outs.append(val + (adv - adv.mean(axis=1, keepdims=True)))
    return outs[0], outs[1]


if __name__ == "__main__":
    key = jax.random.PRNGKey(0)
    B, S, T, FEAT = 2, 2, HIDDEN, 8      # T must equal hidden_dim=64 (module quirk)
    FC_WIDTH, ACTION_DIM = 32, 4

    pkey, okey = jax.random.split(key)
    params = init_params(pkey, FEAT, FC_WIDTH, ACTION_DIM)
    obs = jax.random.normal(okey, (B, S, T, FEAT), dtype=jnp.float32)

    q1, q2 = double_duel_q_net(obs, params)
    jax.block_until_ready((q1, q2))

    r1, r2 = reference_forward(obs, params)
    assert q1.shape == (B, ACTION_DIM) and q2.shape == (B, ACTION_DIM)
    # bf16 MXU operands (f32 accumulation) -> slightly looser atol than pure-f32.
    assert jnp.allclose(q1, r1, atol=5e-3, rtol=2e-2)
    assert jnp.allclose(q2, r2, atol=5e-3, rtol=2e-2)
    print("KERNEL_OK")
</pallas_src>

<mosaic_0001>
module attributes {stable_mosaic.version = 11 : i64} {
  func.func @kernel(%arg0: i32, %arg1: memref<3x64x32xbf16, #tpu.memory_space<vmem>>, %arg2: memref<1x3x32x128xbf16, #tpu.memory_space<vmem>>, %arg3: memref<1x1x128xf32, #tpu.memory_space<vmem>>, %arg4: memref<1x3x128x256xbf16, #tpu.memory_space<vmem>>, %arg5: memref<1x1x256xf32, #tpu.memory_space<vmem>>, %arg6: memref<1x192x64xbf16, #tpu.memory_space<vmem>>, %arg7: memref<1x192x1xf32, #tpu.memory_space<vmem>>, %arg8: memref<1x2x64x32xbf16, #tpu.memory_space<vmem>>, %arg9: memref<1x64x1xf32, #tpu.memory_space<vmem>>, %arg10: memref<256x2xbf16, #tpu.memory_space<vmem>>, %arg11: memref<1x32x64xbf16, #tpu.memory_space<vmem>>, %arg12: memref<1x32x1xf32, #tpu.memory_space<vmem>>, %arg13: memref<1x4x32xbf16, #tpu.memory_space<vmem>>, %arg14: memref<1x4x1xf32, #tpu.memory_space<vmem>>, %arg15: memref<1x1x32xbf16, #tpu.memory_space<vmem>>, %arg16: memref<1x1x1xf32, #tpu.memory_space<vmem>>, %arg17: memref<1x4x2xf32, #tpu.memory_space<vmem>>, %arg18: memref<192x256xf32, #tpu.memory_space<vmem>>) attributes {dimension_semantics = [#tpu.dimension_semantics<parallel>], iteration_bounds = array<i64: 2>, scalar_prefetch = 0 : i64, scratch_operands = 1 : i64, tpu.core_type = #tpu.core_type<tc>, window_params = [{pipeline_mode = #tpu.pipeline_mode<synchronous>, transform_indices = @transform_0, window_bounds = array<i64: 3, 64, 32>}, {transform_indices = @transform_1, window_bounds = array<i64: 1, 3, 32, 128>}, {transform_indices = @transform_2, window_bounds = array<i64: 1, 1, 128>}, {transform_indices = @transform_3, window_bounds = array<i64: 1, 3, 128, 256>}, {transform_indices = @transform_4, window_bounds = array<i64: 1, 1, 256>}, {transform_indices = @transform_5, window_bounds = array<i64: 1, 192, 64>}, {transform_indices = @transform_6, window_bounds = array<i64: 1, 192, 1>}, {transform_indices = @transform_7, window_bounds = array<i64: 1, 2, 64, 32>}, {transform_indices = @transform_8, window_bounds = array<i64: 1, 64, 1>}, {pipeline_mode = #tpu.pipeline_mode<synchronous>, transform_indices = @transform_9, window_bounds = array<i64: 256, 2>}, {transform_indices = @transform_10, window_bounds = array<i64: 1, 32, 64>}, {transform_indices = @transform_11, window_bounds = array<i64: 1, 32, 1>}, {transform_indices = @transform_12, window_bounds = array<i64: 1, 4, 32>}, {transform_indices = @transform_13, window_bounds = array<i64: 1, 4, 1>}, {transform_indices = @transform_14, window_bounds = array<i64: 1, 1, 32>}, {transform_indices = @transform_15, window_bounds = array<i64: 1, 1, 1>}, {transform_indices = @transform_16, window_bounds = array<i64: 1, 4, 2>}]} {
    %c0 = arith.constant 0 : index
    %c0_0 = arith.constant 0 : index
    %c0_1 = arith.constant 0 : index
    %0 = vector.load %arg1[%c0, %c0_0, %c0_1] : memref<3x64x32xbf16, #tpu.memory_space<vmem>>, vector<1x64x32xbf16>
    %1 = vector.shape_cast %0 : vector<1x64x32xbf16> to vector<64x32xbf16>
    %c0_2 = arith.constant 0 : index
    %c0_3 = arith.constant 0 : index
    %c0_4 = arith.constant 0 : index
    %c0_5 = arith.constant 0 : index
    %2 = vector.load %arg2[%c0_2, %c0_3, %c0_4, %c0_5] : memref<1x3x32x128xbf16, #tpu.memory_space<vmem>>, vector<1x1x32x128xbf16>
    %3 = vector.shape_cast %2 : vector<1x1x32x128xbf16> to vector<32x128xbf16>
    %cst = arith.constant dense<0.000000e+00> : vector<64x128xf32>
    %4 = tpu.matmul %1, %3, %cst {dimension_numbers = #tpu.dot_dimension_numbers<[1], [0], [0], [1], [0, 0, 1, 1], [], []>} : vector<64x32xbf16>, vector<32x128xbf16>, vector<64x128xf32> -> vector<64x128xf32>
    %c1 = arith.constant 1 : index
    %c0_6 = arith.constant 0 : index
    %c0_7 = arith.constant 0 : index
    %5 = vector.load %arg1[%c1, %c0_6, %c0_7] : memref<3x64x32xbf16, #tpu.memory_space<vmem>>, vector<1x64x32xbf16>
    %6 = vector.shape_cast %5 : vector<1x64x32xbf16> to vector<64x32xbf16>
    %c0_8 = arith.constant 0 : index
    %c1_9 = arith.constant 1 : index
    %c0_10 = arith.constant 0 : index
    %c0_11 = arith.constant 0 : index
    %7 = vector.load %arg2[%c0_8, %c1_9, %c0_10, %c0_11] : memref<1x3x32x128xbf16, #tpu.memory_space<vmem>>, vector<1x1x32x128xbf16>
    %8 = vector.shape_cast %7 : vector<1x1x32x128xbf16> to vector<32x128xbf16>
    %cst_12 = arith.constant dense<0.000000e+00> : vector<64x128xf32>
    %9 = tpu.matmul %6, %8, %cst_12 {dimension_numbers = #tpu.dot_dimension_numbers<[1], [0], [0], [1], [0, 0, 1, 1], [], []>} : vector<64x32xbf16>, vector<32x128xbf16>, vector<64x128xf32> -> vector<64x128xf32>
    %10 = arith.addf %4, %9 : vector<64x128xf32>
    %c2 = arith.constant 2 : index
    %c0_13 = arith.constant 0 : index
    %c0_14 = arith.constant 0 : index
    %11 = vector.load %arg1[%c2, %c0_13, %c0_14] : memref<3x64x32xbf16, #tpu.memory_space<vmem>>, vector<1x64x32xbf16>
    %12 = vector.shape_cast %11 : vector<1x64x32xbf16> to vector<64x32xbf16>
    %c0_15 = arith.constant 0 : index
    %c2_16 = arith.constant 2 : index
    %c0_17 = arith.constant 0 : index
    %c0_18 = arith.constant 0 : index
    %13 = vector.load %arg2[%c0_15, %c2_16, %c0_17, %c0_18] : memref<1x3x32x128xbf16, #tpu.memory_space<vmem>>, vector<1x1x32x128xbf16>
    %14 = vector.shape_cast %13 : vector<1x1x32x128xbf16> to vector<32x128xbf16>
    %cst_19 = arith.constant dense<0.000000e+00> : vector<64x128xf32>
    %15 = tpu.matmul %12, %14, %cst_19 {dimension_numbers = #tpu.dot_dimension_numbers<[1], [0], [0], [1], [0, 0, 1, 1], [], []>} : vector<64x32xbf16>, vector<32x128xbf16>, vector<64x128xf32> -> vector<64x128xf32>
    %16 = arith.addf %10, %15 : vector<64x128xf32>
    %c0_20 = arith.constant 0 : index
    %c0_21 = arith.constant 0 : index
    %c0_22 = arith.constant 0 : index
    %17 = vector.load %arg3[%c0_20, %c0_21, %c0_22] : memref<1x1x128xf32, #tpu.memory_space<vmem>>, vector<1x1x128xf32>
    %18 = vector.shape_cast %17 : vector<1x1x128xf32> to vector<1x128xf32>
    %19 = vector.broadcast %18 : vector<1x128xf32> to vector<64x128xf32>
    %20 = arith.addf %16, %19 : vector<64x128xf32>
    %cst_23 = arith.constant 0.000000e+00 : f32
    %21 = vector.broadcast %cst_23 : f32 to vector<64x128xf32>
    %22 = arith.maximumf %20, %21 : vector<64x128xf32>
    %cst_24 = arith.constant 0.000000e+00 : f32
    %23 = vector.broadcast %cst_24 : f32 to vector<1x128xf32>
    %24 = vector.extract_strided_slice %22 {offsets = [0, 0], sizes = [63, 128], strides = [1, 1]} : vector<64x128xf32> to vector<63x128xf32>
    %25 = tpu.concatenate %23, %24 in 0 : vector<1x128xf32>, vector<63x128xf32> -> vector<64x128xf32>
    %26 = vector.extract_strided_slice %22 {offsets = [1, 0], sizes = [63, 128], strides = [1, 1]} : vector<64x128xf32> to vector<63x128xf32>
    %27 = tpu.concatenate %26, %23 in 0 : vector<63x128xf32>, vector<1x128xf32> -> vector<64x128xf32>
    %c0_25 = arith.constant 0 : index
    %c0_26 = arith.constant 0 : index
    %c0_27 = arith.constant 0 : index
    %c0_28 = arith.constant 0 : index
    %28 = vector.load %arg4[%c0_25, %c0_26, %c0_27, %c0_28] : memref<1x3x128x256xbf16, #tpu.memory_space<vmem>>, vector<1x1x128x256xbf16>
    %29 = vector.shape_cast %28 : vector<1x1x128x256xbf16> to vector<128x256xbf16>
    %30 = arith.truncf %25 : vector<64x128xf32> to vector<64x128xbf16>
    %cst_29 = arith.constant dense<0.000000e+00> : vector<64x256xf32>
    %31 = tpu.matmul %30, %29, %cst_29 {dimension_numbers = #tpu.dot_dimension_numbers<[1], [0], [0], [1], [0, 0, 1, 1], [], []>} : vector<64x128xbf16>, vector<128x256xbf16>, vector<64x256xf32> -> vector<64x256xf32>
    %c0_30 = arith.constant 0 : index
    %c1_31 = arith.constant 1 : index
    %c0_32 = arith.constant 0 : index
    %c0_33 = arith.constant 0 : index
    %32 = vector.load %arg4[%c0_30, %c1_31, %c0_32, %c0_33] : memref<1x3x128x256xbf16, #tpu.memory_space<vmem>>, vector<1x1x128x256xbf16>
    %33 = vector.shape_cast %32 : vector<1x1x128x256xbf16> to vector<128x256xbf16>
    %34 = arith.truncf %22 : vector<64x128xf32> to vector<64x128xbf16>
    %cst_34 = arith.constant dense<0.000000e+00> : vector<64x256xf32>
    %35 = tpu.matmul %34, %33, %cst_34 {dimension_numbers = #tpu.dot_dimension_numbers<[1], [0], [0], [1], [0, 0, 1, 1], [], []>} : vector<64x128xbf16>, vector<128x256xbf16>, vector<64x256xf32> -> vector<64x256xf32>
    %36 = arith.addf %31, %35 : vector<64x256xf32>
    %c0_35 = arith.constant 0 : index
    %c2_36 = arith.constant 2 : index
    %c0_37 = arith.constant 0 : index
    %c0_38 = arith.constant 0 : index
    %37 = vector.load %arg4[%c0_35, %c2_36, %c0_37, %c0_38] : memref<1x3x128x256xbf16, #tpu.memory_space<vmem>>, vector<1x1x128x256xbf16>
    %38 = vector.shape_cast %37 : vector<1x1x128x256xbf16> to vector<128x256xbf16>
    %39 = arith.truncf %27 : vector<64x128xf32> to vector<64x128xbf16>
    %cst_39 = arith.constant dense<0.000000e+00> : vector<64x256xf32>
    %40 = tpu.matmul %39, %38, %cst_39 {dimension_numbers = #tpu.dot_dimension_numbers<[1], [0], [0], [1], [0, 0, 1, 1], [], []>} : vector<64x128xbf16>, vector<128x256xbf16>, vector<64x256xf32> -> vector<64x256xf32>
    %41 = arith.addf %36, %40 : vector<64x256xf32>
    %c0_40 = arith.constant 0 : index
    %c0_41 = arith.constant 0 : index
    %c0_42 = arith.constant 0 : index
    %42 = vector.load %arg5[%c0_40, %c0_41, %c0_42] : memref<1x1x256xf32, #tpu.memory_space<vmem>>, vector<1x1x256xf32>
    %43 = vector.shape_cast %42 : vector<1x1x256xf32> to vector<1x256xf32>
    %44 = vector.broadcast %43 : vector<1x256xf32> to vector<64x256xf32>
    %45 = arith.addf %41, %44 : vector<64x256xf32>
    %c0_43 = arith.constant 0 : index
    %c0_44 = arith.constant 0 : index
    %c0_45 = arith.constant 0 : index
    %46 = vector.load %arg6[%c0_43, %c0_44, %c0_45] : memref<1x192x64xbf16, #tpu.memory_space<vmem>>, vector<1x192x64xbf16>
    %47 = vector.shape_cast %46 : vector<1x192x64xbf16> to vector<192x64xbf16>
    %48 = arith.truncf %45 : vector<64x256xf32> to vector<64x256xbf16>
    %cst_46 = arith.constant dense<0.000000e+00> : vector<192x256xf32>
    %49 = tpu.matmul %47, %48, %cst_46 {dimension_numbers = #tpu.dot_dimension_numbers<[1], [0], [0], [1], [0, 0, 1, 1], [], []>} : vector<192x64xbf16>, vector<64x256xbf16>, vector<192x256xf32> -> vector<192x256xf32>
    %c0_47 = arith.constant 0 : index
    %c0_48 = arith.constant 0 : index
    %c0_49 = arith.constant 0 : index
    %50 = vector.load %arg7[%c0_47, %c0_48, %c0_49] : memref<1x192x1xf32, #tpu.memory_space<vmem>>, vector<1x192x1xf32>
    %51 = vector.shape_cast %50 : vector<1x192x1xf32> to vector<192x1xf32>
    %52 = vector.broadcast %51 : vector<192x1xf32> to vector<192x256xf32>
    %53 = arith.addf %49, %52 : vector<192x256xf32>
    %c0_50 = arith.constant 0 : index
    %c0_51 = arith.constant 0 : index
    %54 = vector.load %arg18[%c0_50, %c0_51] : memref<192x256xf32, #tpu.memory_space<vmem>>, vector<192x256xf32>
    tpu.vector_store %arg18[%c0_50, %c0_51], %53 {strides = array<i32>} : memref<192x256xf32, #tpu.memory_space<vmem>>, vector<192x256xf32>,
    %cst_52 = arith.constant 0.000000e+00 : f32
    %55 = vector.broadcast %cst_52 : f32 to vector<64x256xf32>
    %c0_53 = arith.constant 0 : index
    %c0_54 = arith.constant 0 : index
    %c0_55 = arith.constant 0 : index
    %56 = vector.load %arg9[%c0_53, %c0_54, %c0_55] : memref<1x64x1xf32, #tpu.memory_space<vmem>>, vector<1x64x1xf32>
    %57 = vector.shape_cast %56 : vector<1x64x1xf32> to vector<64x1xf32>
    %58 = vector.broadcast %57 : vector<64x1xf32> to vector<64x256xf32>
    %59 = arith.addf %55, %58 : vector<64x256xf32>
    %c0_56 = arith.constant 0 : index
    %c0_57 = arith.constant 0 : index
    %60 = vector.load %arg18[%c0_56, %c0_57] : memref<192x256xf32, #tpu.memory_space<vmem>>, vector<32x256xf32>
    %c64 = arith.constant 64 : index
    %c0_58 = arith.constant 0 : index
    %61 = vector.load %arg18[%c64, %c0_58] : memref<192x256xf32, #tpu.memory_space<vmem>>, vector<32x256xf32>
    %c128 = arith.constant 128 : index
    %c0_59 = arith.constant 0 : index
    %62 = vector.load %arg18[%c128, %c0_59] : memref<192x256xf32, #tpu.memory_space<vmem>>, vector<32x256xf32>
    %63 = arith.mulf %60, %61 : vector<32x256xf32>
    %cst_60 = arith.constant dense<0.000000e+00> : vector<256xf32>
    %64 = vector.multi_reduction <add>, %63, %cst_60 [0] : vector<32x256xf32> to vector<256xf32>
    %65 = vector.shape_cast %64 : vector<256xf32> to vector<1x256xf32>
    %cst_61 = arith.constant 0.176776692 : f32
    %66 = vector.broadcast %cst_61 : f32 to vector<1x256xf32>
    %67 = arith.mulf %65, %66 : vector<1x256xf32>
    %c192_i32 = arith.constant 192 : i32
    %68 = tpu.dynamic_rotate %61 by %c192_i32 dim 1 : vector<32x256xf32>, i32 -> vector<32x256xf32>
    %69 = arith.mulf %60, %68 : vector<32x256xf32>
    %cst_62 = arith.constant dense<0.000000e+00> : vector<256xf32>
    %70 = vector.multi_reduction <add>, %69, %cst_62 [0] : vector<32x256xf32> to vector<256xf32>
    %71 = vector.shape_cast %70 : vector<256xf32> to vector<1x256xf32>
    %cst_63 = arith.constant 0.176776692 : f32
    %72 = vector.broadcast %cst_63 : f32 to vector<1x256xf32>
    %73 = arith.mulf %71, %72 : vector<1x256xf32>
    %c128_i32 = arith.constant 128 : i32
    %74 = tpu.dynamic_rotate %61 by %c128_i32 dim 1 : vector<32x256xf32>, i32 -> vector<32x256xf32>
    %75 = arith.mulf %60, %74 : vector<32x256xf32>
    %cst_64 = arith.constant dense<0.000000e+00> : vector<256xf32>
    %76 = vector.multi_reduction <add>, %75, %cst_64 [0] : vector<32x256xf32> to vector<256xf32>
    %77 = vector.shape_cast %76 : vector<256xf32> to vector<1x256xf32>
    %cst_65 = arith.constant 0.176776692 : f32
    %78 = vector.broadcast %cst_65 : f32 to vector<1x256xf32>
    %79 = arith.mulf %77, %78 : vector<1x256xf32>
    %c64_i32 = arith.constant 64 : i32
    %80 = tpu.dynamic_rotate %61 by %c64_i32 dim 1 : vector<32x256xf32>, i32 -> vector<32x256xf32>
    %81 = arith.mulf %60, %80 : vector<32x256xf32>
    %cst_66 = arith.constant dense<0.000000e+00> : vector<256xf32>
    %82 = vector.multi_reduction <add>, %81, %cst_66 [0] : vector<32x256xf32> to vector<256xf32>
    %83 = vector.shape_cast %82 : vector<256xf32> to vector<1x256xf32>
    %cst_67 = arith.constant 0.176776692 : f32
    %84 = vector.broadcast %cst_67 : f32 to vector<1x256xf32>
    %85 = arith.mulf %83, %84 : vector<1x256xf32>
    %86 = arith.maximumf %67, %73 : vector<1x256xf32>
    %87 = arith.maximumf %86, %79 : vector<1x256xf32>
    %88 = arith.maximumf %87, %85 : vector<1x256xf32>
    %89 = arith.subf %67, %88 : vector<1x256xf32>
    %90 = math.exp %89 : vector<1x256xf32>
    %91 = arith.subf %73, %88 : vector<1x256xf32>
    %92 = math.exp %91 : vector<1x256xf32>
    %93 = arith.subf %79, %88 : vector<1x256xf32>
    %94 = math.exp %93 : vector<1x256xf32>
    %95 = arith.subf %85, %88 : vector<1x256xf32>
    %96 = math.exp %95 : vector<1x256xf32>
    %97 = arith.addf %90, %92 : vector<1x256xf32>
    %98 = arith.addf %97, %94 : vector<1x256xf32>
    %99 = arith.addf %98, %96 : vector<1x256xf32>
    %100 = tpu.reciprocal %99 {approx = true} : vector<1x256xf32> -> vector<1x256xf32>
    %101 = arith.mulf %90, %100 : vector<1x256xf32>
    %102 = vector.broadcast %101 : vector<1x256xf32> to vector<32x256xf32>
    %103 = arith.mulf %102, %62 : vector<32x256xf32>
    %c192_i32_68 = arith.constant 192 : i32
    %104 = tpu.dynamic_rotate %62 by %c192_i32_68 dim 1 : vector<32x256xf32>, i32 -> vector<32x256xf32>
    %105 = arith.mulf %92, %100 : vector<1x256xf32>
    %106 = vector.broadcast %105 : vector<1x256xf32> to vector<32x256xf32>
    %107 = arith.mulf %106, %104 : vector<32x256xf32>
    %108 = arith.addf %103, %107 : vector<32x256xf32>
    %c128_i32_69 = arith.constant 128 : i32
    %109 = tpu.dynamic_rotate %62 by %c128_i32_69 dim 1 : vector<32x256xf32>, i32 -> vector<32x256xf32>
    %110 = arith.mulf %94, %100 : vector<1x256xf32>
    %111 = vector.broadcast %110 : vector<1x256xf32> to vector<32x256xf32>
    %112 = arith.mulf %111, %109 : vector<32x256xf32>
    %113 = arith.addf %108, %112 : vector<32x256xf32>
    %c64_i32_70 = arith.constant 64 : i32
    %114 = tpu.dynamic_rotate %62 by %c64_i32_70 dim 1 : vector<32x256xf32>, i32 -> vector<32x256xf32>
    %115 = arith.mulf %96, %100 : vector<1x256xf32>
    %116 = vector.broadcast %115 : vector<1x256xf32> to vector<32x256xf32>
    %117 = arith.mulf %116, %114 : vector<32x256xf32>
    %118 = arith.addf %113, %117 : vector<32x256xf32>
    %c0_71 = arith.constant 0 : index
    %c0_72 = arith.constant 0 : index
    %c0_73 = arith.constant 0 : index
    %c0_74 = arith.constant 0 : index
    %119 = vector.load %arg8[%c0_71, %c0_72, %c0_73, %c0_74] : memref<1x2x64x32xbf16, #tpu.memory_space<vmem>>, vector<1x1x64x32xbf16>
    %120 = vector.shape_cast %119 : vector<1x1x64x32xbf16> to vector<64x32xbf16>
    %121 = arith.truncf %118 : vector<32x256xf32> to vector<32x256xbf16>
    %cst_75 = arith.constant dense<0.000000e+00> : vector<64x256xf32>
    %122 = tpu.matmul %120, %121, %cst_75 {dimension_numbers = #tpu.dot_dimension_numbers<[1], [0], [0], [1], [0, 0, 1, 1], [], []>} : vector<64x32xbf16>, vector<32x256xbf16>, vector<64x256xf32> -> vector<64x256xf32>
    %123 = arith.addf %59, %122 : vector<64x256xf32>
    %c32 = arith.constant 32 : index
    %c0_76 = arith.constant 0 : index
    %124 = vector.load %arg18[%c32, %c0_76] : memref<192x256xf32, #tpu.memory_space<vmem>>, vector<32x256xf32>
    %c96 = arith.constant 96 : index
    %c0_77 = arith.constant 0 : index
    %125 = vector.load %arg18[%c96, %c0_77] : memref<192x256xf32, #tpu.memory_space<vmem>>, vector<32x256xf32>
    %c160 = arith.constant 160 : index
    %c0_78 = arith.constant 0 : index
    %126 = vector.load %arg18[%c160, %c0_78] : memref<192x256xf32, #tpu.memory_space<vmem>>, vector<32x256xf32>
    %127 = arith.mulf %124, %125 : vector<32x256xf32>
    %cst_79 = arith.constant dense<0.000000e+00> : vector<256xf32>
    %128 = vector.multi_reduction <add>, %127, %cst_79 [0] : vector<32x256xf32> to vector<256xf32>
    %129 = vector.shape_cast %128 : vector<256xf32> to vector<1x256xf32>
    %cst_80 = arith.constant 0.176776692 : f32
    %130 = vector.broadcast %cst_80 : f32 to vector<1x256xf32>
    %131 = arith.mulf %129, %130 : vector<1x256xf32>
    %c192_i32_81 = arith.constant 192 : i32
    %132 = tpu.dynamic_rotate %125 by %c192_i32_81 dim 1 : vector<32x256xf32>, i32 -> vector<32x256xf32>
    %133 = arith.mulf %124, %132 : vector<32x256xf32>
    %cst_82 = arith.constant dense<0.000000e+00> : vector<256xf32>
    %134 = vector.multi_reduction <add>, %133, %cst_82 [0] : vector<32x256xf32> to vector<256xf32>
    %135 = vector.shape_cast %134 : vector<256xf32> to vector<1x256xf32>
    %cst_83 = arith.constant 0.176776692 : f32
    %136 = vector.broadcast %cst_83 : f32 to vector<1x256xf32>
    %137 = arith.mulf %135, %136 : vector<1x256xf32>
    %c128_i32_84 = arith.constant 128 : i32
    %138 = tpu.dynamic_rotate %125 by %c128_i32_84 dim 1 : vector<32x256xf32>, i32 -> vector<32x256xf32>
    %139 = arith.mulf %124, %138 : vector<32x256xf32>
    %cst_85 = arith.constant dense<0.000000e+00> : vector<256xf32>
    %140 = vector.multi_reduction <add>, %139, %cst_85 [0] : vector<32x256xf32> to vector<256xf32>
    %141 = vector.shape_cast %140 : vector<256xf32> to vector<1x256xf32>
    %cst_86 = arith.constant 0.176776692 : f32
    %142 = vector.broadcast %cst_86 : f32 to vector<1x256xf32>
    %143 = arith.mulf %141, %142 : vector<1x256xf32>
    %c64_i32_87 = arith.constant 64 : i32
    %144 = tpu.dynamic_rotate %125 by %c64_i32_87 dim 1 : vector<32x256xf32>, i32 -> vector<32x256xf32>
    %145 = arith.mulf %124, %144 : vector<32x256xf32>
    %cst_88 = arith.constant dense<0.000000e+00> : vector<256xf32>
    %146 = vector.multi_reduction <add>, %145, %cst_88 [0] : vector<32x256xf32> to vector<256xf32>
    %147 = vector.shape_cast %146 : vector<256xf32> to vector<1x256xf32>
    %cst_89 = arith.constant 0.176776692 : f32
    %148 = vector.broadcast %cst_89 : f32 to vector<1x256xf32>
    %149 = arith.mulf %147, %148 : vector<1x256xf32>
    %150 = arith.maximumf %131, %137 : vector<1x256xf32>
    %151 = arith.maximumf %150, %143 : vector<1x256xf32>
    %152 = arith.maximumf %151, %149 : vector<1x256xf32>
    %153 = arith.subf %131, %152 : vector<1x256xf32>
    %154 = math.exp %153 : vector<1x256xf32>
    %155 = arith.subf %137, %152 : vector<1x256xf32>
    %156 = math.exp %155 : vector<1x256xf32>
    %157 = arith.subf %143, %152 : vector<1x256xf32>
    %158 = math.exp %157 : vector<1x256xf32>
    %159 = arith.subf %149, %152 : vector<1x256xf32>
    %160 = math.exp %159 : vector<1x256xf32>
    %161 = arith.addf %154, %156 : vector<1x256xf32>
    %162 = arith.addf %161, %158 : vector<1x256xf32>
    %163 = arith.addf %162, %160 : vector<1x256xf32>
    %164 = tpu.reciprocal %163 {approx = true} : vector<1x256xf32> -> vector<1x256xf32>
    %165 = arith.mulf %154, %164 : vector<1x256xf32>
    %166 = vector.broadcast %165 : vector<1x256xf32> to vector<32x256xf32>
    %167 = arith.mulf %166, %126 : vector<32x256xf32>
    %c192_i32_90 = arith.constant 192 : i32
    %168 = tpu.dynamic_rotate %126 by %c192_i32_90 dim 1 : vector<32x256xf32>, i32 -> vector<32x256xf32>
    %169 = arith.mulf %156, %164 : vector<1x256xf32>
    %170 = vector.broadcast %169 : vector<1x256xf32> to vector<32x256xf32>
    %171 = arith.mulf %170, %168 : vector<32x256xf32>
    %172 = arith.addf %167, %171 : vector<32x256xf32>
    %c128_i32_91 = arith.constant 128 : i32
    %173 = tpu.dynamic_rotate %126 by %c128_i32_91 dim 1 : vector<32x256xf32>, i32 -> vector<32x256xf32>
    %174 = arith.mulf %158, %164 : vector<1x256xf32>
    %175 = vector.broadcast %174 : vector<1x256xf32> to vector<32x256xf32>
    %176 = arith.mulf %175, %173 : vector<32x256xf32>
    %177 = arith.addf %172, %176 : vector<32x256xf32>
    %c64_i32_92 = arith.constant 64 : i32
    %178 = tpu.dynamic_rotate %126 by %c64_i32_92 dim 1 : vector<32x256xf32>, i32 -> vector<32x256xf32>
    %179 = arith.mulf %160, %164 : vector<1x256xf32>
    %180 = vector.broadcast %179 : vector<1x256xf32> to vector<32x256xf32>
    %181 = arith.mulf %180, %178 : vector<32x256xf32>
    %182 = arith.addf %177, %181 : vector<32x256xf32>
    %c0_93 = arith.constant 0 : index
    %c1_94 = arith.constant 1 : index
    %c0_95 = arith.constant 0 : index
    %c0_96 = arith.constant 0 : index
    %183 = vector.load %arg8[%c0_93, %c1_94, %c0_95, %c0_96] : memref<1x2x64x32xbf16, #tpu.memory_space<vmem>>, vector<1x1x64x32xbf16>
    %184 = vector.shape_cast %183 : vector<1x1x64x32xbf16> to vector<64x32xbf16>
    %185 = arith.truncf %182 : vector<32x256xf32> to vector<32x256xbf16>
    %cst_97 = arith.constant dense<0.000000e+00> : vector<64x256xf32>
    %186 = tpu.matmul %184, %185, %cst_97 {dimension_numbers = #tpu.dot_dimension_numbers<[1], [0], [0], [1], [0, 0, 1, 1], [], []>} : vector<64x32xbf16>, vector<32x256xbf16>, vector<64x256xf32> -> vector<64x256xf32>
    %187 = arith.addf %123, %186 : vector<64x256xf32>
    %c0_98 = arith.constant 0 : index
    %c0_99 = arith.constant 0 : index
    %188 = vector.load %arg10[%c0_98, %c0_99] : memref<256x2xbf16, #tpu.memory_space<vmem>>, vector<256x2xbf16>
    %189 = arith.truncf %187 : vector<64x256xf32> to vector<64x256xbf16>
    %cst_100 = arith.constant dense<0.000000e+00> : vector<64x2xf32>
    %190 = tpu.matmul %189, %188, %cst_100 {dimension_numbers = #tpu.dot_dimension_numbers<[1], [0], [0], [1], [0, 0, 1, 1], [], []>} : vector<64x256xbf16>, vector<256x2xbf16>, vector<64x2xf32> -> vector<64x2xf32>
    %c0_101 = arith.constant 0 : index
    %c0_102 = arith.constant 0 : index
    %c0_103 = arith.constant 0 : index
    %191 = vector.load %arg11[%c0_101, %c0_102, %c0_103] : memref<1x32x64xbf16, #tpu.memory_space<vmem>>, vector<1x32x64xbf16>
    %192 = vector.shape_cast %191 : vector<1x32x64xbf16> to vector<32x64xbf16>
    %193 = arith.truncf %190 : vector<64x2xf32> to vector<64x2xbf16>
    %cst_104 = arith.constant dense<0.000000e+00> : vector<32x2xf32>
    %194 = tpu.matmul %192, %193, %cst_104 {dimension_numbers = #tpu.dot_dimension_numbers<[1], [0], [0], [1], [0, 0, 1, 1], [], []>} : vector<32x64xbf16>, vector<64x2xbf16>, vector<32x2xf32> -> vector<32x2xf32>
    %c0_105 = arith.constant 0 : index
    %c0_106 = arith.constant 0 : index
    %c0_107 = arith.constant 0 : index
    %195 = vector.load %arg12[%c0_105, %c0_106, %c0_107] : memref<1x32x1xf32, #tpu.memory_space<vmem>>, vector<1x32x1xf32>
    %196 = vector.shape_cast %195 : vector<1x32x1xf32> to vector<32x1xf32>
    %197 = vector.broadcast %196 : vector<32x1xf32> to vector<32x2xf32>
    %198 = arith.addf %194, %197 : vector<32x2xf32>
    %cst_108 = arith.constant 0.000000e+00 : f32
    %199 = vector.broadcast %cst_108 : f32 to vector<32x2xf32>
    %200 = arith.maximumf %198, %199 : vector<32x2xf32>
    %c0_109 = arith.constant 0 : index
    %c0_110 = arith.constant 0 : index
    %c0_111 = arith.constant 0 : index
    %201 = vector.load %arg13[%c0_109, %c0_110, %c0_111] : memref<1x4x32xbf16, #tpu.memory_space<vmem>>, vector<1x4x32xbf16>
    %202 = vector.shape_cast %201 : vector<1x4x32xbf16> to vector<4x32xbf16>
    %203 = arith.truncf %200 : vector<32x2xf32> to vector<32x2xbf16>
    %cst_112 = arith.constant dense<0.000000e+00> : vector<4x2xf32>
    %204 = tpu.matmul %202, %203, %cst_112 {dimension_numbers = #tpu.dot_dimension_numbers<[1], [0], [0], [1], [0, 0, 1, 1], [], []>} : vector<4x32xbf16>, vector<32x2xbf16>, vector<4x2xf32> -> vector<4x2xf32>
    %c0_113 = arith.constant 0 : index
    %c0_114 = arith.constant 0 : index
    %c0_115 = arith.constant 0 : index
    %205 = vector.load %arg14[%c0_113, %c0_114, %c0_115] : memref<1x4x1xf32, #tpu.memory_space<vmem>>, vector<1x4x1xf32>
    %206 = vector.shape_cast %205 : vector<1x4x1xf32> to vector<4x1xf32>
    %207 = vector.broadcast %206 : vector<4x1xf32> to vector<4x2xf32>
    %208 = arith.addf %204, %207 : vector<4x2xf32>
    %c0_116 = arith.constant 0 : index
    %c0_117 = arith.constant 0 : index
    %c0_118 = arith.constant 0 : index
    %209 = vector.load %arg15[%c0_116, %c0_117, %c0_118] : memref<1x1x32xbf16, #tpu.memory_space<vmem>>, vector<1x1x32xbf16>
    %210 = vector.shape_cast %209 : vector<1x1x32xbf16> to vector<1x32xbf16>
    %211 = arith.truncf %200 : vector<32x2xf32> to vector<32x2xbf16>
    %cst_119 = arith.constant dense<0.000000e+00> : vector<1x2xf32>
    %212 = tpu.matmul %210, %211, %cst_119 {dimension_numbers = #tpu.dot_dimension_numbers<[1], [0], [0], [1], [0, 0, 1, 1], [], []>} : vector<1x32xbf16>, vector<32x2xbf16>, vector<1x2xf32> -> vector<1x2xf32>
    %c0_120 = arith.constant 0 : index
    %c0_121 = arith.constant 0 : index
    %c0_122 = arith.constant 0 : index
    %213 = vector.load %arg16[%c0_120, %c0_121, %c0_122] : memref<1x1x1xf32, #tpu.memory_space<vmem>>, vector<1x1x1xf32>
    %214 = vector.shape_cast %213 : vector<1x1x1xf32> to vector<1x1xf32>
    %215 = vector.broadcast %214 : vector<1x1xf32> to vector<1x2xf32>
    %216 = arith.addf %212, %215 : vector<1x2xf32>
    %217 = vector.broadcast %216 : vector<1x2xf32> to vector<4x2xf32>
    %218 = arith.addf %217, %208 : vector<4x2xf32>
    %cst_123 = arith.constant dense<0.000000e+00> : vector<2xf32>
    %219 = vector.multi_reduction <add>, %208, %cst_123 [0] : vector<4x2xf32> to vector<2xf32>
    %220 = vector.shape_cast %219 : vector<2xf32> to vector<1x2xf32>
    %cst_124 = arith.constant 4.000000e+00 : f32
    %221 = vector.broadcast %cst_124 : f32 to vector<1x2xf32>
    %222 = arith.divf %220, %221 : vector<1x2xf32>
    %223 = vector.broadcast %222 : vector<1x2xf32> to vector<4x2xf32>
    %224 = arith.subf %218, %223 : vector<4x2xf32>
    %c0_125 = arith.constant 0 : index
    %c0_126 = arith.constant 0 : index
    %c0_127 = arith.constant 0 : index
    %225 = vector.load %arg17[%c0_125, %c0_126, %c0_127] : memref<1x4x2xf32, #tpu.memory_space<vmem>>, vector<1x4x2xf32>
    %226 = vector.shape_cast %225 : vector<1x4x2xf32> to vector<4x2xf32>
    %227 = vector.shape_cast %224 : vector<4x2xf32> to vector<1x4x2xf32>
    tpu.vector_store %arg17[%c0_125, %c0_126, %c0_127], %227 {strides = array<i32>} : memref<1x4x2xf32, #tpu.memory_space<vmem>>, vector<1x4x2xf32>,
    return
  }
  func.func @transform_0(%arg0: i32) -> (i32, i32, i32) {
    %c0_i32 = arith.constant 0 : i32
    %c0_i32_0 = arith.constant 0 : i32
    %c0_i32_1 = arith.constant 0 : i32
    %c0_i32_2 = arith.constant 0 : i32
    return %c0_i32, %c0_i32_0, %c0_i32_1 : i32, i32, i32
  }
  func.func @transform_1(%arg0: i32) -> (i32, i32, i32, i32) {
    %c0_i32 = arith.constant 0 : i32
    %c0_i32_0 = arith.constant 0 : i32
    %c0_i32_1 = arith.constant 0 : i32
    %c0_i32_2 = arith.constant 0 : i32
    return %arg0, %c0_i32, %c0_i32_0, %c0_i32_1 : i32, i32, i32, i32
  }
  func.func @transform_2(%arg0: i32) -> (i32, i32, i32) {
    %c0_i32 = arith.constant 0 : i32
    %c0_i32_0 = arith.constant 0 : i32
    %c0_i32_1 = arith.constant 0 : i32
    return %arg0, %c0_i32, %c0_i32_0 : i32, i32, i32
  }
  func.func @transform_3(%arg0: i32) -> (i32, i32, i32, i32) {
    %c0_i32 = arith.constant 0 : i32
    %c0_i32_0 = arith.constant 0 : i32
    %c0_i32_1 = arith.constant 0 : i32
    %c0_i32_2 = arith.constant 0 : i32
    return %arg0, %c0_i32, %c0_i32_0, %c0_i32_1 : i32, i32, i32, i32
  }
  func.func @transform_4(%arg0: i32) -> (i32, i32, i32) {
    %c0_i32 = arith.constant 0 : i32
    %c0_i32_0 = arith.constant 0 : i32
    %c0_i32_1 = arith.constant 0 : i32
    return %arg0, %c0_i32, %c0_i32_0 : i32, i32, i32
  }
  func.func @transform_5(%arg0: i32) -> (i32, i32, i32) {
    %c0_i32 = arith.constant 0 : i32
    %c0_i32_0 = arith.constant 0 : i32
    %c0_i32_1 = arith.constant 0 : i32
    return %arg0, %c0_i32, %c0_i32_0 : i32, i32, i32
  }
  func.func @transform_6(%arg0: i32) -> (i32, i32, i32) {
    %c0_i32 = arith.constant 0 : i32
    %c0_i32_0 = arith.constant 0 : i32
    %c0_i32_1 = arith.constant 0 : i32
    return %arg0, %c0_i32, %c0_i32_0 : i32, i32, i32
  }
  func.func @transform_7(%arg0: i32) -> (i32, i32, i32, i32) {
    %c0_i32 = arith.constant 0 : i32
    %c0_i32_0 = arith.constant 0 : i32
    %c0_i32_1 = arith.constant 0 : i32
    %c0_i32_2 = arith.constant 0 : i32
    return %arg0, %c0_i32, %c0_i32_0, %c0_i32_1 : i32, i32, i32, i32
  }
  func.func @transform_8(%arg0: i32) -> (i32, i32, i32) {
    %c0_i32 = arith.constant 0 : i32
    %c0_i32_0 = arith.constant 0 : i32
    %c0_i32_1 = arith.constant 0 : i32
    return %arg0, %c0_i32, %c0_i32_0 : i32, i32, i32
  }
  func.func @transform_9(%arg0: i32) -> (i32, i32) {
    %c0_i32 = arith.constant 0 : i32
    %c0_i32_0 = arith.constant 0 : i32
    %c0_i32_1 = arith.constant 0 : i32
    return %c0_i32, %c0_i32_0 : i32, i32
  }
  func.func @transform_10(%arg0: i32) -> (i32, i32, i32) {
    %c0_i32 = arith.constant 0 : i32
    %c0_i32_0 = arith.constant 0 : i32
    %c0_i32_1 = arith.constant 0 : i32
    return %arg0, %c0_i32, %c0_i32_0 : i32, i32, i32
  }
  func.func @transform_11(%arg0: i32) -> (i32, i32, i32) {
    %c0_i32 = arith.constant 0 : i32
    %c0_i32_0 = arith.constant 0 : i32
    %c0_i32_1 = arith.constant 0 : i32
    return %arg0, %c0_i32, %c0_i32_0 : i32, i32, i32
  }
  func.func @transform_12(%arg0: i32) -> (i32, i32, i32) {
    %c0_i32 = arith.constant 0 : i32
    %c0_i32_0 = arith.constant 0 : i32
    %c0_i32_1 = arith.constant 0 : i32
    return %arg0, %c0_i32, %c0_i32_0 : i32, i32, i32
  }
  func.func @transform_13(%arg0: i32) -> (i32, i32, i32) {
    %c0_i32 = arith.constant 0 : i32
    %c0_i32_0 = arith.constant 0 : i32
    %c0_i32_1 = arith.constant 0 : i32
    return %arg0, %c0_i32, %c0_i32_0 : i32, i32, i32
  }
  func.func @transform_14(%arg0: i32) -> (i32, i32, i32) {
    %c0_i32 = arith.constant 0 : i32
    %c0_i32_0 = arith.constant 0 : i32
    %c0_i32_1 = arith.constant 0 : i32
    return %arg0, %c0_i32, %c0_i32_0 : i32, i32, i32
  }
  func.func @transform_15(%arg0: i32) -> (i32, i32, i32) {
    %c0_i32 = arith.constant 0 : i32
    %c0_i32_0 = arith.constant 0 : i32
    %c0_i32_1 = arith.constant 0 : i32
    return %arg0, %c0_i32, %c0_i32_0 : i32, i32, i32
  }
  func.func @transform_16(%arg0: i32) -> (i32, i32, i32) {
    %c0_i32 = arith.constant 0 : i32
    %c0_i32_0 = arith.constant 0 : i32
    %c0_i32_1 = arith.constant 0 : i32
    return %arg0, %c0_i32, %c0_i32_0 : i32, i32, i32
  }
}

</mosaic_0001>

<llo_original>
// kernel: tpu_custom_call.1
$region0: #{tpu_custom_call.1}
  #allocation0 [shape = 'u32[]', space=smem, size = 0x4, offset = 0x4, fixed_abs, tag = 'smem constant byte address 0x4 - core index']
  #allocation1 [shape = 'u32[144,128]{1,0:T(1,128)}', space=vmem, size = 0x12000, scoped, tag = 'internal scratch']
  #allocation2 [shape = 'f32[192,256]{1,0:T(8,128)}', space=vmem, size = 0x30000, scoped, tag = 'scratch operand']
  %s0 = inlined_call_operand.vmem [shape: bf16[3,64,32], index: 0, kind: input, shape index: {}]
  %s1 = inlined_call_operand.vmem [shape: bf16[2,3,32,128], index: 1, kind: input, shape index: {}]
  %s2 = inlined_call_operand.vmem [shape: f32[2,1,128], index: 2, kind: input, shape index: {}]
  %s3 = inlined_call_operand.vmem [shape: bf16[2,3,128,256], index: 3, kind: input, shape index: {}]
  %s4 = inlined_call_operand.vmem [shape: f32[2,1,256], index: 4, kind: input, shape index: {}]
  %s5 = inlined_call_operand.vmem [shape: bf16[2,192,64], index: 5, kind: input, shape index: {}]
  %s6 = inlined_call_operand.vmem [shape: f32[2,192,1], index: 6, kind: input, shape index: {}]
  %s7 = inlined_call_operand.vmem [shape: bf16[2,2,64,32], index: 7, kind: input, shape index: {}]
  %s8 = inlined_call_operand.vmem [shape: f32[2,64,1], index: 8, kind: input, shape index: {}]
  %s9 = inlined_call_operand.vmem [shape: bf16[256,2], index: 9, kind: input, shape index: {}]
  %s10 = inlined_call_operand.vmem [shape: bf16[2,32,64], index: 10, kind: input, shape index: {}]
  %s11 = inlined_call_operand.vmem [shape: f32[2,32,1], index: 11, kind: input, shape index: {}]
  %s12 = inlined_call_operand.vmem [shape: bf16[2,4,32], index: 12, kind: input, shape index: {}]
  %s13 = inlined_call_operand.vmem [shape: f32[2,4,1], index: 13, kind: input, shape index: {}]
  %s14 = inlined_call_operand.vmem [shape: bf16[2,1,32], index: 14, kind: input, shape index: {}]
  %s15 = inlined_call_operand.vmem [shape: f32[2,1,1], index: 15, kind: input, shape index: {}]
  %s16 = inlined_call_operand.vmem [shape: f32[2,4,2], index: 16, kind: output, shape index: {}]
  %s17 = sld [smem:[#allocation0]]
  $region97: #{tpu_custom_call.1} parent=0
    _
  %s19 = ssub.s32 1, %s17
  %s20 = scalar_select 0, %s19, %s17
  loop: start=0, step=1, limit=4
  $region2: #{tpu_custom_call.1} parent=0 // loop_pre_header
    _
  $region3: #{tpu_custom_call.1} parent=0 // loop_header
    %s22 = sphi 0, %s26
    %p23 = scmp.ge.s32.totalorder %s22, 4
    %s30 = sphi 0, %s30
    %s32 = sphi 0, %s30
    %s33 = sphi 0, %s32
    %s47 = sphi 0, %s33
    %s53 = sphi 0, %s55
    %s56 = sphi 0, %s53
    %s57 = sphi 0, %s56
    %s73 = sphi 0, %s57
    %s79 = sphi 0, %s81
    %s82 = sphi 0, %s79
    %s83 = sphi 0, %s82
    %s99 = sphi 0, %s83
    %s105 = sphi 0, %s107
    %s108 = sphi 0, %s105
    %s109 = sphi 0, %s108
    %s125 = sphi 0, %s109
    %s131 = sphi 0, %s133
    %s134 = sphi 0, %s131
    %s135 = sphi 0, %s134
    %s151 = sphi 0, %s135
    %s157 = sphi 0, %s159
    %s160 = sphi 0, %s157
    %s161 = sphi 0, %s160
    %s177 = sphi 0, %s161
    %s183 = sphi 0, %s185
    %s186 = sphi 0, %s183
    %s187 = sphi 0, %s186
    %s203 = sphi 0, %s187
    %s209 = sphi 0, %s211
    %s212 = sphi 0, %s209
    %s213 = sphi 0, %s212
    %s229 = sphi 0, %s213
    %s235 = sphi 0, %s237
    %s238 = sphi 0, %s235
    %s239 = sphi 0, %s238
    %s255 = sphi 0, %s239
    %s259 = sphi 0, %s259
    %s261 = sphi 0, %s259
    %s262 = sphi 0, %s261
    %s276 = sphi 0, %s262
    %s282 = sphi 0, %s284
    %s285 = sphi 0, %s282
    %s286 = sphi 0, %s285
    %s302 = sphi 0, %s286
    %s308 = sphi 0, %s310
    %s311 = sphi 0, %s308
    %s312 = sphi 0, %s311
    %s328 = sphi 0, %s312
    %s334 = sphi 0, %s336
    %s337 = sphi 0, %s334
    %s338 = sphi 0, %s337
    %s354 = sphi 0, %s338
    %s360 = sphi 0, %s362
    %s363 = sphi 0, %s360
    %s364 = sphi 0, %s363
    %s380 = sphi 0, %s364
    %s386 = sphi 0, %s388
    %s389 = sphi 0, %s386
    %s390 = sphi 0, %s389
    %s406 = sphi 0, %s390
    %s412 = sphi 0, %s414
    %s415 = sphi 0, %s412
    %s416 = sphi 0, %s415
    %s432 = sphi 0, %s416
    %s438 = sphi 0, %s440
    %s441 = sphi 0, %s438
    %s442 = sphi 0, %s441
    %s458 = sphi 0, %s442
  $region4: #{tpu_custom_call.1} parent=0 // loop_header_branch
    %25 = sbr.rel (%p23) target = $region8
  $region5: #{tpu_custom_call.1} parent=0 // loop_body
    %s27 = ssub.s32 %s22, 1
    %s28 = ssub.s32 %s22, 2
    %s29 = sadd.s32 %s22, 1
    %s31 = sadd.s32 %s30, 1
    %p34 = scmp.eq.s32.totalorder %s22, 1
    %p35 = scmp.ne.s32.totalorder %s30, %s32
    %p36 = scmp.eq.s32.totalorder %s22, 0
    %p37 = por %p35, %p36
    %p38 = scmp.ne.s32.totalorder %s30, %s32
    %p39 = scmp.eq.s32.totalorder %s27, 1
    %p40 = por %p38, %p39
    %p41 = scmp.ne.s32.totalorder %s32, %s33
    %p42 = scmp.eq.s32.totalorder %s27, 0
    %p43 = por %p41, %p42
    %p44 = scmp.ne.s32.totalorder %s32, %s33
    %p45 = scmp.eq.s32.totalorder %s28, 1
    %p46 = por %p44, %p45
    %p48 = scmp.ne.s32.totalorder %s33, %s47
    %p49 = scmp.eq.s32.totalorder %s28, 0
    %p50 = por %p48, %p49
    %s51 = ssub.s32 %s22, %s29
    %p52 = scmp.eq.s32.totalorder %s51, 0
    %s54 = sadd.s32 %s53, 1
    %s55 = scalar_select %p52, %s53, %s54
    %p58 = pneg %p52
    %p59 = scmp.eq.s32.totalorder %s22, 1
    %p60 = por %p58, %p59
    %p61 = scmp.ne.s32.totalorder %s53, %s56
    %p62 = scmp.eq.s32.totalorder %s22, 0
    %p63 = por %p61, %p62
    %p64 = scmp.ne.s32.totalorder %s53, %s56
    %p65 = scmp.eq.s32.totalorder %s27, 1
    %p66 = por %p64, %p65
    %p67 = scmp.ne.s32.totalorder %s56, %s57
    %p68 = scmp.eq.s32.totalorder %s27, 0
    %p69 = por %p67, %p68
    %p70 = scmp.ne.s32.totalorder %s56, %s57
    %p71 = scmp.eq.s32.totalorder %s28, 1
    %p72 = por %p70, %p71
    %p74 = scmp.ne.s32.totalorder %s57, %s73
    %p75 = scmp.eq.s32.totalorder %s28, 0
    %p76 = por %p74, %p75
    %s77 = ssub.s32 %s22, %s29
    %p78 = scmp.eq.s32.totalorder %s77, 0
    %s80 = sadd.s32 %s79, 1
    %s81 = scalar_select %p78, %s79, %s80
    %p84 = pneg %p78
    %p85 = scmp.eq.s32.totalorder %s22, 1
    %p86 = por %p84, %p85
    %p87 = scmp.ne.s32.totalorder %s79, %s82
    %p88 = scmp.eq.s32.totalorder %s22, 0
    %p89 = por %p87, %p88
    %p90 = scmp.ne.s32.totalorder %s79, %s82
    %p91 = scmp.eq.s32.totalorder %s27, 1
    %p92 = por %p90, %p91
    %p93 = scmp.ne.s32.totalorder %s82, %s83
    %p94 = scmp.eq.s32.totalorder %s27, 0
    %p95 = por %p93, %p94
    %p96 = scmp.ne.s32.totalorder %s82, %s83
    %p97 = scmp.eq.s32.totalorder %s28, 1
    %p98 = por %p96, %p97
    %p100 = scmp.ne.s32.totalorder %s83, %s99
    %p101 = scmp.eq.s32.totalorder %s28, 0
    %p102 = por %p100, %p101
    %s103 = ssub.s32 %s22, %s29
    %p104 = scmp.eq.s32.totalorder %s103, 0
    %s106 = sadd.s32 %s105, 1
    %s107 = scalar_select %p104, %s105, %s106
    %p110 = pneg %p104
    %p111 = scmp.eq.s32.totalorder %s22, 1
    %p112 = por %p110, %p111
    %p113 = scmp.ne.s32.totalorder %s105, %s108
    %p114 = scmp.eq.s32.totalorder %s22, 0
    %p115 = por %p113, %p114
    %p116 = scmp.ne.s32.totalorder %s105, %s108
    %p117 = scmp.eq.s32.totalorder %s27, 1
    %p118 = por %p116, %p117
    %p119 = scmp.ne.s32.totalorder %s108, %s109
    %p120 = scmp.eq.s32.totalorder %s27, 0
    %p121 = por %p119, %p120
    %p122 = scmp.ne.s32.totalorder %s108, %s109
    %p123 = scmp.eq.s32.totalorder %s28, 1
    %p124 = por %p122, %p123
    %p126 = scmp.ne.s32.totalorder %s109, %s125
    %p127 = scmp.eq.s32.totalorder %s28, 0
    %p128 = por %p126, %p127
    %s129 = ssub.s32 %s22, %s29
    %p130 = scmp.eq.s32.totalorder %s129, 0
    %s132 = sadd.s32 %s131, 1
    %s133 = scalar_select %p130, %s131, %s132
    %p136 = pneg %p130
    %p137 = scmp.eq.s32.totalorder %s22, 1
    %p138 = por %p136, %p137
    %p139 = scmp.ne.s32.totalorder %s131, %s134
    %p140 = scmp.eq.s32.totalorder %s22, 0
    %p141 = por %p139, %p140
    %p142 = scmp.ne.s32.totalorder %s131, %s134
    %p143 = scmp.eq.s32.totalorder %s27, 1
    %p144 = por %p142, %p143
    %p145 = scmp.ne.s32.totalorder %s134, %s135
    %p146 = scmp.eq.s32.totalorder %s27, 0
    %p147 = por %p145, %p146
    %p148 = scmp.ne.s32.totalorder %s134, %s135
    %p149 = scmp.eq.s32.totalorder %s28, 1
    %p150 = por %p148, %p149
    %p152 = scmp.ne.s32.totalorder %s135, %s151
    %p153 = scmp.eq.s32.totalorder %s28, 0
    %p154 = por %p152, %p153
    %s155 = ssub.s32 %s22, %s29
    %p156 = scmp.eq.s32.totalorder %s155, 0
    %s158 = sadd.s32 %s157, 1
    %s159 = scalar_select %p156, %s157, %s158
    %p162 = pneg %p156
    %p163 = scmp.eq.s32.totalorder %s22, 1
    %p164 = por %p162, %p163
    %p165 = scmp.ne.s32.totalorder %s157, %s160
    %p166 = scmp.eq.s32.totalorder %s22, 0
    %p167 = por %p165, %p166
    %p168 = scmp.ne.s32.totalorder %s157, %s160
    %p169 = scmp.eq.s32.totalorder %s27, 1
    %p170 = por %p168, %p169
    %p171 = scmp.ne.s32.totalorder %s160, %s161
    %p172 = scmp.eq.s32.totalorder %s27, 0
    %p173 = por %p171, %p172
    %p174 = scmp.ne.s32.totalorder %s160, %s161
    %p175 = scmp.eq.s32.totalorder %s28, 1
    %p176 = por %p174, %p175
    %p178 = scmp.ne.s32.totalorder %s161, %s177
    %p179 = scmp.eq.s32.totalorder %s28, 0
    %p180 = por %p178, %p179
    %s181 = ssub.s32 %s22, %s29
    %p182 = scmp.eq.s32.totalorder %s181, 0
    %s184 = sadd.s32 %s183, 1
    %s185 = scalar_select %p182, %s183, %s184
    %p188 = pneg %p182
    %p189 = scmp.eq.s32.totalorder %s22, 1
    %p190 = por %p188, %p189
    %p191 = scmp.ne.s32.totalorder %s183, %s186
    %p192 = scmp.eq.s32.totalorder %s22, 0
    %p193 = por %p191, %p192
    %p194 = scmp.ne.s32.totalorder %s183, %s186
    %p195 = scmp.eq.s32.totalorder %s27, 1
    %p196 = por %p194, %p195
    %p197 = scmp.ne.s32.totalorder %s186, %s187
    %p198 = scmp.eq.s32.totalorder %s27, 0
    %p199 = por %p197, %p198
    %p200 = scmp.ne.s32.totalorder %s186, %s187
    %p201 = scmp.eq.s32.totalorder %s28, 1
    %p202 = por %p200, %p201
    %p204 = scmp.ne.s32.totalorder %s187, %s203
    %p205 = scmp.eq.s32.totalorder %s28, 0
    %p206 = por %p204, %p205
    %s207 = ssub.s32 %s22, %s29
    %p208 = scmp.eq.s32.totalorder %s207, 0
    %s210 = sadd.s32 %s209, 1
    %s211 = scalar_select %p208, %s209, %s210
    %p214 = pneg %p208
    %p215 = scmp.eq.s32.totalorder %s22, 1
    %p216 = por %p214, %p215
    %p217 = scmp.ne.s32.totalorder %s209, %s212
    %p218 = scmp.eq.s32.totalorder %s22, 0
    %p219 = por %p217, %p218
    %p220 = scmp.ne.s32.totalorder %s209, %s212
    %p221 = scmp.eq.s32.totalorder %s27, 1
    %p222 = por %p220, %p221
    %p223 = scmp.ne.s32.totalorder %s212, %s213
    %p224 = scmp.eq.s32.totalorder %s27, 0
    %p225 = por %p223, %p224
    %p226 = scmp.ne.s32.totalorder %s212, %s213
    %p227 = scmp.eq.s32.totalorder %s28, 1
    %p228 = por %p226, %p227
    %p230 = scmp.ne.s32.totalorder %s213, %s229
    %p231 = scmp.eq.s32.totalorder %s28, 0
    %p232 = por %p230, %p231
    %s233 = ssub.s32 %s22, %s29
    %p234 = scmp.eq.s32.totalorder %s233, 0
    %s236 = sadd.s32 %s235, 1
    %s237 = scalar_select %p234, %s235, %s236
    %p240 = pneg %p234
    %p241 = scmp.eq.s32.totalorder %s22, 1
    %p242 = por %p240, %p241
    %p243 = scmp.ne.s32.totalorder %s235, %s238
    %p244 = scmp.eq.s32.totalorder %s22, 0
    %p245 = por %p243, %p244
    %p246 = scmp.ne.s32.totalorder %s235, %s238
    %p247 = scmp.eq.s32.totalorder %s27, 1
    %p248 = por %p246, %p247
    %p249 = scmp.ne.s32.totalorder %s238, %s239
    %p250 = scmp.eq.s32.totalorder %s27, 0
    %p251 = por %p249, %p250
    %p252 = scmp.ne.s32.totalorder %s238, %s239
    %p253 = scmp.eq.s32.totalorder %s28, 1
    %p254 = por %p252, %p253
    %p256 = scmp.ne.s32.totalorder %s239, %s255
    %p257 = scmp.eq.s32.totalorder %s28, 0
    %p258 = por %p256, %p257
    %s260 = sadd.s32 %s259, 1
    %p263 = scmp.eq.s32.totalorder %s22, 1
    %p264 = scmp.ne.s32.totalorder %s259, %s261
    %p265 = scmp.eq.s32.totalorder %s22, 0
    %p266 = por %p264, %p265
    %p267 = scmp.ne.s32.totalorder %s259, %s261
    %p268 = scmp.eq.s32.totalorder %s27, 1
    %p269 = por %p267, %p268
    %p270 = scmp.ne.s32.totalorder %s261, %s262
    %p271 = scmp.eq.s32.totalorder %s27, 0
    %p272 = por %p270, %p271
    %p273 = scmp.ne.s32.totalorder %s261, %s262
    %p274 = scmp.eq.s32.totalorder %s28, 1
    %p275 = por %p273, %p274
    %p277 = scmp.ne.s32.totalorder %s262, %s276
    %p278 = scmp.eq.s32.totalorder %s28, 0
    %p279 = por %p277, %p278
    %s280 = ssub.s32 %s22, %s29
    %p281 = scmp.eq.s32.totalorder %s280, 0
    %s283 = sadd.s32 %s282, 1
    %s284 = scalar_select %p281, %s282, %s283
    %p287 = pneg %p281
    %p288 = scmp.eq.s32.totalorder %s22, 1
    %p289 = por %p287, %p288
    %p290 = scmp.ne.s32.totalorder %s282, %s285
    %p291 = scmp.eq.s32.totalorder %s22, 0
    %p292 = por %p290, %p291
    %p293 = scmp.ne.s32.totalorder %s282, %s285
    %p294 = scmp.eq.s32.totalorder %s27, 1
    %p295 = por %p293, %p294
    %p296 = scmp.ne.s32.totalorder %s285, %s286
    %p297 = scmp.eq.s32.totalorder %s27, 0
    %p298 = por %p296, %p297
    %p299 = scmp.ne.s32.totalorder %s285, %s286
    %p300 = scmp.eq.s32.totalorder %s28, 1
    %p301 = por %p299, %p300
    %p303 = scmp.ne.s32.totalorder %s286, %s302
    %p304 = scmp.eq.s32.totalorder %s28, 0
    %p305 = por %p303, %p304
    %s306 = ssub.s32 %s22, %s29
    %p307 = scmp.eq.s32.totalorder %s306, 0
    %s309 = sadd.s32 %s308, 1
    %s310 = scalar_select %p307, %s308, %s309
    %p313 = pneg %p307
    %p314 = scmp.eq.s32.totalorder %s22, 1
    %p315 = por %p313, %p314
    %p316 = scmp.ne.s32.totalorder %s308, %s311
    %p317 = scmp.eq.s32.totalorder %s22, 0
    %p318 = por %p316, %p317
    %p319 = scmp.ne.s32.totalorder %s308, %s311
    %p320 = scmp.eq.s32.totalorder %s27, 1
    %p321 = por %p319, %p320
    %p322 = scmp.ne.s32.totalorder %s311, %s312
    %p323 = scmp.eq.s32.totalorder %s27, 0
    %p324 = por %p322, %p323
    %p325 = scmp.ne.s32.totalorder %s311, %s312
    %p326 = scmp.eq.s32.totalorder %s28, 1
    %p327 = por %p325, %p326
    %p329 = scmp.ne.s32.totalorder %s312, %s328
    %p330 = scmp.eq.s32.totalorder %s28, 0
    %p331 = por %p329, %p330
    %s332 = ssub.s32 %s22, %s29
    %p333 = scmp.eq.s32.totalorder %s332, 0
    %s335 = sadd.s32 %s334, 1
    %s336 = scalar_select %p333, %s334, %s335
    %p339 = pneg %p333
    %p340 = scmp.eq.s32.totalorder %s22, 1
    %p341 = por %p339, %p340
    %p342 = scmp.ne.s32.totalorder %s334, %s337
    %p343 = scmp.eq.s32.totalorder %s22, 0
    %p344 = por %p342, %p343
    %p345 = scmp.ne.s32.totalorder %s334, %s337
    %p346 = scmp.eq.s32.totalorder %s27, 1
    %p347 = por %p345, %p346
    %p348 = scmp.ne.s32.totalorder %s337, %s338
    %p349 = scmp.eq.s32.totalorder %s27, 0
    %p350 = por %p348, %p349
    %p351 = scmp.ne.s32.totalorder %s337, %s338
    %p352 = scmp.eq.s32.totalorder %s28, 1
    %p353 = por %p351, %p352
    %p355 = scmp.ne.s32.totalorder %s338, %s354
    %p356 = scmp.eq.s32.totalorder %s28, 0
    %p357 = por %p355, %p356
    %s358 = ssub.s32 %s22, %s29
    %p359 = scmp.eq.s32.totalorder %s358, 0
    %s361 = sadd.s32 %s360, 1
    %s362 = scalar_select %p359, %s360, %s361
    %p365 = pneg %p359
    %p366 = scmp.eq.s32.totalorder %s22, 1
    %p367 = por %p365, %p366
    %p368 = scmp.ne.s32.totalorder %s360, %s363
    %p369 = scmp.eq.s32.totalorder %s22, 0
    %p370 = por %p368, %p369
    %p371 = scmp.ne.s32.totalorder %s360, %s363
    %p372 = scmp.eq.s32.totalorder %s27, 1
    %p373 = por %p371, %p372
    %p374 = scmp.ne.s32.totalorder %s363, %s364
    %p375 = scmp.eq.s32.totalorder %s27, 0
    %p376 = por %p374, %p375
    %p377 = scmp.ne.s32.totalorder %s363, %s364
    %p378 = scmp.eq.s32.totalorder %s28, 1
    %p379 = por %p377, %p378
    %p381 = scmp.ne.s32.totalorder %s364, %s380
    %p382 = scmp.eq.s32.totalorder %s28, 0
    %p383 = por %p381, %p382
    %s384 = ssub.s32 %s22, %s29
    %p385 = scmp.eq.s32.totalorder %s384, 0
    %s387 = sadd.s32 %s386, 1
    %s388 = scalar_select %p385, %s386, %s387
    %p391 = pneg %p385
    %p392 = scmp.eq.s32.totalorder %s22, 1
    %p393 = por %p391, %p392
    %p394 = scmp.ne.s32.totalorder %s386, %s389
    %p395 = scmp.eq.s32.totalorder %s22, 0
    %p396 = por %p394, %p395
    %p397 = scmp.ne.s32.totalorder %s386, %s389
    %p398 = scmp.eq.s32.totalorder %s27, 1
    %p399 = por %p397, %p398
    %p400 = scmp.ne.s32.totalorder %s389, %s390
    %p401 = scmp.eq.s32.totalorder %s27, 0
    %p402 = por %p400, %p401
    %p403 = scmp.ne.s32.totalorder %s389, %s390
    %p404 = scmp.eq.s32.totalorder %s28, 1
    %p405 = por %p403, %p404
    %p407 = scmp.ne.s32.totalorder %s390, %s406
    %p408 = scmp.eq.s32.totalorder %s28, 0
    %p409 = por %p407, %p408
    %s410 = ssub.s32 %s22, %s29
    %p411 = scmp.eq.s32.totalorder %s410, 0
    %s413 = sadd.s32 %s412, 1
    %s414 = scalar_select %p411, %s412, %s413
    %p417 = pneg %p411
    %p418 = scmp.eq.s32.totalorder %s22, 1
    %p419 = por %p417, %p418
    %p420 = scmp.ne.s32.totalorder %s412, %s415
    %p421 = scmp.eq.s32.totalorder %s22, 0
    %p422 = por %p420, %p421
    %p423 = scmp.ne.s32.totalorder %s412, %s415
    %p424 = scmp.eq.s32.totalorder %s27, 1
    %p425 = por %p423, %p424
    %p426 = scmp.ne.s32.totalorder %s415, %s416
    %p427 = scmp.eq.s32.totalorder %s27, 0
    %p428 = por %p426, %p427
    %p429 = scmp.ne.s32.totalorder %s415, %s416
    %p430 = scmp.eq.s32.totalorder %s28, 1
    %p431 = por %p429, %p430
    %p433 = scmp.ne.s32.totalorder %s416, %s432
    %p434 = scmp.eq.s32.totalorder %s28, 0
    %p435 = por %p433, %p434
    %s436 = ssub.s32 %s22, %s29
    %p437 = scmp.eq.s32.totalorder %s436, 0
    %s439 = sadd.s32 %s438, 1
    %s440 = scalar_select %p437, %s438, %s439
    %p443 = pneg %p437
    %p444 = scmp.eq.s32.totalorder %s22, 1
    %p445 = por %p443, %p444
    %p446 = scmp.ne.s32.totalorder %s438, %s441
    %p447 = scmp.eq.s32.totalorder %s22, 0
    %p448 = por %p446, %p447
    %p449 = scmp.ne.s32.totalorder %s438, %s441
    %p450 = scmp.eq.s32.totalorder %s27, 1
    %p451 = por %p449, %p450
    %p452 = scmp.ne.s32.totalorder %s441, %s442
    %p453 = scmp.eq.s32.totalorder %s27, 0
    %p454 = por %p452, %p453
    %p455 = scmp.ne.s32.totalorder %s441, %s442
    %p456 = scmp.eq.s32.totalorder %s28, 1
    %p457 = por %p455, %p456
    %p459 = scmp.ne.s32.totalorder %s442, %s458
    %p460 = scmp.eq.s32.totalorder %s28, 0
    %p461 = por %p459, %p460
    %p462 = scmp.le.s32.totalorder 1, %s22
    %p463 = scmp.lt.s32.totalorder %s22, 3
    %p464 = pnand %p462, %p463
    %p465 = pneg %p464
    // Predicated region
    $region9: #{tpu_custom_call.1} parent=5 // pred_check
      _
    $region10: #{tpu_custom_call.1} parent=5 // pred_check_branch
      %467 = sbr.rel (%p464) target = $region12
    $region11: #{tpu_custom_call.1} parent=5 // pred_region
      %s468 = ssub.s32 %s22, 1
      // Predicated region
      $region13: #{tpu_custom_call.1} parent=11 // pred_check
        %p469 = pneg %p43
      $region14: #{tpu_custom_call.1} parent=11 // pred_check_branch
        %471 = sbr.rel (%p469) target = $region16
      $region15: #{tpu_custom_call.1} parent=11 // pred_region
        _
      $region16: #{tpu_custom_call.1} parent=11 // pred_fallthru
        _
      // Predicated region
      $region17: #{tpu_custom_call.1} parent=11 // pred_check
        %p472 = pneg %p272
      $region18: #{tpu_custom_call.1} parent=11 // pred_check_branch
        %474 = sbr.rel (%p472) target = $region20
      $region19: #{tpu_custom_call.1} parent=11 // pred_region
        _
      $region20: #{tpu_custom_call.1} parent=11 // pred_fallthru
        _
    $region12: #{tpu_custom_call.1} parent=5 // pred_fallthru
      _
    %p475 = scmp.lt.s32.totalorder %s22, 2
    // Predicated region
    $region21: #{tpu_custom_call.1} parent=5 // pred_check
      %p476 = pneg %p475
    $region22: #{tpu_custom_call.1} parent=5 // pred_check_branch
      %478 = sbr.rel (%p476) target = $region24
    $region23: #{tpu_custom_call.1} parent=5 // pred_region
      // Predicated region
      $region25: #{tpu_custom_call.1} parent=23 // pred_check
        %p479 = pneg %p63
      $region26: #{tpu_custom_call.1} parent=23 // pred_check_branch
        %481 = sbr.rel (%p479) target = $region28
      $region27: #{tpu_custom_call.1} parent=23 // pred_region
        %p482 = scmp.lt.s32.totalorder %s22, 1
        %s483 = scalar_select %p482, %s22, 1
        %s484 = smul.addr %s483, 12
        %s485 = smul.addr %s484, 4
        %s486 = scalar_lea.vmem %s1, %s485
      $region28: #{tpu_custom_call.1} parent=23 // pred_fallthru
        _
      // Predicated region
      $region29: #{tpu_custom_call.1} parent=23 // pred_check
        %p487 = pneg %p89
      $region30: #{tpu_custom_call.1} parent=23 // pred_check_branch
        %489 = sbr.rel (%p487) target = $region32
      $region31: #{tpu_custom_call.1} parent=23 // pred_region
        %p490 = scmp.lt.s32.totalorder %s22, 1
        %s491 = scalar_select %p490, %s22, 1
        %s492 = scalar_lea.vmem %s2, %s491
      $region32: #{tpu_custom_call.1} parent=23 // pred_fallthru
        _
      // Predicated region
      $region33: #{tpu_custom_call.1} parent=23 // pred_check
        %p493 = pneg %p115
      $region34: #{tpu_custom_call.1} parent=23 // pred_check_branch
        %495 = sbr.rel (%p493) target = $region36
      $region35: #{tpu_custom_call.1} parent=23 // pred_region
        %p496 = scmp.lt.s32.totalorder %s22, 1
        %s497 = scalar_select %p496, %s22, 1
        %s498 = smul.addr %s497, 96
        %s499 = smul.addr %s498, 4
        %s500 = scalar_lea.vmem %s3, %s499
      $region36: #{tpu_custom_call.1} parent=23 // pred_fallthru
        _
      // Predicated region
      $region37: #{tpu_custom_call.1} parent=23 // pred_check
        %p501 = pneg %p141
      $region38: #{tpu_custom_call.1} parent=23 // pred_check_branch
        %503 = sbr.rel (%p501) target = $region40
      $region39: #{tpu_custom_call.1} parent=23 // pred_region
        %p504 = scmp.lt.s32.totalorder %s22, 1
        %s505 = scalar_select %p504, %s22, 1
        %s506 = smul.addr %s505, 2
        %s507 = scalar_lea.vmem %s4, %s506
      $region40: #{tpu_custom_call.1} parent=23 // pred_fallthru
        _
      // Predicated region
      $region41: #{tpu_custom_call.1} parent=23 // pred_check
        %p508 = pneg %p167
      $region42: #{tpu_custom_call.1} parent=23 // pred_check_branch
        %510 = sbr.rel (%p508) target = $region44
      $region43: #{tpu_custom_call.1} parent=23 // pred_region
        %p511 = scmp.lt.s32.totalorder %s22, 1
        %s512 = scalar_select %p511, %s22, 1
        %s513 = smul.addr %s512, 24
        %s514 = smul.addr %s513, 4
        %s515 = scalar_lea.vmem %s5, %s514
      $region44: #{tpu_custom_call.1} parent=23 // pred_fallthru
        _
      // Predicated region
      $region45: #{tpu_custom_call.1} parent=23 // pred_check
        %p516 = pneg %p193
      $region46: #{tpu_custom_call.1} parent=23 // pred_check_branch
        %518 = sbr.rel (%p516) target = $region48
      $region47: #{tpu_custom_call.1} parent=23 // pred_region
        %p519 = scmp.lt.s32.totalorder %s22, 1
        %s520 = scalar_select %p519, %s22, 1
        %s521 = smul.addr %s520, 24
        %s522 = smul.addr %s521, 8
        %s523 = scalar_lea.vmem %s6, %s522
      $region48: #{tpu_custom_call.1} parent=23 // pred_fallthru
        _
      // Predicated region
      $region49: #{tpu_custom_call.1} parent=23 // pred_check
        %p524 = pneg %p219
      $region50: #{tpu_custom_call.1} parent=23 // pred_check_branch
        %526 = sbr.rel (%p524) target = $region52
      $region51: #{tpu_custom_call.1} parent=23 // pred_region
        %p527 = scmp.lt.s32.totalorder %s22, 1
        %s528 = scalar_select %p527, %s22, 1
        %s529 = smul.addr %s528, 16
        %s530 = smul.addr %s529, 4
        %s531 = scalar_lea.vmem %s7, %s530
      $region52: #{tpu_custom_call.1} parent=23 // pred_fallthru
        _
      // Predicated region
      $region53: #{tpu_custom_call.1} parent=23 // pred_check
        %p532 = pneg %p245
      $region54: #{tpu_custom_call.1} parent=23 // pred_check_branch
        %534 = sbr.rel (%p532) target = $region56
      $region55: #{tpu_custom_call.1} parent=23 // pred_region
        %p535 = scmp.lt.s32.totalorder %s22, 1
        %s536 = scalar_select %p535, %s22, 1
        %s537 = smul.addr %s536, 8
        %s538 = smul.addr %s537, 8
        %s539 = scalar_lea.vmem %s8, %s538
      $region56: #{tpu_custom_call.1} parent=23 // pred_fallthru
        _
      // Predicated region
      $region57: #{tpu_custom_call.1} parent=23 // pred_check
        %p540 = pneg %p292
      $region58: #{tpu_custom_call.1} parent=23 // pred_check_branch
        %542 = sbr.rel (%p540) target = $region60
      $region59: #{tpu_custom_call.1} parent=23 // pred_region
        %p543 = scmp.lt.s32.totalorder %s22, 1
        %s544 = scalar_select %p543, %s22, 1
        %s545 = smul.addr %s544, 4
        %s546 = smul.addr %s545, 4
        %s547 = scalar_lea.vmem %s10, %s546
      $region60: #{tpu_custom_call.1} parent=23 // pred_fallthru
        _
      // Predicated region
      $region61: #{tpu_custom_call.1} parent=23 // pred_check
        %p548 = pneg %p318
      $region62: #{tpu_custom_call.1} parent=23 // pred_check_branch
        %550 = sbr.rel (%p548) target = $region64
      $region63: #{tpu_custom_call.1} parent=23 // pred_region
        %p551 = scmp.lt.s32.totalorder %s22, 1
        %s552 = scalar_select %p551, %s22, 1
        %s553 = smul.addr %s552, 4
        %s554 = smul.addr %s553, 8
        %s555 = scalar_lea.vmem %s11, %s554
      $region64: #{tpu_custom_call.1} parent=23 // pred_fallthru
        _
      // Predicated region
      $region65: #{tpu_custom_call.1} parent=23 // pred_check
        %p556 = pneg %p344
      $region66: #{tpu_custom_call.1} parent=23 // pred_check_branch
        %558 = sbr.rel (%p556) target = $region68
      $region67: #{tpu_custom_call.1} parent=23 // pred_region
        %p559 = scmp.lt.s32.totalorder %s22, 1
        %s560 = scalar_select %p559, %s22, 1
        %s561 = smul.addr %s560, 2
        %s562 = scalar_lea.vmem %s12, %s561
      $region68: #{tpu_custom_call.1} parent=23 // pred_fallthru
        _
      // Predicated region
      $region69: #{tpu_custom_call.1} parent=23 // pred_check
        %p563 = pneg %p370
      $region70: #{tpu_custom_call.1} parent=23 // pred_check_branch
        %565 = sbr.rel (%p563) target = $region72
      $region71: #{tpu_custom_call.1} parent=23 // pred_region
        %p566 = scmp.lt.s32.totalorder %s22, 1
        %s567 = scalar_select %p566, %s22, 1
        %s568 = smul.addr %s567, 4
        %s569 = scalar_lea.vmem %s13, %s568
      $region72: #{tpu_custom_call.1} parent=23 // pred_fallthru
        _
      // Predicated region
      $region73: #{tpu_custom_call.1} parent=23 // pred_check
        %p570 = pneg %p396
      $region74: #{tpu_custom_call.1} parent=23 // pred_check_branch
        %572 = sbr.rel (%p570) target = $region76
      $region75: #{tpu_custom_call.1} parent=23 // pred_region
        %p573 = scmp.lt.s32.totalorder %s22, 1
        %s574 = scalar_select %p573, %s22, 1
        %s575 = scalar_lea.vmem %s14, %s574
      $region76: #{tpu_custom_call.1} parent=23 // pred_fallthru
        _
      // Predicated region
      $region77: #{tpu_custom_call.1} parent=23 // pred_check
        %p576 = pneg %p422
      $region78: #{tpu_custom_call.1} parent=23 // pred_check_branch
        %578 = sbr.rel (%p576) target = $region80
      $region79: #{tpu_custom_call.1} parent=23 // pred_region
        %p579 = scmp.lt.s32.totalorder %s22, 1
        %s580 = scalar_select %p579, %s22, 1
        %s581 = scalar_lea.vmem %s15, %s580
      $region80: #{tpu_custom_call.1} parent=23 // pred_fallthru
        _
    $region24: #{tpu_custom_call.1} parent=5 // pred_fallthru
      _
    %p582 = scmp.le.s32.totalorder 1, %s22
    %p583 = scmp.lt.s32.totalorder %s22, 3
    %p584 = pnand %p582, %p583
    %p585 = pneg %p584
    // Predicated region
    $region81: #{tpu_custom_call.1} parent=5 // pred_check
      _
    $region82: #{tpu_custom_call.1} parent=5 // pred_check_branch
      %587 = sbr.rel (%p584) target = $region84
    $region83: #{tpu_custom_call.1} parent=5 // pred_region
      %s588 = ssub.s32 %s22, 1
      %p589 = pneg %p43
      %p590 = pneg %p40
      %p591 = scmp.lt.s32.totalorder %s27, 1
      %s592 = scalar_select %p591, %s27, 1
      %s593 = smul.addr %s592, 12
      %s594 = smul.addr %s593, 4
      %s595 = scalar_lea.vmem %s1, %s594
      %p596 = pneg %p69
      %p597 = pneg %p66
      %p598 = scmp.lt.s32.totalorder %s27, 1
      %s599 = scalar_select %p598, %s27, 1
      %s600 = scalar_lea.vmem %s2, %s599
      %p601 = pneg %p95
      %p602 = pneg %p92
      %p603 = scmp.lt.s32.totalorder %s27, 1
      %s604 = scalar_select %p603, %s27, 1
      %s605 = smul.addr %s604, 96
      %s606 = smul.addr %s605, 4
      %s607 = scalar_lea.vmem %s3, %s606
      %p608 = pneg %p121
      %p609 = pneg %p118
      %p610 = scmp.lt.s32.totalorder %s27, 1
      %s611 = scalar_select %p610, %s27, 1
      %s612 = smul.addr %s611, 2
      %s613 = scalar_lea.vmem %s4, %s612
      %p614 = pneg %p147
      %p615 = pneg %p144
      %p616 = scmp.lt.s32.totalorder %s27, 1
      %s617 = scalar_select %p616, %s27, 1
      %s618 = smul.addr %s617, 24
      %s619 = smul.addr %s618, 4
      %s620 = scalar_lea.vmem %s5, %s619
      %p621 = pneg %p173
      %p622 = pneg %p170
      %p623 = scmp.lt.s32.totalorder %s27, 1
      %s624 = scalar_select %p623, %s27, 1
      %s625 = smul.addr %s624, 24
      %s626 = smul.addr %s625, 8
      %s627 = scalar_lea.vmem %s6, %s626
      %p628 = pneg %p199
      %p629 = pneg %p196
      %p630 = scmp.lt.s32.totalorder %s27, 1
      %s631 = scalar_select %p630, %s27, 1
      %s632 = smul.addr %s631, 16
      %s633 = smul.addr %s632, 4
      %s634 = scalar_lea.vmem %s7, %s633
      %p635 = pneg %p225
      %p636 = pneg %p222
      %p637 = scmp.lt.s32.totalorder %s27, 1
      %s638 = scalar_select %p637, %s27, 1
      %s639 = smul.addr %s638, 8
      %s640 = smul.addr %s639, 8
      %s641 = scalar_lea.vmem %s8, %s640
      %p642 = pneg %p251
      %p643 = pneg %p248
      %p644 = pneg %p272
      %p645 = pneg %p269
      %p646 = scmp.lt.s32.totalorder %s27, 1
      %s647 = scalar_select %p646, %s27, 1
      %s648 = smul.addr %s647, 4
      %s649 = smul.addr %s648, 4
      %s650 = scalar_lea.vmem %s10, %s649
      %p651 = pneg %p298
      %p652 = pneg %p295
      %p653 = scmp.lt.s32.totalorder %s27, 1
      %s654 = scalar_select %p653, %s27, 1
      %s655 = smul.addr %s654, 4
      %s656 = smul.addr %s655, 8
      %s657 = scalar_lea.vmem %s11, %s656
      %p658 = pneg %p324
      %p659 = pneg %p321
      %p660 = scmp.lt.s32.totalorder %s27, 1
      %s661 = scalar_select %p660, %s27, 1
      %s662 = smul.addr %s661, 2
      %s663 = scalar_lea.vmem %s12, %s662
      %p664 = pneg %p350
      %p665 = pneg %p347
      %p666 = scmp.lt.s32.totalorder %s27, 1
      %s667 = scalar_select %p666, %s27, 1
      %s668 = smul.addr %s667, 4
      %s669 = scalar_lea.vmem %s13, %s668
      %p670 = pneg %p376
      %p671 = pneg %p373
      %p672 = scmp.lt.s32.totalorder %s27, 1
      %s673 = scalar_select %p672, %s27, 1
      %s674 = scalar_lea.vmem %s14, %s673
      %p675 = pneg %p402
      %p676 = pneg %p399
      %p677 = scmp.lt.s32.totalorder %s27, 1
      %s678 = scalar_select %p677, %s27, 1
      %s679 = scalar_lea.vmem %s15, %s678
      %p680 = pneg %p428
      %p681 = pneg %p425
      %p682 = pneg %p454
      %p683 = pneg %p451
      %p684 = scmp.lt.s32.totalorder %s27, 1
      %s685 = scalar_select %p684, %s27, 1
      %s686 = smul.addr %s685, 4
      %s687 = scalar_lea.vmem %s16, %s686
      %p688 = scmp.lt.s32.totalorder %s27, 1
      %s689 = scalar_select %p688, %s27, 1
      %s690 = smul.addr %s689, 12
      %s691 = smul.addr %s690, 4
      %s692 = scalar_lea.vmem %s1, %s691
      %p693 = scmp.lt.s32.totalorder %s27, 1
      %s694 = scalar_select %p693, %s27, 1
      %s695 = scalar_lea.vmem %s2, %s694
      %p696 = scmp.lt.s32.totalorder %s27, 1
      %s697 = scalar_select %p696, %s27, 1
      %s698 = smul.addr %s697, 96
      %s699 = smul.addr %s698, 4
      %s700 = scalar_lea.vmem %s3, %s699
      %p701 = scmp.lt.s32.totalorder %s27, 1
      %s702 = scalar_select %p701, %s27, 1
      %s703 = smul.addr %s702, 2
      %s704 = scalar_lea.vmem %s4, %s703
      %p705 = scmp.lt.s32.totalorder %s27, 1
      %s706 = scalar_select %p705, %s27, 1
      %s707 = smul.addr %s706, 24
      %s708 = smul.addr %s707, 4
      %s709 = scalar_lea.vmem %s5, %s708
      %p710 = scmp.lt.s32.totalorder %s27, 1
      %s711 = scalar_select %p710, %s27, 1
      %s712 = smul.addr %s711, 24
      %s713 = smul.addr %s712, 8
      %s714 = scalar_lea.vmem %s6, %s713
      %p715 = scmp.lt.s32.totalorder %s27, 1
      %s716 = scalar_select %p715, %s27, 1
      %s717 = smul.addr %s716, 16
      %s718 = smul.addr %s717, 4
      %s719 = scalar_lea.vmem %s7, %s718
      %p720 = scmp.lt.s32.totalorder %s27, 1
      %s721 = scalar_select %p720, %s27, 1
      %s722 = smul.addr %s721, 8
      %s723 = smul.addr %s722, 8
      %s724 = scalar_lea.vmem %s8, %s723
      %p725 = scmp.lt.s32.totalorder %s27, 1
      %s726 = scalar_select %p725, %s27, 1
      %s727 = smul.addr %s726, 4
      %s728 = smul.addr %s727, 4
      %s729 = scalar_lea.vmem %s10, %s728
      %p730 = scmp.lt.s32.totalorder %s27, 1
      %s731 = scalar_select %p730, %s27, 1
      %s732 = smul.addr %s731, 4
      %s733 = smul.addr %s732, 8
      %s734 = scalar_lea.vmem %s11, %s733
      %p735 = scmp.lt.s32.totalorder %s27, 1
      %s736 = scalar_select %p735, %s27, 1
      %s737 = smul.addr %s736, 2
      %s738 = scalar_lea.vmem %s12, %s737
      %p739 = scmp.lt.s32.totalorder %s27, 1
      %s740 = scalar_select %p739, %s27, 1
      %s741 = smul.addr %s740, 4
      %s742 = scalar_lea.vmem %s13, %s741
      %p743 = scmp.lt.s32.totalorder %s27, 1
      %s744 = scalar_select %p743, %s27, 1
      %s745 = scalar_lea.vmem %s14, %s744
      %p746 = scmp.lt.s32.totalorder %s27, 1
      %s747 = scalar_select %p746, %s27, 1
      %s748 = scalar_lea.vmem %s15, %s747
      %p749 = scmp.lt.s32.totalorder %s27, 1
      %s750 = scalar_select %p749, %s27, 1
      %s751 = smul.addr %s750, 4
      %s752 = scalar_lea.vmem %s16, %s751
      %v754 = vld [vmem:[%s0] sm:$0xf]
      %v755 = vld [vmem:[%s0 + $0x4] sm:$0xf]
      %v756 = vld [vmem:[%s0 + $0x8] sm:$0xf]
      %v757 = vld [vmem:[%s0 + $0xc] sm:$0xf]
      %v758 = vld [vmem:[%s0 + $0x10] sm:$0xf]
      %v759 = vld [vmem:[%s0 + $0x14] sm:$0xf]
      %v760 = vld [vmem:[%s0 + $0x18] sm:$0xf]
      %v761 = vld [vmem:[%s0 + $0x1c] sm:$0xf]
      %v762 = vld [vmem:[%s692] sm:$0xf]
      %v763 = vld [vmem:[%s692 + $0x4] sm:$0xf]
      %v764 = vld [vmem:[%s692 + $0x8] sm:$0xf]
      %v765 = vld [vmem:[%s692 + $0xc] sm:$0xf]
      %s766 = scalar_lea.vmem %s0, 32
      %v767 = vld [vmem:[%s766] sm:$0xf]
      %v768 = vld [vmem:[%s766 + $0x4] sm:$0xf]
      %v769 = vld [vmem:[%s766 + $0x8] sm:$0xf]
      %v770 = vld [vmem:[%s766 + $0xc] sm:$0xf]
      %v771 = vld [vmem:[%s766 + $0x10] sm:$0xf]
      %v772 = vld [vmem:[%s766 + $0x14] sm:$0xf]
      %v773 = vld [vmem:[%s766 + $0x18] sm:$0xf]
      %v774 = vld [vmem:[%s766 + $0x1c] sm:$0xf]
      %s775 = scalar_lea.vmem %s692, 16
      %v776 = vld [vmem:[%s775] sm:$0xf]
      %v777 = vld [vmem:[%s775 + $0x4] sm:$0xf]
      %v778 = vld [vmem:[%s775 + $0x8] sm:$0xf]
      %v779 = vld [vmem:[%s775 + $0xc] sm:$0xf]
      %v788 = vunpack.c.l.b16 %v767
      %v789 = vunpack.c.l.b16 %v768
      %v790 = vunpack.c.l.b16 %v769
      %v791 = vunpack.c.l.b16 %v770
      %v792 = vunpack.c.l.b16 %v771
      %v793 = vunpack.c.l.b16 %v772
      %v794 = vunpack.c.l.b16 %v773
      %v795 = vunpack.c.l.b16 %v774
      %v796 = vpack.c.b16 %v789, %v788
      %v797 = vpack.c.b16 %v791, %v790
      %v798 = vpack.c.b16 %v793, %v792
      %v799 = vpack.c.b16 %v795, %v794
      %v804 = vunpack.c.l.b16 %v776
      %v805 = vunpack.c.l.b16 %v777
      %v806 = vunpack.c.l.b16 %v778
      %v807 = vunpack.c.l.b16 %v779
      %v808 = vpack.c.b16 %v805, %v804
      %v809 = vpack.c.b16 %v807, %v806
      %vm812 = vcmask 261120
      %v814 = vsel %vm812, %v796, 0
      %v817 = vsel %vm812, %v797, 0
      %v820 = vsel %vm812, %v798, 0
      %v823 = vsel %vm812, %v799, 0
      %825 = vmatprep.subr.bf16.mxu0 0
      %826 = vmatpush1.bf16.msra.mxu0 %v808
      %827 = vmatprep.subr.bf16.mxu0 0
      %828 = vmatpush1.bf16.msra.mxu0 %v809
      %829 = vmatprep.subr.bf16.mxu0 0
      %830 = vmatpush1.bf16.msra.mxu0 0
      %831 = vmatprep.subr.bf16.mxu0 0
      %832 = vmatpush1.bf16.msra.mxu0 0
      %833 = vmatprep.subr.bf16.mxu0 0
      %834 = vmatpush1.bf16.msra.mxu0 0
      %835 = vmatprep.subr.bf16.mxu0 0
      %836 = vmatpush1.bf16.msra.mxu0 0
      %837 = vmatprep.subr.bf16.mxu0 0
      %838 = vmatpush1.bf16.msra.mxu0 0
      %839 = vmatprep.subr.bf16.mxu0 0
      %840 = vmatpush1.bf16.msra.mxu0 0
      %841 = vmatprep.subr.bf16.mxu0 0
      %842 = vmatpush1.bf16.msra.mxu0 0
      %843 = vmatprep.subr.bf16.mxu0 0
      %844 = vmatpush1.bf16.msra.mxu0 0
      %845 = vmatprep.subr.bf16.mxu0 0
      %846 = vmatpush1.bf16.msra.mxu0 0
      %847 = vmatprep.subr.bf16.mxu0 0
      %848 = vmatpush1.bf16.msra.mxu0 0
      %849 = vmatprep.subr.bf16.mxu0 0
      %850 = vmatpush1.bf16.msra.mxu0 0
      %851 = vmatprep.subr.bf16.mxu0 0
      %852 = vmatpush1.bf16.msra.mxu0 0
      %853 = vmatprep.subr.bf16.mxu0 0
      %854 = vmatpush1.bf16.msra.mxu0 0
      %855 = vmatprep.subr.bf16.mxu0 0
      %856 = vmatpush1.bf16.msra.mxu0 0
      %857 = vmatprep.mubr.bf16.mxu0 0
      %858 = vmatmul.mubr.bf16.gmra.mrb[0].mxu0 %v814
      %v859 = vpop.f32.mrb[0].mxu0
      %v860 = vadd.f32 0.0, %v859
      %v861 = vpop.f32.mrb[0].mxu0
      %v862 = vpop.f32.mrb[0].mxu0
      %v863 = vadd.f32 0.0, %v862
      %v864 = vpop.f32.mrb[0].mxu0
      %865 = vmatprep.mubr.bf16.mxu0 0
      %866 = vmatmul.mubr.bf16.gmra.mrb[0].mxu0 %v817
      %v867 = vpop.f32.mrb[0].mxu0
      %v868 = vadd.f32 0.0, %v867
      %v869 = vpop.f32.mrb[0].mxu0
      %v870 = vpop.f32.mrb[0].mxu0
      %v871 = vadd.f32 0.0, %v870
      %v872 = vpop.f32.mrb[0].mxu0
      %873 = vmatprep.mubr.bf16.mxu0 0
      %874 = vmatmul.mubr.bf16.gmra.mrb[0].mxu0 %v820
      %v875 = vpop.f32.mrb[0].mxu0
      %v876 = vadd.f32 0.0, %v875
      %v877 = vpop.f32.mrb[0].mxu0
      %v878 = vpop.f32.mrb[0].mxu0
      %v879 = vadd.f32 0.0, %v878
      %v880 = vpop.f32.mrb[0].mxu0
      %881 = vmatprep.mubr.bf16.mxu0 0
      %882 = vmatmul.mubr.bf16.gmra.mrb[0].mxu0 %v823
      %v883 = vpop.f32.mrb[0].mxu0
      %v884 = vadd.f32 0.0, %v883
      %v885 = vpop.f32.mrb[0].mxu0
      %v886 = vpop.f32.mrb[0].mxu0
      %v887 = vadd.f32 0.0, %v886
      %v888 = vpop.f32.mrb[0].mxu0
      %889 = vdwg.mxu0
      %v898 = vunpack.c.l.b16 %v754
      %v899 = vunpack.c.l.b16 %v755
      %v900 = vunpack.c.l.b16 %v756
      %v901 = vunpack.c.l.b16 %v757
      %v902 = vunpack.c.l.b16 %v758
      %v903 = vunpack.c.l.b16 %v759
      %v904 = vunpack.c.l.b16 %v760
      %v905 = vunpack.c.l.b16 %v761
      %v906 = vpack.c.b16 %v899, %v898
      %v907 = vpack.c.b16 %v901, %v900
      %v908 = vpack.c.b16 %v903, %v902
      %v909 = vpack.c.b16 %v905, %v904
      %v914 = vunpack.c.l.b16 %v762
      %v915 = vunpack.c.l.b16 %v763
      %v916 = vunpack.c.l.b16 %v764
      %v917 = vunpack.c.l.b16 %v765
      %v918 = vpack.c.b16 %v915, %v914
      %v919 = vpack.c.b16 %v917, %v916
      %v923 = vsel %vm812, %v906, 0
      %v926 = vsel %vm812, %v907, 0
      %v929 = vsel %vm812, %v908, 0
      %v932 = vsel %vm812, %v909, 0
      %934 = vmatprep.subr.bf16.mxu0 0
      %935 = vmatpush1.bf16.msra.mxu0 %v918
      %936 = vmatprep.subr.bf16.mxu0 0
      %937 = vmatpush1.bf16.msra.mxu0 %v919
      %938 = vmatprep.subr.bf16.mxu0 0
      %939 = vmatpush1.bf16.msra.mxu0 0
      %940 = vmatprep.subr.bf16.mxu0 0
      %941 = vmatpush1.bf16.msra.mxu0 0
      %942 = vmatprep.subr.bf16.mxu0 0
      %943 = vmatpush1.bf16.msra.mxu0 0
      %944 = vmatprep.subr.bf16.mxu0 0
      %945 = vmatpush1.bf16.msra.mxu0 0
      %946 = vmatprep.subr.bf16.mxu0 0
      %947 = vmatpush1.bf16.msra.mxu0 0
      %948 = vmatprep.subr.bf16.mxu0 0
      %949 = vmatpush1.bf16.msra.mxu0 0
      %950 = vmatprep.subr.bf16.mxu0 0
      %951 = vmatpush1.bf16.msra.mxu0 0
      %952 = vmatprep.subr.bf16.mxu0 0
      %953 = vmatpush1.bf16.msra.mxu0 0
      %954 = vmatprep.subr.bf16.mxu0 0
      %955 = vmatpush1.bf16.msra.mxu0 0
      %956 = vmatprep.subr.bf16.mxu0 0
      %957 = vmatpush1.bf16.msra.mxu0 0
      %958 = vmatprep.subr.bf16.mxu0 0
      %959 = vmatpush1.bf16.msra.mxu0 0
      %960 = vmatprep.subr.bf16.mxu0 0
      %961 = vmatpush1.bf16.msra.mxu0 0
      %962 = vmatprep.subr.bf16.mxu0 0
      %963 = vmatpush1.bf16.msra.mxu0 0
      %964 = vmatprep.subr.bf16.mxu0 0
      %965 = vmatpush1.bf16.msra.mxu0 0
      %966 = vmatprep.mubr.bf16.mxu0 0
      %967 = vmatmul.mubr.bf16.gmra.mrb[0].mxu0 %v923
      %v968 = vpop.f32.mrb[0].mxu0
      %v969 = vadd.f32 %v860, %v968
      %v970 = vpop.f32.mrb[0].mxu0
      %v971 = vpop.f32.mrb[0].mxu0
      %v972 = vadd.f32 %v863, %v971
      %v973 = vpop.f32.mrb[0].mxu0
      %974 = vmatprep.mubr.bf16.mxu0 0
      %975 = vmatmul.mubr.bf16.gmra.mrb[0].mxu0 %v926
      %v976 = vpop.f32.mrb[0].mxu0
      %v977 = vadd.f32 %v868, %v976
      %v978 = vpop.f32.mrb[0].mxu0
      %v979 = vpop.f32.mrb[0].mxu0
      %v980 = vadd.f32 %v871, %v979
      %v981 = vpop.f32.mrb[0].mxu0
      %982 = vmatprep.mubr.bf16.mxu0 0
      %983 = vmatmul.mubr.bf16.gmra.mrb[0].mxu0 %v929
      %v984 = vpop.f32.mrb[0].mxu0
      %v985 = vadd.f32 %v876, %v984
      %v986 = vpop.f32.mrb[0].mxu0
      %v987 = vpop.f32.mrb[0].mxu0
      %v988 = vadd.f32 %v879, %v987
      %v989 = vpop.f32.mrb[0].mxu0
      %990 = vmatprep.mubr.bf16.mxu0 0
      %991 = vmatmul.mubr.bf16.gmra.mrb[0].mxu0 %v932
      %v992 = vpop.f32.mrb[0].mxu0
      %v993 = vadd.f32 %v884, %v992
      %v994 = vpop.f32.mrb[0].mxu0
      %v995 = vpop.f32.mrb[0].mxu0
      %v996 = vadd.f32 %v887, %v995
      %v997 = vpop.f32.mrb[0].mxu0
      %998 = vdwg.mxu0
      %s999 = scalar_lea.vmem %s0, 64
      %v1000 = vld [vmem:[%s999] sm:$0xf]
      %v1001 = vld [vmem:[%s999 + $0x4] sm:$0xf]
      %v1002 = vld [vmem:[%s999 + $0x8] sm:$0xf]
      %v1003 = vld [vmem:[%s999 + $0xc] sm:$0xf]
      %v1004 = vld [vmem:[%s999 + $0x10] sm:$0xf]
      %v1005 = vld [vmem:[%s999 + $0x14] sm:$0xf]
      %v1006 = vld [vmem:[%s999 + $0x18] sm:$0xf]
      %v1007 = vld [vmem:[%s999 + $0x1c] sm:$0xf]
      %s1008 = scalar_lea.vmem %s692, 32
      %v1009 = vld [vmem:[%s1008] sm:$0xf]
      %v1010 = vld [vmem:[%s1008 + $0x4] sm:$0xf]
      %v1011 = vld [vmem:[%s1008 + $0x8] sm:$0xf]
      %v1012 = vld [vmem:[%s1008 + $0xc] sm:$0xf]
      %v1021 = vunpack.c.l.b16 %v1000
      %v1022 = vunpack.c.l.b16 %v1001
      %v1023 = vunpack.c.l.b16 %v1002
      %v1024 = vunpack.c.l.b16 %v1003
      %v1025 = vunpack.c.l.b16 %v1004
      %v1026 = vunpack.c.l.b16 %v1005
      %v1027 = vunpack.c.l.b16 %v1006
      %v1028 = vunpack.c.l.b16 %v1007
      %v1029 = vpack.c.b16 %v1022, %v1021
      %v1030 = vpack.c.b16 %v1024, %v1023
      %v1031 = vpack.c.b16 %v1026, %v1025
      %v1032 = vpack.c.b16 %v1028, %v1027
      %v1037 = vunpack.c.l.b16 %v1009
      %v1038 = vunpack.c.l.b16 %v1010
      %v1039 = vunpack.c.l.b16 %v1011
      %v1040 = vunpack.c.l.b16 %v1012
      %v1041 = vpack.c.b16 %v1038, %v1037
      %v1042 = vpack.c.b16 %v1040, %v1039
      %v1046 = vsel %vm812, %v1029, 0
      %v1049 = vsel %vm812, %v1030, 0
      %v1052 = vsel %vm812, %v1031, 0
      %v1055 = vsel %vm812, %v1032, 0
      %1057 = vmatprep.subr.bf16.mxu0 0
      %1058 = vmatpush1.bf16.msra.mxu0 %v1041
      %1059 = vmatprep.subr.bf16.mxu0 0
      %1060 = vmatpush1.bf16.msra.mxu0 %v1042
      %1061 = vmatprep.subr.bf16.mxu0 0
      %1062 = vmatpush1.bf16.msra.mxu0 0
      %1063 = vmatprep.subr.bf16.mxu0 0
      %1064 = vmatpush1.bf16.msra.mxu0 0
      %1065 = vmatprep.subr.bf16.mxu0 0
      %1066 = vmatpush1.bf16.msra.mxu0 0
      %1067 = vmatprep.subr.bf16.mxu0 0
      %1068 = vmatpush1.bf16.msra.mxu0 0
      %1069 = vmatprep.subr.bf16.mxu0 0
      %1070 = vmatpush1.bf16.msra.mxu0 0
      %1071 = vmatprep.subr.bf16.mxu0 0
      %1072 = vmatpush1.bf16.msra.mxu0 0
      %1073 = vmatprep.subr.bf16.mxu0 0
      %1074 = vmatpush1.bf16.msra.mxu0 0
      %1075 = vmatprep.subr.bf16.mxu0 0
      %1076 = vmatpush1.bf16.msra.mxu0 0
      %1077 = vmatprep.subr.bf16.mxu0 0
      %1078 = vmatpush1.bf16.msra.mxu0 0
      %1079 = vmatprep.subr.bf16.mxu0 0
      %1080 = vmatpush1.bf16.msra.mxu0 0
      %1081 = vmatprep.subr.bf16.mxu0 0
      %1082 = vmatpush1.bf16.msra.mxu0 0
      %1083 = vmatprep.subr.bf16.mxu0 0
      %1084 = vmatpush1.bf16.msra.mxu0 0
      %1085 = vmatprep.subr.bf16.mxu0 0
      %1086 = vmatpush1.bf16.msra.mxu0 0
      %1087 = vmatprep.subr.bf16.mxu0 0
      %1088 = vmatpush1.bf16.msra.mxu0 0
      %1089 = vmatprep.mubr.bf16.mxu0 0
      %1090 = vmatmul.mubr.bf16.gmra.mrb[0].mxu0 %v1046
      %v1091 = vpop.f32.mrb[0].mxu0
      %v1092 = vadd.f32 0.0, %v1091
      %v1093 = vpop.f32.mrb[0].mxu0
      %v1094 = vpop.f32.mrb[0].mxu0
      %v1095 = vadd.f32 0.0, %v1094
      %v1096 = vpop.f32.mrb[0].mxu0
      %1097 = vmatprep.mubr.bf16.mxu0 0
      %1098 = vmatmul.mubr.bf16.gmra.mrb[0].mxu0 %v1049
      %v1099 = vpop.f32.mrb[0].mxu0
      %v1100 = vadd.f32 0.0, %v1099
      %v1101 = vpop.f32.mrb[0].mxu0
      %v1102 = vpop.f32.mrb[0].mxu0
      %v1103 = vadd.f32 0.0, %v1102
      %v1104 = vpop.f32.mrb[0].mxu0
      %1105 = vmatprep.mubr.bf16.mxu0 0
      %1106 = vmatmul.mubr.bf16.gmra.mrb[0].mxu0 %v1052
      %v1107 = vpop.f32.mrb[0].mxu0
      %v1108 = vadd.f32 0.0, %v1107
      %v1109 = vpop.f32.mrb[0].mxu0
      %v1110 = vpop.f32.mrb[0].mxu0
      %v1111 = vadd.f32 0.0, %v1110
      %v1112 = vpop.f32.mrb[0].mxu0
      %1113 = vmatprep.mubr.bf16.mxu0 0
      %1114 = vmatmul.mubr.bf16.gmra.mrb[0].mxu0 %v1055
      %v1115 = vpop.f32.mrb[0].mxu0
      %v1116 = vadd.f32 0.0, %v1115
      %v1117 = vpop.f32.mrb[0].mxu0
      %v1118 = vpop.f32.mrb[0].mxu0
      %v1119 = vadd.f32 0.0, %v1118
      %v1120 = vpop.f32.mrb[0].mxu0
      %1121 = vdwg.mxu0
      %v1122 = vadd.f32 %v969, %v1092
      %v1123 = vadd.f32 %v972, %v1095
      %v1124 = vadd.f32 %v977, %v1100
      %v1125 = vadd.f32 %v980, %v1103
      %v1126 = vadd.f32 %v985, %v1108
      %v1127 = vadd.f32 %v988, %v1111
      %v1128 = vadd.f32 %v993, %v1116
      %v1129 = vadd.f32 %v996, %v1119
      %v1130 = vld [vmem:[%s695] sm:$0x1]
      %v1132 = vlaneseq
      %v1133 = vshrl.u32 %v1132, 7
      %v1134 = vsub.s32 0, %v1133
      %v1135 = vrot.slane %v1130, %v1134
      %v1137 = vadd.f32 %v1122, %v1135
      %v1138 = vadd.f32 %v1123, %v1135
      %v1139 = vadd.f32 %v1124, %v1135
      %v1140 = vadd.f32 %v1125, %v1135
      %v1141 = vadd.f32 %v1126, %v1135
      %v1142 = vadd.f32 %v1127, %v1135
      %v1143 = vadd.f32 %v1128, %v1135
      %v1144 = vadd.f32 %v1129, %v1135
      %v1145 = vmax.f32 %v1137, 0.0
      %v1146 = vmax.f32 %v1138, 0.0
      %v1147 = vmax.f32 %v1139, 0.0
      %v1148 = vmax.f32 %v1140, 0.0
      %v1149 = vmax.f32 %v1141, 0.0
      %v1150 = vmax.f32 %v1142, 0.0
      %v1151 = vmax.f32 %v1143, 0.0
      %v1152 = vmax.f32 %v1144, 0.0
      %vm1161 = vcmask 1040384
      %v1162 = vrot.slane %v1145, 7
      %v1163 = vrot.slane %v1146, 7
      %v1164 = vsel %vm1161, %v1162, %v1163
      %v1165 = vrot.slane %v1147, 7
      %v1166 = vsel %vm1161, %v1163, %v1165
      %v1167 = vrot.slane %v1148, 7
      %v1168 = vsel %vm1161, %v1165, %v1167
      %v1169 = vrot.slane %v1149, 7
      %v1170 = vsel %vm1161, %v1167, %v1169
      %v1171 = vrot.slane %v1150, 7
      %v1172 = vsel %vm1161, %v1169, %v1171
      %v1173 = vrot.slane %v1151, 7
      %v1174 = vsel %vm1161, %v1171, %v1173
      %v1175 = vrot.slane %v1152, 7
      %v1176 = vsel %vm1161, %v1173, %v1175
      %v1185 = vsel %vm1161, 0.0, %v1162
      %vm1186 = vcmask 1046528
      %v1187 = vrot.slane %v1145, 1
      %v1188 = vrot.slane %v1146, 1
      %v1189 = vsel %vm1186, %v1187, %v1188
      %v1190 = vrot.slane %v1147, 1
      %v1191 = vsel %vm1186, %v1188, %v1190
      %v1192 = vrot.slane %v1148, 1
      %v1193 = vsel %vm1186, %v1190, %v1192
      %v1194 = vrot.slane %v1149, 1
      %v1195 = vsel %vm1186, %v1192, %v1194
      %v1196 = vrot.slane %v1150, 1
      %v1197 = vsel %vm1186, %v1194, %v1196
      %v1198 = vrot.slane %v1151, 1
      %v1199 = vsel %vm1186, %v1196, %v1198
      %v1200 = vrot.slane %v1152, 1
      %v1201 = vsel %vm1186, %v1198, %v1200
      %v1210 = vsel %vm1186, %v1200, 0.0
      %v1211 = vld [vmem:[%s700] sm:$0xff]
      %v1212 = vld [vmem:[%s700 + $0x8] sm:$0xff]
      %v1213 = vld [vmem:[%s700 + $0x10] sm:$0xff]
      %v1214 = vld [vmem:[%s700 + $0x18] sm:$0xff]
      %v1215 = vld [vmem:[%s700 + $0x20] sm:$0xff]
      %v1216 = vld [vmem:[%s700 + $0x28] sm:$0xff]
      %v1217 = vld [vmem:[%s700 + $0x30] sm:$0xff]
      %v1218 = vld [vmem:[%s700 + $0x38] sm:$0xff]
      %v1219 = vld [vmem:[%s700 + $0x40] sm:$0xff]
      %v1220 = vld [vmem:[%s700 + $0x48] sm:$0xff]
      %v1221 = vld [vmem:[%s700 + $0x50] sm:$0xff]
      %v1222 = vld [vmem:[%s700 + $0x58] sm:$0xff]
      %v1223 = vld [vmem:[%s700 + $0x60] sm:$0xff]
      %v1224 = vld [vmem:[%s700 + $0x68] sm:$0xff]
      %v1225 = vld [vmem:[%s700 + $0x70] sm:$0xff]
      %v1226 = vld [vmem:[%s700 + $0x78] sm:$0xff]
      %v1227 = vpack.c.bf16 %v1164, %v1185
      %v1228 = vpack.c.bf16 %v1168, %v1166
      %v1229 = vpack.c.bf16 %v1172, %v1170
      %v1230 = vpack.c.bf16 %v1176, %v1174
      %s1231 = scalar_lea.vmem %s700, 128
      %v1232 = vld [vmem:[%s1231] sm:$0xff]
      %v1233 = vld [vmem:[%s1231 + $0x8] sm:$0xff]
      %v1234 = vld [vmem:[%s1231 + $0x10] sm:$0xff]
      %v1235 = vld [vmem:[%s1231 + $0x18] sm:$0xff]
      %v1236 = vld [vmem:[%s1231 + $0x20] sm:$0xff]
      %v1237 = vld [vmem:[%s1231 + $0x28] sm:$0xff]
      %v1238 = vld [vmem:[%s1231 + $0x30] sm:$0xff]
      %v1239 = vld [vmem:[%s1231 + $0x38] sm:$0xff]
      %v1240 = vld [vmem:[%s1231 + $0x40] sm:$0xff]
      %v1241 = vld [vmem:[%s1231 + $0x48] sm:$0xff]
      %v1242 = vld [vmem:[%s1231 + $0x50] sm:$0xff]
      %v1243 = vld [vmem:[%s1231 + $0x58] sm:$0xff]
      %v1244 = vld [vmem:[%s1231 + $0x60] sm:$0xff]
      %v1245 = vld [vmem:[%s1231 + $0x68] sm:$0xff]
      %v1246 = vld [vmem:[%s1231 + $0x70] sm:$0xff]
      %v1247 = vld [vmem:[%s1231 + $0x78] sm:$0xff]
      %v1248 = vpack.c.bf16 %v1146, %v1145
      %v1249 = vpack.c.bf16 %v1148, %v1147
      %v1250 = vpack.c.bf16 %v1150, %v1149
      %v1251 = vpack.c.bf16 %v1152, %v1151
      %v1268 = vunpack.c.l.b16 %v1232
      %v1269 = vunpack.c.h.b16 %v1232
      %v1270 = vunpack.c.l.b16 %v1233
      %v1271 = vunpack.c.h.b16 %v1233
      %v1272 = vunpack.c.l.b16 %v1234
      %v1273 = vunpack.c.h.b16 %v1234
      %v1274 = vunpack.c.l.b16 %v1235
      %v1275 = vunpack.c.h.b16 %v1235
      %v1276 = vunpack.c.l.b16 %v1236
      %v1277 = vunpack.c.h.b16 %v1236
      %v1278 = vunpack.c.l.b16 %v1237
      %v1279 = vunpack.c.h.b16 %v1237
      %v1280 = vunpack.c.l.b16 %v1238
      %v1281 = vunpack.c.h.b16 %v1238
      %v1282 = vunpack.c.l.b16 %v1239
      %v1283 = vunpack.c.h.b16 %v1239
      %v1284 = vunpack.c.l.b16 %v1240
      %v1285 = vunpack.c.h.b16 %v1240
      %v1286 = vunpack.c.l.b16 %v1241
      %v1287 = vunpack.c.h.b16 %v1241
      %v1288 = vunpack.c.l.b16 %v1242
      %v1289 = vunpack.c.h.b16 %v1242
      %v1290 = vunpack.c.l.b16 %v1243
      %v1291 = vunpack.c.h.b16 %v1243
      %v1292 = vunpack.c.l.b16 %v1244
      %v1293 = vunpack.c.h.b16 %v1244
      %v1294 = vunpack.c.l.b16 %v1245
      %v1295 = vunpack.c.h.b16 %v1245
      %v1296 = vunpack.c.l.b16 %v1246
      %v1297 = vunpack.c.h.b16 %v1246
      %v1298 = vunpack.c.l.b16 %v1247
      %v1299 = vunpack.c.h.b16 %v1247
      %v1300 = vpack.c.b16 %v1270, %v1268
      %v1301 = vpack.c.b16 %v1271, %v1269
      %v1302 = vpack.c.b16 %v1274, %v1272
      %v1303 = vpack.c.b16 %v1275, %v1273
      %v1304 = vpack.c.b16 %v1278, %v1276
      %v1305 = vpack.c.b16 %v1279, %v1277
      %v1306 = vpack.c.b16 %v1282, %v1280
      %v1307 = vpack.c.b16 %v1283, %v1281
      %v1308 = vpack.c.b16 %v1286, %v1284
      %v1309 = vpack.c.b16 %v1287, %v1285
      %v1310 = vpack.c.b16 %v1290, %v1288
      %v1311 = vpack.c.b16 %v1291, %v1289
      %v1312 = vpack.c.b16 %v1294, %v1292
      %v1313 = vpack.c.b16 %v1295, %v1293
      %v1314 = vpack.c.b16 %v1298, %v1296
      %v1315 = vpack.c.b16 %v1299, %v1297
      %1332 = vmatprep.subr.bf16.mxu0 %v1301
      %1333 = vmatpush1.bf16.msra.mxu0 %v1300
      %1334 = vmatprep.subr.bf16.mxu0 %v1303
      %1335 = vmatpush1.bf16.msra.mxu0 %v1302
      %1336 = vmatprep.subr.bf16.mxu0 %v1305
      %1337 = vmatpush1.bf16.msra.mxu0 %v1304
      %1338 = vmatprep.subr.bf16.mxu0 %v1307
      %1339 = vmatpush1.bf16.msra.mxu0 %v1306
      %1340 = vmatprep.subr.bf16.mxu0 %v1309
      %1341 = vmatpush1.bf16.msra.mxu0 %v1308
      %1342 = vmatprep.subr.bf16.mxu0 %v1311
      %1343 = vmatpush1.bf16.msra.mxu0 %v1310
      %1344 = vmatprep.subr.bf16.mxu0 %v1313
      %1345 = vmatpush1.bf16.msra.mxu0 %v1312
      %1346 = vmatprep.subr.bf16.mxu0 %v1315
      %1347 = vmatpush1.bf16.msra.mxu0 %v1314
      %1348 = vmatprep.subr.bf16.mxu0 0
      %1349 = vmatpush1.bf16.msra.mxu0 0
      %1350 = vmatprep.subr.bf16.mxu0 0
      %1351 = vmatpush1.bf16.msra.mxu0 0
      %1352 = vmatprep.subr.bf16.mxu0 0
      %1353 = vmatpush1.bf16.msra.mxu0 0
      %1354 = vmatprep.subr.bf16.mxu0 0
      %1355 = vmatpush1.bf16.msra.mxu0 0
      %1356 = vmatprep.subr.bf16.mxu0 0
      %1357 = vmatpush1.bf16.msra.mxu0 0
      %1358 = vmatprep.subr.bf16.mxu0 0
      %1359 = vmatpush1.bf16.msra.mxu0 0
      %1360 = vmatprep.subr.bf16.mxu0 0
      %1361 = vmatpush1.bf16.msra.mxu0 0
      %1362 = vmatprep.subr.bf16.mxu0 0
      %1363 = vmatpush1.bf16.msra.mxu0 0
      %1364 = vmatprep.mubr.bf16.mxu0 0
      %1365 = vmatmul.mubr.bf16.gmra.mrb[0].mxu0 %v1248
      %v1366 = vpop.f32.mrb[0].mxu0
      %v1367 = vadd.f32 0.0, %v1366
      %v1368 = vpop.f32.mrb[0].mxu0
      %v1369 = vadd.f32 0.0, %v1368
      %v1370 = vpop.f32.mrb[0].mxu0
      %v1371 = vadd.f32 0.0, %v1370
      %v1372 = vpop.f32.mrb[0].mxu0
      %v1373 = vadd.f32 0.0, %v1372
      %1374 = vmatprep.mubr.bf16.mxu0 0
      %1375 = vmatmul.mubr.bf16.gmra.mrb[0].mxu0 %v1249
      %v1376 = vpop.f32.mrb[0].mxu0
      %v1377 = vadd.f32 0.0, %v1376
      %v1378 = vpop.f32.mrb[0].mxu0
      %v1379 = vadd.f32 0.0, %v1378
      %v1380 = vpop.f32.mrb[0].mxu0
      %v1381 = vadd.f32 0.0, %v1380
      %v1382 = vpop.f32.mrb[0].mxu0
      %v1383 = vadd.f32 0.0, %v1382
      %1384 = vmatprep.mubr.bf16.mxu0 0
      %1385 = vmatmul.mubr.bf16.gmra.mrb[0].mxu0 %v1250
      %v1386 = vpop.f32.mrb[0].mxu0
      %v1387 = vadd.f32 0.0, %v1386
      %v1388 = vpop.f32.mrb[0].mxu0
      %v1389 = vadd.f32 0.0, %v1388
      %v1390 = vpop.f32.mrb[0].mxu0
      %v1391 = vadd.f32 0.0, %v1390
      %v1392 = vpop.f32.mrb[0].mxu0
      %v1393 = vadd.f32 0.0, %v1392
      %1394 = vmatprep.mubr.bf16.mxu0 0
      %1395 = vmatmul.mubr.bf16.gmra.mrb[0].mxu0 %v1251
      %v1396 = vpop.f32.mrb[0].mxu0
      %v1397 = vadd.f32 0.0, %v1396
      %v1398 = vpop.f32.mrb[0].mxu0
      %v1399 = vadd.f32 0.0, %v1398
      %v1400 = vpop.f32.mrb[0].mxu0
      %v1401 = vadd.f32 0.0, %v1400
      %v1402 = vpop.f32.mrb[0].mxu0
      %v1403 = vadd.f32 0.0, %v1402
      %1404 = vdwg.mxu0
      %v1421 = vunpack.c.l.b16 %v1211
      %v1422 = vunpack.c.h.b16 %v1211
      %v1423 = vunpack.c.l.b16 %v1212
      %v1424 = vunpack.c.h.b16 %v1212
      %v1425 = vunpack.c.l.b16 %v1213
      %v1426 = vunpack.c.h.b16 %v1213
      %v1427 = vunpack.c.l.b16 %v1214
      %v1428 = vunpack.c.h.b16 %v1214
      %v1429 = vunpack.c.l.b16 %v1215
      %v1430 = vunpack.c.h.b16 %v1215
      %v1431 = vunpack.c.l.b16 %v1216
      %v1432 = vunpack.c.h.b16 %v1216
      %v1433 = vunpack.c.l.b16 %v1217
      %v1434 = vunpack.c.h.b16 %v1217
      %v1435 = vunpack.c.l.b16 %v1218
      %v1436 = vunpack.c.h.b16 %v1218
      %v1437 = vunpack.c.l.b16 %v1219
      %v1438 = vunpack.c.h.b16 %v1219
      %v1439 = vunpack.c.l.b16 %v1220
      %v1440 = vunpack.c.h.b16 %v1220
      %v1441 = vunpack.c.l.b16 %v1221
      %v1442 = vunpack.c.h.b16 %v1221
      %v1443 = vunpack.c.l.b16 %v1222
      %v1444 = vunpack.c.h.b16 %v1222
      %v1445 = vunpack.c.l.b16 %v1223
      %v1446 = vunpack.c.h.b16 %v1223
      %v1447 = vunpack.c.l.b16 %v1224
      %v1448 = vunpack.c.h.b16 %v1224
      %v1449 = vunpack.c.l.b16 %v1225
      %v1450 = vunpack.c.h.b16 %v1225
      %v1451 = vunpack.c.l.b16 %v1226
      %v1452 = vunpack.c.h.b16 %v1226
      %v1453 = vpack.c.b16 %v1423, %v1421
      %v1454 = vpack.c.b16 %v1424, %v1422
      %v1455 = vpack.c.b16 %v1427, %v1425
      %v1456 = vpack.c.b16 %v1428, %v1426
      %v1457 = vpack.c.b16 %v1431, %v1429
      %v1458 = vpack.c.b16 %v1432, %v1430
      %v1459 = vpack.c.b16 %v1435, %v1433
      %v1460 = vpack.c.b16 %v1436, %v1434
      %v1461 = vpack.c.b16 %v1439, %v1437
      %v1462 = vpack.c.b16 %v1440, %v1438
      %v1463 = vpack.c.b16 %v1443, %v1441
      %v1464 = vpack.c.b16 %v1444, %v1442
      %v1465 = vpack.c.b16 %v1447, %v1445
      %v1466 = vpack.c.b16 %v1448, %v1446
      %v1467 = vpack.c.b16 %v1451, %v1449
      %v1468 = vpack.c.b16 %v1452, %v1450
      %1485 = vmatprep.subr.bf16.mxu0 %v1454
      %1486 = vmatpush1.bf16.msra.mxu0 %v1453
      %1487 = vmatprep.subr.bf16.mxu0 %v1456
      %1488 = vmatpush1.bf16.msra.mxu0 %v1455
      %1489 = vmatprep.subr.bf16.mxu0 %v1458
      %1490 = vmatpush1.bf16.msra.mxu0 %v1457
      %1491 = vmatprep.subr.bf16.mxu0 %v1460
      %1492 = vmatpush1.bf16.msra.mxu0 %v1459
      %1493 = vmatprep.subr.bf16.mxu0 %v1462
      %1494 = vmatpush1.bf16.msra.mxu0 %v1461
      %1495 = vmatprep.subr.bf16.mxu0 %v1464
      %1496 = vmatpush1.bf16.msra.mxu0 %v1463
      %1497 = vmatprep.subr.bf16.mxu0 %v1466
      %1498 = vmatpush1.bf16.msra.mxu0 %v1465
      %1499 = vmatprep.subr.bf16.mxu0 %v1468
      %1500 = vmatpush1.bf16.msra.mxu0 %v1467
      %1501 = vmatprep.subr.bf16.mxu0 0
      %1502 = vmatpush1.bf16.msra.mxu0 0
      %1503 = vmatprep.subr.bf16.mxu0 0
      %1504 = vmatpush1.bf16.msra.mxu0 0
      %1505 = vmatprep.subr.bf16.mxu0 0
      %1506 = vmatpush1.bf16.msra.mxu0 0
      %1507 = vmatprep.subr.bf16.mxu0 0
      %1508 = vmatpush1.bf16.msra.mxu0 0
      %1509 = vmatprep.subr.bf16.mxu0 0
      %1510 = vmatpush1.bf16.msra.mxu0 0
      %1511 = vmatprep.subr.bf16.mxu0 0
      %1512 = vmatpush1.bf16.msra.mxu0 0
      %1513 = vmatprep.subr.bf16.mxu0 0
      %1514 = vmatpush1.bf16.msra.mxu0 0
      %1515 = vmatprep.subr.bf16.mxu0 0
      %1516 = vmatpush1.bf16.msra.mxu0 0
      %1517 = vmatprep.mubr.bf16.mxu0 0
      %1518 = vmatmul.mubr.bf16.gmra.mrb[0].mxu0 %v1227
      %v1519 = vpop.f32.mrb[0].mxu0
      %v1520 = vadd.f32 %v1367, %v1519
      %v1521 = vpop.f32.mrb[0].mxu0
      %v1522 = vadd.f32 %v1369, %v1521
      %v1523 = vpop.f32.mrb[0].mxu0
      %v1524 = vadd.f32 %v1371, %v1523
      %v1525 = vpop.f32.mrb[0].mxu0
      %v1526 = vadd.f32 %v1373, %v1525
      %1527 = vmatprep.mubr.bf16.mxu0 0
      %1528 = vmatmul.mubr.bf16.gmra.mrb[0].mxu0 %v1228
      %v1529 = vpop.f32.mrb[0].mxu0
      %v1530 = vadd.f32 %v1377, %v1529
      %v1531 = vpop.f32.mrb[0].mxu0
      %v1532 = vadd.f32 %v1379, %v1531
      %v1533 = vpop.f32.mrb[0].mxu0
      %v1534 = vadd.f32 %v1381, %v1533
      %v1535 = vpop.f32.mrb[0].mxu0
      %v1536 = vadd.f32 %v1383, %v1535
      %1537 = vmatprep.mubr.bf16.mxu0 0
      %1538 = vmatmul.mubr.bf16.gmra.mrb[0].mxu0 %v1229
      %v1539 = vpop.f32.mrb[0].mxu0
      %v1540 = vadd.f32 %v1387, %v1539
      %v1541 = vpop.f32.mrb[0].mxu0
      %v1542 = vadd.f32 %v1389, %v1541
      %v1543 = vpop.f32.mrb[0].mxu0
      %v1544 = vadd.f32 %v1391, %v1543
      %v1545 = vpop.f32.mrb[0].mxu0
      %v1546 = vadd.f32 %v1393, %v1545
      %1547 = vmatprep.mubr.bf16.mxu0 0
      %1548 = vmatmul.mubr.bf16.gmra.mrb[0].mxu0 %v1230
      %v1549 = vpop.f32.mrb[0].mxu0
      %v1550 = vadd.f32 %v1397, %v1549
      %v1551 = vpop.f32.mrb[0].mxu0
      %v1552 = vadd.f32 %v1399, %v1551
      %v1553 = vpop.f32.mrb[0].mxu0
      %v1554 = vadd.f32 %v1401, %v1553
      %v1555 = vpop.f32.mrb[0].mxu0
      %v1556 = vadd.f32 %v1403, %v1555
      %1557 = vdwg.mxu0
      %s1558 = scalar_lea.vmem %s700, 256
      %v1559 = vld [vmem:[%s1558] sm:$0xff]
      %v1560 = vld [vmem:[%s1558 + $0x8] sm:$0xff]
      %v1561 = vld [vmem:[%s1558 + $0x10] sm:$0xff]
      %v1562 = vld [vmem:[%s1558 + $0x18] sm:$0xff]
      %v1563 = vld [vmem:[%s1558 + $0x20] sm:$0xff]
      %v1564 = vld [vmem:[%s1558 + $0x28] sm:$0xff]
      %v1565 = vld [vmem:[%s1558 + $0x30] sm:$0xff]
      %v1566 = vld [vmem:[%s1558 + $0x38] sm:$0xff]
      %v1567 = vld [vmem:[%s1558 + $0x40] sm:$0xff]
      %v1568 = vld [vmem:[%s1558 + $0x48] sm:$0xff]
      %v1569 = vld [vmem:[%s1558 + $0x50] sm:$0xff]
      %v1570 = vld [vmem:[%s1558 + $0x58] sm:$0xff]
      %v1571 = vld [vmem:[%s1558 + $0x60] sm:$0xff]
      %v1572 = vld [vmem:[%s1558 + $0x68] sm:$0xff]
      %v1573 = vld [vmem:[%s1558 + $0x70] sm:$0xff]
      %v1574 = vld [vmem:[%s1558 + $0x78] sm:$0xff]
      %v1575 = vpack.c.bf16 %v1191, %v1189
      %v1576 = vpack.c.bf16 %v1195, %v1193
      %v1577 = vpack.c.bf16 %v1199, %v1197
      %v1578 = vpack.c.bf16 %v1210, %v1201
      %v1595 = vunpack.c.l.b16 %v1559
      %v1596 = vunpack.c.h.b16 %v1559
      %v1597 = vunpack.c.l.b16 %v1560
      %v1598 = vunpack.c.h.b16 %v1560
      %v1599 = vunpack.c.l.b16 %v1561
      %v1600 = vunpack.c.h.b16 %v1561
      %v1601 = vunpack.c.l.b16 %v1562
      %v1602 = vunpack.c.h.b16 %v1562
      %v1603 = vunpack.c.l.b16 %v1563
      %v1604 = vunpack.c.h.b16 %v1563
      %v1605 = vunpack.c.l.b16 %v1564
      %v1606 = vunpack.c.h.b16 %v1564
      %v1607 = vunpack.c.l.b16 %v1565
      %v1608 = vunpack.c.h.b16 %v1565
      %v1609 = vunpack.c.l.b16 %v1566
      %v1610 = vunpack.c.h.b16 %v1566
      %v1611 = vunpack.c.l.b16 %v1567
      %v1612 = vunpack.c.h.b16 %v1567
      %v1613 = vunpack.c.l.b16 %v1568
      %v1614 = vunpack.c.h.b16 %v1568
      %v1615 = vunpack.c.l.b16 %v1569
      %v1616 = vunpack.c.h.b16 %v1569
      %v1617 = vunpack.c.l.b16 %v1570
      %v1618 = vunpack.c.h.b16 %v1570
      %v1619 = vunpack.c.l.b16 %v1571
      %v1620 = vunpack.c.h.b16 %v1571
      %v1621 = vunpack.c.l.b16 %v1572
      %v1622 = vunpack.c.h.b16 %v1572
      %v1623 = vunpack.c.l.b16 %v1573
      %v1624 = vunpack.c.h.b16 %v1573
      %v1625 = vunpack.c.l.b16 %v1574
      %v1626 = vunpack.c.h.b16 %v1574
      %v1627 = vpack.c.b16 %v1597, %v1595
      %v1628 = vpack.c.b16 %v1598, %v1596
      %v1629 = vpack.c.b16 %v1601, %v1599
      %v1630 = vpack.c.b16 %v1602, %v1600
      %v1631 = vpack.c.b16 %v1605, %v1603
      %v1632 = vpack.c.b16 %v1606, %v1604
      %v1633 = vpack.c.b16 %v1609, %v1607
      %v1634 = vpack.c.b16 %v1610, %v1608
      %v1635 = vpack.c.b16 %v1613, %v1611
      %v1636 = vpack.c.b16 %v1614, %v1612
      %v1637 = vpack.c.b16 %v1617, %v1615
      %v1638 = vpack.c.b16 %v1618, %v1616
      %v1639 = vpack.c.b16 %v1621, %v1619
      %v1640 = vpack.c.b16 %v1622, %v1620
      %v1641 = vpack.c.b16 %v1625, %v1623
      %v1642 = vpack.c.b16 %v1626, %v1624
      %1659 = vmatprep.subr.bf16.mxu0 %v1628
      %1660 = vmatpush1.bf16.msra.mxu0 %v1627
      %1661 = vmatprep.subr.bf16.mxu0 %v1630
      %1662 = vmatpush1.bf16.msra.mxu0 %v1629
      %1663 = vmatprep.subr.bf16.mxu0 %v1632
      %1664 = vmatpush1.bf16.msra.mxu0 %v1631
      %1665 = vmatprep.subr.bf16.mxu0 %v1634
      %1666 = vmatpush1.bf16.msra.mxu0 %v1633
      %1667 = vmatprep.subr.bf16.mxu0 %v1636
      %1668 = vmatpush1.bf16.msra.mxu0 %v1635
      %1669 = vmatprep.subr.bf16.mxu0 %v1638
      %1670 = vmatpush1.bf16.msra.mxu0 %v1637
      %1671 = vmatprep.subr.bf16.mxu0 %v1640
      %1672 = vmatpush1.bf16.msra.mxu0 %v1639
      %1673 = vmatprep.subr.bf16.mxu0 %v1642
      %1674 = vmatpush1.bf16.msra.mxu0 %v1641
      %1675 = vmatprep.subr.bf16.mxu0 0
      %1676 = vmatpush1.bf16.msra.mxu0 0
      %1677 = vmatprep.subr.bf16.mxu0 0
      %1678 = vmatpush1.bf16.msra.mxu0 0
      %1679 = vmatprep.subr.bf16.mxu0 0
      %1680 = vmatpush1.bf16.msra.mxu0 0
      %1681 = vmatprep.subr.bf16.mxu0 0
      %1682 = vmatpush1.bf16.msra.mxu0 0
      %1683 = vmatprep.subr.bf16.mxu0 0
      %1684 = vmatpush1.bf16.msra.mxu0 0
      %1685 = vmatprep.subr.bf16.mxu0 0
      %1686 = vmatpush1.bf16.msra.mxu0 0
      %1687 = vmatprep.subr.bf16.mxu0 0
      %1688 = vmatpush1.bf16.msra.mxu0 0
      %1689 = vmatprep.subr.bf16.mxu0 0
      %1690 = vmatpush1.bf16.msra.mxu0 0
      %1691 = vmatprep.mubr.bf16.mxu0 0
      %1692 = vmatmul.mubr.bf16.gmra.mrb[0].mxu0 %v1575
      %v1693 = vpop.f32.mrb[0].mxu0
      %v1694 = vadd.f32 0.0, %v1693
      %v1695 = vpop.f32.mrb[0].mxu0
      %v1696 = vadd.f32 0.0, %v1695
      %v1697 = vpop.f32.mrb[0].mxu0
      %v1698 = vadd.f32 0.0, %v1697
      %v1699 = vpop.f32.mrb[0].mxu0
      %v1700 = vadd.f32 0.0, %v1699
      %1701 = vmatprep.mubr.bf16.mxu0 0
      %1702 = vmatmul.mubr.bf16.gmra.mrb[0].mxu0 %v1576
      %v1703 = vpop.f32.mrb[0].mxu0
      %v1704 = vadd.f32 0.0, %v1703
      %v1705 = vpop.f32.mrb[0].mxu0
      %v1706 = vadd.f32 0.0, %v1705
      %v1707 = vpop.f32.mrb[0].mxu0
      %v1708 = vadd.f32 0.0, %v1707
      %v1709 = vpop.f32.mrb[0].mxu0
      %v1710 = vadd.f32 0.0, %v1709
      %1711 = vmatprep.mubr.bf16.mxu0 0
      %1712 = vmatmul.mubr.bf16.gmra.mrb[0].mxu0 %v1577
      %v1713 = vpop.f32.mrb[0].mxu0
      %v1714 = vadd.f32 0.0, %v1713
      %v1715 = vpop.f32.mrb[0].mxu0
      %v1716 = vadd.f32 0.0, %v1715
      %v1717 = vpop.f32.mrb[0].mxu0
      %v1718 = vadd.f32 0.0, %v1717
      %v1719 = vpop.f32.mrb[0].mxu0
      %v1720 = vadd.f32 0.0, %v1719
      %1721 = vmatprep.mubr.bf16.mxu0 0
      %1722 = vmatmul.mubr.bf16.gmra.mrb[0].mxu0 %v1578
      %v1723 = vpop.f32.mrb[0].mxu0
      %v1724 = vadd.f32 0.0, %v1723
      %v1725 = vpop.f32.mrb[0].mxu0
      %v1726 = vadd.f32 0.0, %v1725
      %v1727 = vpop.f32.mrb[0].mxu0
      %v1728 = vadd.f32 0.0, %v1727
      %v1729 = vpop.f32.mrb[0].mxu0
      %v1730 = vadd.f32 0.0, %v1729
      %1731 = vdwg.mxu0
      %v1732 = vadd.f32 %v1520, %v1694
      %v1733 = vadd.f32 %v1522, %v1696
      %v1734 = vadd.f32 %v1524, %v1698
      %v1735 = vadd.f32 %v1526, %v1700
      %v1736 = vadd.f32 %v1530, %v1704
      %v1737 = vadd.f32 %v1532, %v1706
      %v1738 = vadd.f32 %v1534, %v1708
      %v1739 = vadd.f32 %v1536, %v1710
      %v1740 = vadd.f32 %v1540, %v1714
      %v1741 = vadd.f32 %v1542, %v1716
      %v1742 = vadd.f32 %v1544, %v1718
      %v1743 = vadd.f32 %v1546, %v1720
      %v1744 = vadd.f32 %v1550, %v1724
      %v1745 = vadd.f32 %v1552, %v1726
      %v1746 = vadd.f32 %v1554, %v1728
      %v1747 = vadd.f32 %v1556, %v1730
      %v1748 = vld [vmem:[%s704] sm:$0x3]
      %v1750 = vlaneseq
      %v1751 = vshrl.u32 %v1750, 7
      %v1752 = vsub.s32 0, %v1751
      %v1753 = vrot.slane %v1748, %v1752
      %v1754 = vlaneseq
      %v1755 = vshrl.u32 %v1754, 7
      %v1756 = vsub.s32 1, %v1755
      %v1757 = vrot.slane %v1748, %v1756
      %v1760 = vadd.f32 %v1732, %v1753
      %v1761 = vadd.f32 %v1733, %v1757
      %v1762 = vadd.f32 %v1734, %v1753
      %v1763 = vadd.f32 %v1735, %v1757
      %v1764 = vadd.f32 %v1736, %v1753
      %v1765 = vadd.f32 %v1737, %v1757
      %v1766 = vadd.f32 %v1738, %v1753
      %v1767 = vadd.f32 %v1739, %v1757
      %v1768 = vadd.f32 %v1740, %v1753
      %v1769 = vadd.f32 %v1741, %v1757
      %v1770 = vadd.f32 %v1742, %v1753
      %v1771 = vadd.f32 %v1743, %v1757
      %v1772 = vadd.f32 %v1744, %v1753
      %v1773 = vadd.f32 %v1745, %v1757
      %v1774 = vadd.f32 %v1746, %v1753
      %v1775 = vadd.f32 %v1747, %v1757
      %v1776 = vld [vmem:[%s709] sm:$0xf]
      %v1777 = vld [vmem:[%s709 + $0x4] sm:$0xf]
      %v1778 = vld [vmem:[%s709 + $0x8] sm:$0xf]
      %v1779 = vld [vmem:[%s709 + $0xc] sm:$0xf]
      %v1780 = vld [vmem:[%s709 + $0x10] sm:$0xf]
      %v1781 = vld [vmem:[%s709 + $0x14] sm:$0xf]
      %v1782 = vld [vmem:[%s709 + $0x18] sm:$0xf]
      %v1783 = vld [vmem:[%s709 + $0x1c] sm:$0xf]
      %v1784 = vld [vmem:[%s709 + $0x20] sm:$0xf]
      %v1785 = vld [vmem:[%s709 + $0x24] sm:$0xf]
      %v1786 = vld [vmem:[%s709 + $0x28] sm:$0xf]
      %v1787 = vld [vmem:[%s709 + $0x2c] sm:$0xf]
      %v1788 = vld [vmem:[%s709 + $0x30] sm:$0xf]
      %v1789 = vld [vmem:[%s709 + $0x34] sm:$0xf]
      %v1790 = vld [vmem:[%s709 + $0x38] sm:$0xf]
      %v1791 = vld [vmem:[%s709 + $0x3c] sm:$0xf]
      %v1792 = vld [vmem:[%s709 + $0x40] sm:$0xf]
      %v1793 = vld [vmem:[%s709 + $0x44] sm:$0xf]
      %v1794 = vld [vmem:[%s709 + $0x48] sm:$0xf]
      %v1795 = vld [vmem:[%s709 + $0x4c] sm:$0xf]
      %v1796 = vld [vmem:[%s709 + $0x50] sm:$0xf]
      %v1797 = vld [vmem:[%s709 + $0x54] sm:$0xf]
      %v1798 = vld [vmem:[%s709 + $0x58] sm:$0xf]
      %v1799 = vld [vmem:[%s709 + $0x5c] sm:$0xf]
      %v1800 = vpack.c.bf16 %v1762, %v1760
      %v1801 = vpack.c.bf16 %v1763, %v1761
      %v1802 = vpack.c.bf16 %v1766, %v1764
      %v1803 = vpack.c.bf16 %v1767, %v1765
      %v1804 = vpack.c.bf16 %v1770, %v1768
      %v1805 = vpack.c.bf16 %v1771, %v1769
      %v1806 = vpack.c.bf16 %v1774, %v1772
      %v1807 = vpack.c.bf16 %v1775, %v1773
      %v1808 = vld [vmem:[%s714] sm:$0xff]
      %v1809 = vld [vmem:[%s714 + $0x8] sm:$0xff]
      %v1810 = vld [vmem:[%s714 + $0x10] sm:$0xff]
      %v1811 = vld [vmem:[%s714 + $0x18] sm:$0xff]
      %v1812 = vld [vmem:[%s714 + $0x20] sm:$0xff]
      %v1813 = vld [vmem:[%s714 + $0x28] sm:$0xff]
      %v1814 = vld [vmem:[%s714 + $0x30] sm:$0xff]
      %v1815 = vld [vmem:[%s714 + $0x38] sm:$0xff]
      %v1816 = vld [vmem:[%s714 + $0x40] sm:$0xff]
      %v1817 = vld [vmem:[%s714 + $0x48] sm:$0xff]
      %v1818 = vld [vmem:[%s714 + $0x50] sm:$0xff]
      %v1819 = vld [vmem:[%s714 + $0x58] sm:$0xff]
      %v1820 = vld [vmem:[%s714 + $0x60] sm:$0xff]
      %v1821 = vld [vmem:[%s714 + $0x68] sm:$0xff]
      %v1822 = vld [vmem:[%s714 + $0x70] sm:$0xff]
      %v1823 = vld [vmem:[%s714 + $0x78] sm:$0xff]
      %v1824 = vld [vmem:[%s714 + $0x80] sm:$0xff]
      %v1825 = vld [vmem:[%s714 + $0x88] sm:$0xff]
      %v1826 = vld [vmem:[%s714 + $0x90] sm:$0xff]
      %v1827 = vld [vmem:[%s714 + $0x98] sm:$0xff]
      %v1828 = vld [vmem:[%s714 + $0xa0] sm:$0xff]
      %v1829 = vld [vmem:[%s714 + $0xa8] sm:$0xff]
      %v1830 = vld [vmem:[%s714 + $0xb0] sm:$0xff]
      %v1831 = vld [vmem:[%s714 + $0xb8] sm:$0xff]
      %1833 = vset.pattern.permute.xlu0 0
      %1834 = vperm.xlu0 %1833, %v1808
      %v1835 = vpop.permute.xlu0 %1834
      %1838 = vset.pattern.permute.xlu0 0
      %1839 = vperm.xlu0 %1838, %v1809
      %v1840 = vpop.permute.xlu0 %1839
      %1843 = vset.pattern.permute.xlu0 0
      %1844 = vperm.xlu0 %1843, %v1810
      %v1845 = vpop.permute.xlu0 %1844
      %1848 = vset.pattern.permute.xlu0 0
      %1849 = vperm.xlu0 %1848, %v1811
      %v1850 = vpop.permute.xlu0 %1849
      %1853 = vset.pattern.permute.xlu0 0
      %1854 = vperm.xlu0 %1853, %v1812
      %v1855 = vpop.permute.xlu0 %1854
      %1858 = vset.pattern.permute.xlu0 0
      %1859 = vperm.xlu0 %1858, %v1813
      %v1860 = vpop.permute.xlu0 %1859
      %1863 = vset.pattern.permute.xlu0 0
      %1864 = vperm.xlu0 %1863, %v1814
      %v1865 = vpop.permute.xlu0 %1864
      %1868 = vset.pattern.permute.xlu0 0
      %1869 = vperm.xlu0 %1868, %v1815
      %v1870 = vpop.permute.xlu0 %1869
      %1873 = vset.pattern.permute.xlu0 0
      %1874 = vperm.xlu0 %1873, %v1816
      %v1875 = vpop.permute.xlu0 %1874
      %1878 = vset.pattern.permute.xlu0 0
      %1879 = vperm.xlu0 %1878, %v1817
      %v1880 = vpop.permute.xlu0 %1879
      %1883 = vset.pattern.permute.xlu0 0
      %1884 = vperm.xlu0 %1883, %v1818
      %v1885 = vpop.permute.xlu0 %1884
      %1888 = vset.pattern.permute.xlu0 0
      %1889 = vperm.xlu0 %1888, %v1819
      %v1890 = vpop.permute.xlu0 %1889
      %1893 = vset.pattern.permute.xlu0 0
      %1894 = vperm.xlu0 %1893, %v1820
      %v1895 = vpop.permute.xlu0 %1894
      %1898 = vset.pattern.permute.xlu0 0
      %1899 = vperm.xlu0 %1898, %v1821
      %v1900 = vpop.permute.xlu0 %1899
      %1903 = vset.pattern.permute.xlu0 0
      %1904 = vperm.xlu0 %1903, %v1822
      %v1905 = vpop.permute.xlu0 %1904
      %1908 = vset.pattern.permute.xlu0 0
      %1909 = vperm.xlu0 %1908, %v1823
      %v1910 = vpop.permute.xlu0 %1909
      %1913 = vset.pattern.permute.xlu0 0
      %1914 = vperm.xlu0 %1913, %v1824
      %v1915 = vpop.permute.xlu0 %1914
      %1918 = vset.pattern.permute.xlu0 0
      %1919 = vperm.xlu0 %1918, %v1825
      %v1920 = vpop.permute.xlu0 %1919
      %1923 = vset.pattern.permute.xlu0 0
      %1924 = vperm.xlu0 %1923, %v1826
      %v1925 = vpop.permute.xlu0 %1924
      %1928 = vset.pattern.permute.xlu0 0
      %1929 = vperm.xlu0 %1928, %v1827
      %v1930 = vpop.permute.xlu0 %1929
      %1933 = vset.pattern.permute.xlu0 0
      %1934 = vperm.xlu0 %1933, %v1828
      %v1935 = vpop.permute.xlu0 %1934
      %1938 = vset.pattern.permute.xlu0 0
      %1939 = vperm.xlu0 %1938, %v1829
      %v1940 = vpop.permute.xlu0 %1939
      %1943 = vset.pattern.permute.xlu0 0
      %1944 = vperm.xlu0 %1943, %v1830
      %v1945 = vpop.permute.xlu0 %1944
      %1948 = vset.pattern.permute.xlu0 0
      %1949 = vperm.xlu0 %1948, %v1831
      %v1950 = vpop.permute.xlu0 %1949
      %v1976 = vunpack.c.l.b16 %v1776
      %v1977 = vunpack.c.l.b16 %v1777
      %v1978 = vunpack.c.l.b16 %v1778
      %v1979 = vunpack.c.l.b16 %v1779
      %v1980 = vunpack.c.l.b16 %v1780
      %v1981 = vunpack.c.l.b16 %v1781
      %v1982 = vunpack.c.l.b16 %v1782
      %v1983 = vunpack.c.l.b16 %v1783
      %v1984 = vunpack.c.l.b16 %v1784
      %v1985 = vunpack.c.l.b16 %v1785
      %v1986 = vunpack.c.l.b16 %v1786
      %v1987 = vunpack.c.l.b16 %v1787
      %v1988 = vunpack.c.l.b16 %v1788
      %v1989 = vunpack.c.l.b16 %v1789
      %v1990 = vunpack.c.l.b16 %v1790
      %v1991 = vunpack.c.l.b16 %v1791
      %v1992 = vunpack.c.l.b16 %v1792
      %v1993 = vunpack.c.l.b16 %v1793
      %v1994 = vunpack.c.l.b16 %v1794
      %v1995 = vunpack.c.l.b16 %v1795
      %v1996 = vunpack.c.l.b16 %v1796
      %v1997 = vunpack.c.l.b16 %v1797
      %v1998 = vunpack.c.l.b16 %v1798
      %v1999 = vunpack.c.l.b16 %v1799
      %v2000 = vpack.c.b16 %v1977, %v1976
      %v2001 = vpack.c.b16 %v1979, %v1978
      %v2002 = vpack.c.b16 %v1981, %v1980
      %v2003 = vpack.c.b16 %v1983, %v1982
      %v2004 = vpack.c.b16 %v1985, %v1984
      %v2005 = vpack.c.b16 %v1987, %v1986
      %v2006 = vpack.c.b16 %v1989, %v1988
      %v2007 = vpack.c.b16 %v1991, %v1990
      %v2008 = vpack.c.b16 %v1993, %v1992
      %v2009 = vpack.c.b16 %v1995, %v1994
      %v2010 = vpack.c.b16 %v1997, %v1996
      %v2011 = vpack.c.b16 %v1999, %v1998
      %vm2012 = vcmask 523264
      %v2014 = vsel %vm2012, %v2000, 0
      %v2017 = vsel %vm2012, %v2001, 0
      %v2020 = vsel %vm2012, %v2002, 0
      %v2023 = vsel %vm2012, %v2003, 0
      %v2026 = vsel %vm2012, %v2004, 0
      %v2029 = vsel %vm2012, %v2005, 0
      %v2032 = vsel %vm2012, %v2006, 0
      %v2035 = vsel %vm2012, %v2007, 0
      %v2038 = vsel %vm2012, %v2008, 0
      %v2041 = vsel %vm2012, %v2009, 0
      %v2044 = vsel %vm2012, %v2010, 0
      %v2047 = vsel %vm2012, %v2011, 0
      %2049 = vmatprep.subr.bf16.mxu0 %v1801
      %2050 = vmatpush1.bf16.msra.mxu0 %v1800
      %2051 = vmatprep.subr.bf16.mxu0 %v1803
      %2052 = vmatpush1.bf16.msra.mxu0 %v1802
      %2053 = vmatprep.subr.bf16.mxu0 %v1805
      %2054 = vmatpush1.bf16.msra.mxu0 %v1804
      %2055 = vmatprep.subr.bf16.mxu0 %v1807
      %2056 = vmatpush1.bf16.msra.mxu0 %v1806
      %2057 = vmatprep.subr.bf16.mxu0 0
      %2058 = vmatpush1.bf16.msra.mxu0 0
      %2059 = vmatprep.subr.bf16.mxu0 0
      %2060 = vmatpush1.bf16.msra.mxu0 0
      %2061 = vmatprep.subr.bf16.mxu0 0
      %2062 = vmatpush1.bf16.msra.mxu0 0
      %2063 = vmatprep.subr.bf16.mxu0 0
      %2064 = vmatpush1.bf16.msra.mxu0 0
      %2065 = vmatprep.subr.bf16.mxu0 0
      %2066 = vmatpush1.bf16.msra.mxu0 0
      %2067 = vmatprep.subr.bf16.mxu0 0
      %2068 = vmatpush1.bf16.msra.mxu0 0
      %2069 = vmatprep.subr.bf16.mxu0 0
      %2070 = vmatpush1.bf16.msra.mxu0 0
      %2071 = vmatprep.subr.bf16.mxu0 0
      %2072 = vmatpush1.bf16.msra.mxu0 0
      %2073 = vmatprep.subr.bf16.mxu0 0
      %2074 = vmatpush1.bf16.msra.mxu0 0
      %2075 = vmatprep.subr.bf16.mxu0 0
      %2076 = vmatpush1.bf16.msra.mxu0 0
      %2077 = vmatprep.subr.bf16.mxu0 0
      %2078 = vmatpush1.bf16.msra.mxu0 0
      %2079 = vmatprep.subr.bf16.mxu0 0
      %2080 = vmatpush1.bf16.msra.mxu0 0
      %2081 = vmatprep.mubr.bf16.mxu0 0
      %2082 = vmatmul.mubr.bf16.gmra.mrb[0].mxu0 %v2014
      %v2083 = vpop.f32.mrb[0].mxu0
      %v2084 = vadd.f32 %v1835, %v2083
      %v2085 = vpop.f32.mrb[0].mxu0
      %v2086 = vadd.f32 %v1835, %v2085
      %v2087 = vpop.f32.mrb[0].mxu0
      %v2088 = vadd.f32 %v1840, %v2087
      %v2089 = vpop.f32.mrb[0].mxu0
      %v2090 = vadd.f32 %v1840, %v2089
      %2091 = vmatprep.mubr.bf16.mxu0 0
      %2092 = vmatmul.mubr.bf16.gmra.mrb[0].mxu0 %v2017
      %v2093 = vpop.f32.mrb[0].mxu0
      %v2094 = vadd.f32 %v1845, %v2093
      %v2095 = vpop.f32.mrb[0].mxu0
      %v2096 = vadd.f32 %v1845, %v2095
      %v2097 = vpop.f32.mrb[0].mxu0
      %v2098 = vadd.f32 %v1850, %v2097
      %v2099 = vpop.f32.mrb[0].mxu0
      %v2100 = vadd.f32 %v1850, %v2099
      %2101 = vmatprep.mubr.bf16.mxu0 0
      %2102 = vmatmul.mubr.bf16.gmra.mrb[0].mxu0 %v2020
      %v2103 = vpop.f32.mrb[0].mxu0
      %v2104 = vadd.f32 %v1855, %v2103
      %v2105 = vpop.f32.mrb[0].mxu0
      %v2106 = vadd.f32 %v1855, %v2105
      %v2107 = vpop.f32.mrb[0].mxu0
      %v2108 = vadd.f32 %v1860, %v2107
      %v2109 = vpop.f32.mrb[0].mxu0
      %v2110 = vadd.f32 %v1860, %v2109
      %2111 = vmatprep.mubr.bf16.mxu0 0
      %2112 = vmatmul.mubr.bf16.gmra.mrb[0].mxu0 %v2023
      %v2113 = vpop.f32.mrb[0].mxu0
      %v2114 = vadd.f32 %v1865, %v2113
      %v2115 = vpop.f32.mrb[0].mxu0
      %v2116 = vadd.f32 %v1865, %v2115
      %v2117 = vpop.f32.mrb[0].mxu0
      %v2118 = vadd.f32 %v1870, %v2117
      %v2119 = vpop.f32.mrb[0].mxu0
      %v2120 = vadd.f32 %v1870, %v2119
      %2121 = vmatprep.mubr.bf16.mxu0 0
      %2122 = vmatmul.mubr.bf16.gmra.mrb[0].mxu0 %v2026
      %v2123 = vpop.f32.mrb[0].mxu0
      %v2124 = vadd.f32 %v1875, %v2123
      %v2125 = vpop.f32.mrb[0].mxu0
      %v2126 = vadd.f32 %v1875, %v2125
      %v2127 = vpop.f32.mrb[0].mxu0
      %v2128 = vadd.f32 %v1880, %v2127
      %v2129 = vpop.f32.mrb[0].mxu0
      %v2130 = vadd.f32 %v1880, %v2129
      %2131 = vmatprep.mubr.bf16.mxu0 0
      %2132 = vmatmul.mubr.bf16.gmra.mrb[0].mxu0 %v2029
      %v2133 = vpop.f32.mrb[0].mxu0
      %v2134 = vadd.f32 %v1885, %v2133
      %v2135 = vpop.f32.mrb[0].mxu0
      %v2136 = vadd.f32 %v1885, %v2135
      %v2137 = vpop.f32.mrb[0].mxu0
      %v2138 = vadd.f32 %v1890, %v2137
      %v2139 = vpop.f32.mrb[0].mxu0
      %v2140 = vadd.f32 %v1890, %v2139
      %2141 = vmatprep.mubr.bf16.mxu0 0
      %2142 = vmatmul.mubr.bf16.gmra.mrb[0].mxu0 %v2032
      %v2143 = vpop.f32.mrb[0].mxu0
      %v2144 = vadd.f32 %v1895, %v2143
      %v2145 = vpop.f32.mrb[0].mxu0
      %v2146 = vadd.f32 %v1895, %v2145
      %v2147 = vpop.f32.mrb[0].mxu0
      %v2148 = vadd.f32 %v1900, %v2147
      %v2149 = vpop.f32.mrb[0].mxu0
      %v2150 = vadd.f32 %v1900, %v2149
      %2151 = vmatprep.mubr.bf16.mxu0 0
      %2152 = vmatmul.mubr.bf16.gmra.mrb[0].mxu0 %v2035
      %v2153 = vpop.f32.mrb[0].mxu0
      %v2154 = vadd.f32 %v1905, %v2153
      %v2155 = vpop.f32.mrb[0].mxu0
      %v2156 = vadd.f32 %v1905, %v2155
      %v2157 = vpop.f32.mrb[0].mxu0
      %v2158 = vadd.f32 %v1910, %v2157
      %v2159 = vpop.f32.mrb[0].mxu0
      %v2160 = vadd.f32 %v1910, %v2159
      %2161 = vmatprep.mubr.bf16.mxu0 0
      %2162 = vmatmul.mubr.bf16.gmra.mrb[0].mxu0 %v2038
      %v2163 = vpop.f32.mrb[0].mxu0
      %v2164 = vadd.f32 %v1915, %v2163
      %v2165 = vpop.f32.mrb[0].mxu0
      %v2166 = vadd.f32 %v1915, %v2165
      %v2167 = vpop.f32.mrb[0].mxu0
      %v2168 = vadd.f32 %v1920, %v2167
      %v2169 = vpop.f32.mrb[0].mxu0
      %v2170 = vadd.f32 %v1920, %v2169
      %2171 = vmatprep.mubr.bf16.mxu0 0
      %2172 = vmatmul.mubr.bf16.gmra.mrb[0].mxu0 %v2041
      %v2173 = vpop.f32.mrb[0].mxu0
      %v2174 = vadd.f32 %v1925, %v2173
      %v2175 = vpop.f32.mrb[0].mxu0
      %v2176 = vadd.f32 %v1925, %v2175
      %v2177 = vpop.f32.mrb[0].mxu0
      %v2178 = vadd.f32 %v1930, %v2177
      %v2179 = vpop.f32.mrb[0].mxu0
      %v2180 = vadd.f32 %v1930, %v2179
      %2181 = vmatprep.mubr.bf16.mxu0 0
      %2182 = vmatmul.mubr.bf16.gmra.mrb[0].mxu0 %v2044
      %v2183 = vpop.f32.mrb[0].mxu0
      %v2184 = vadd.f32 %v1935, %v2183
      %v2185 = vpop.f32.mrb[0].mxu0
      %v2186 = vadd.f32 %v1935, %v2185
      %v2187 = vpop.f32.mrb[0].mxu0
      %v2188 = vadd.f32 %v1940, %v2187
      %v2189 = vpop.f32.mrb[0].mxu0
      %v2190 = vadd.f32 %v1940, %v2189
      %2191 = vmatprep.mubr.bf16.mxu0 0
      %2192 = vmatmul.mubr.bf16.gmra.mrb[0].mxu0 %v2047
      %v2193 = vpop.f32.mrb[0].mxu0
      %v2194 = vadd.f32 %v1945, %v2193
      %v2195 = vpop.f32.mrb[0].mxu0
      %v2196 = vadd.f32 %v1945, %v2195
      %v2197 = vpop.f32.mrb[0].mxu0
      %v2198 = vadd.f32 %v1950, %v2197
      %v2199 = vpop.f32.mrb[0].mxu0
      %v2200 = vadd.f32 %v1950, %v2199
      %2201 = vdwg.mxu0
      %2202 = vst [vmem:[#allocation2] sm:$0xff] %v2084
      %2203 = vst [vmem:[#allocation2 + $0x8] sm:$0xff] %v2086
      %2204 = vst [vmem:[#allocation2 + $0x10] sm:$0xff] %v2088
      %2205 = vst [vmem:[#allocation2 + $0x18] sm:$0xff] %v2090
      %2206 = vst [vmem:[#allocation2 + $0x20] sm:$0xff] %v2094
      %2207 = vst [vmem:[#allocation2 + $0x28] sm:$0xff] %v2096
      %2208 = vst [vmem:[#allocation2 + $0x30] sm:$0xff] %v2098
      %2209 = vst [vmem:[#allocation2 + $0x38] sm:$0xff] %v2100
      %2210 = vst [vmem:[#allocation2 + $0x40] sm:$0xff] %v2104
      %2211 = vst [vmem:[#allocation2 + $0x48] sm:$0xff] %v2106
      %2212 = vst [vmem:[#allocation2 + $0x50] sm:$0xff] %v2108
      %2213 = vst [vmem:[#allocation2 + $0x58] sm:$0xff] %v2110
      %2214 = vst [vmem:[#allocation2 + $0x60] sm:$0xff] %v2114
      %2215 = vst [vmem:[#allocation2 + $0x68] sm:$0xff] %v2116
      %2216 = vst [vmem:[#allocation2 + $0x70] sm:$0xff] %v2118
      %2217 = vst [vmem:[#allocation2 + $0x78] sm:$0xff] %v2120
      %2218 = vst [vmem:[#allocation2 + $0x80] sm:$0xff] %v2124
      %2219 = vst [vmem:[#allocation2 + $0x88] sm:$0xff] %v2126
      %2220 = vst [vmem:[#allocation2 + $0x90] sm:$0xff] %v2128
      %2221 = vst [vmem:[#allocation2 + $0x98] sm:$0xff] %v2130
      %2222 = vst [vmem:[#allocation2 + $0xa0] sm:$0xff] %v2134
      %2223 = vst [vmem:[#allocation2 + $0xa8] sm:$0xff] %v2136
      %2224 = vst [vmem:[#allocation2 + $0xb0] sm:$0xff] %v2138
      %2225 = vst [vmem:[#allocation2 + $0xb8] sm:$0xff] %v2140
      %2226 = vst [vmem:[#allocation2 + $0xc0] sm:$0xff] %v2144
      %2227 = vst [vmem:[#allocation2 + $0xc8] sm:$0xff] %v2146
      %2228 = vst [vmem:[#allocation2 + $0xd0] sm:$0xff] %v2148
      %2229 = vst [vmem:[#allocation2 + $0xd8] sm:$0xff] %v2150
      %2230 = vst [vmem:[#allocation2 + $0xe0] sm:$0xff] %v2154
      %2231 = vst [vmem:[#allocation2 + $0xe8] sm:$0xff] %v2156
      %2232 = vst [vmem:[#allocation2 + $0xf0] sm:$0xff] %v2158
      %2233 = vst [vmem:[#allocation2 + $0xf8] sm:$0xff] %v2160
      %2234 = vst [vmem:[#allocation2 + $0x100] sm:$0xff] %v2164
      %2235 = vst [vmem:[#allocation2 + $0x108] sm:$0xff] %v2166
      %2236 = vst [vmem:[#allocation2 + $0x110] sm:$0xff] %v2168
      %2237 = vst [vmem:[#allocation2 + $0x118] sm:$0xff] %v2170
      %2238 = vst [vmem:[#allocation2 + $0x120] sm:$0xff] %v2174
      %2239 = vst [vmem:[#allocation2 + $0x128] sm:$0xff] %v2176
      %2240 = vst [vmem:[#allocation2 + $0x130] sm:$0xff] %v2178
      %2241 = vst [vmem:[#allocation2 + $0x138] sm:$0xff] %v2180
      %2242 = vst [vmem:[#allocation2 + $0x140] sm:$0xff] %v2184
      %2243 = vst [vmem:[#allocation2 + $0x148] sm:$0xff] %v2186
      %2244 = vst [vmem:[#allocation2 + $0x150] sm:$0xff] %v2188
      %2245 = vst [vmem:[#allocation2 + $0x158] sm:$0xff] %v2190
      %2246 = vst [vmem:[#allocation2 + $0x160] sm:$0xff] %v2194
      %2247 = vst [vmem:[#allocation2 + $0x168] sm:$0xff] %v2196
      %2248 = vst [vmem:[#allocation2 + $0x170] sm:$0xff] %v2198
      %2249 = vst [vmem:[#allocation2 + $0x178] sm:$0xff] %v2200
      %v2250 = vld [vmem:[%s724] sm:$0xff]
      %v2251 = vld [vmem:[%s724 + $0x8] sm:$0xff]
      %v2252 = vld [vmem:[%s724 + $0x10] sm:$0xff]
      %v2253 = vld [vmem:[%s724 + $0x18] sm:$0xff]
      %v2254 = vld [vmem:[%s724 + $0x20] sm:$0xff]
      %v2255 = vld [vmem:[%s724 + $0x28] sm:$0xff]
      %v2256 = vld [vmem:[%s724 + $0x30] sm:$0xff]
      %v2257 = vld [vmem:[%s724 + $0x38] sm:$0xff]
      %2259 = vset.pattern.permute.xlu0 0
      %2260 = vperm.xlu0 %2259, %v2250
      %v2261 = vpop.permute.xlu0 %2260
      %2264 = vset.pattern.permute.xlu0 0
      %2265 = vperm.xlu0 %2264, %v2251
      %v2266 = vpop.permute.xlu0 %2265
      %2269 = vset.pattern.permute.xlu0 0
      %2270 = vperm.xlu0 %2269, %v2252
      %v2271 = vpop.permute.xlu0 %2270
      %2274 = vset.pattern.permute.xlu0 0
      %2275 = vperm.xlu0 %2274, %v2253
      %v2276 = vpop.permute.xlu0 %2275
      %2279 = vset.pattern.permute.xlu0 0
      %2280 = vperm.xlu0 %2279, %v2254
      %v2281 = vpop.permute.xlu0 %2280
      %2284 = vset.pattern.permute.xlu0 0
      %2285 = vperm.xlu0 %2284, %v2255
      %v2286 = vpop.permute.xlu0 %2285
      %2289 = vset.pattern.permute.xlu0 0
      %2290 = vperm.xlu0 %2289, %v2256
      %v2291 = vpop.permute.xlu0 %2290
      %2294 = vset.pattern.permute.xlu0 0
      %2295 = vperm.xlu0 %2294, %v2257
      %v2296 = vpop.permute.xlu0 %2295
      %v2298 = vadd.f32 %v2261, 0.0
      %v2299 = vadd.f32 %v2266, 0.0
      %v2300 = vadd.f32 %v2271, 0.0
      %v2301 = vadd.f32 %v2276, 0.0
      %v2302 = vadd.f32 %v2281, 0.0
      %v2303 = vadd.f32 %v2286, 0.0
      %v2304 = vadd.f32 %v2291, 0.0
      %v2305 = vadd.f32 %v2296, 0.0
      %v2306 = vld [vmem:[#allocation2] sm:$0xff]
      %v2307 = vld [vmem:[#allocation2 + $0x8] sm:$0xff]
      %v2308 = vld [vmem:[#allocation2 + $0x10] sm:$0xff]
      %v2309 = vld [vmem:[#allocation2 + $0x18] sm:$0xff]
      %v2310 = vld [vmem:[#allocation2 + $0x20] sm:$0xff]
      %v2311 = vld [vmem:[#allocation2 + $0x28] sm:$0xff]
      %v2312 = vld [vmem:[#allocation2 + $0x30] sm:$0xff]
      %v2313 = vld [vmem:[#allocation2 + $0x38] sm:$0xff]
      %v2314 = vld [vmem:[#allocation2 + $0x80] sm:$0xff]
      %v2315 = vld [vmem:[#allocation2 + $0x88] sm:$0xff]
      %v2316 = vld [vmem:[#allocation2 + $0x90] sm:$0xff]
      %v2317 = vld [vmem:[#allocation2 + $0x98] sm:$0xff]
      %v2318 = vld [vmem:[#allocation2 + $0xa0] sm:$0xff]
      %v2319 = vld [vmem:[#allocation2 + $0xa8] sm:$0xff]
      %v2320 = vld [vmem:[#allocation2 + $0xb0] sm:$0xff]
      %v2321 = vld [vmem:[#allocation2 + $0xb8] sm:$0xff]
      %v2322 = vld [vmem:[#allocation2 + $0x100] sm:$0xff]
      %v2323 = vld [vmem:[#allocation2 + $0x108] sm:$0xff]
      %v2324 = vld [vmem:[#allocation2 + $0x110] sm:$0xff]
      %v2325 = vld [vmem:[#allocation2 + $0x118] sm:$0xff]
      %v2326 = vld [vmem:[#allocation2 + $0x120] sm:$0xff]
      %v2327 = vld [vmem:[#allocation2 + $0x128] sm:$0xff]
      %v2328 = vld [vmem:[#allocation2 + $0x130] sm:$0xff]
      %v2329 = vld [vmem:[#allocation2 + $0x138] sm:$0xff]
      %v2330 = vmul.f32 %v2306, %v2314
      %v2331 = vmul.f32 %v2307, %v2315
      %v2332 = vmul.f32 %v2308, %v2316
      %v2333 = vmul.f32 %v2309, %v2317
      %v2334 = vmul.f32 %v2310, %v2318
      %v2335 = vmul.f32 %v2311, %v2319
      %v2336 = vmul.f32 %v2312, %v2320
      %v2337 = vmul.f32 %v2313, %v2321
      %v2338 = vadd.f32 %v2330, %v2332
      %v2339 = vadd.f32 %v2338, %v2334
      %v2340 = vadd.f32 %v2339, %v2336
      %v2341 = vrot.slane %v2340, 4
      %v2342 = vadd.f32 %v2340, %v2341
      %v2343 = vrot.slane %v2342, 2
      %v2344 = vadd.f32 %v2342, %v2343
      %v2345 = vrot.slane %v2344, 1
      %v2346 = vadd.f32 %v2344, %v2345
      %v2347 = vadd.f32 %v2331, %v2333
      %v2348 = vadd.f32 %v2347, %v2335
      %v2349 = vadd.f32 %v2348, %v2337
      %v2350 = vrot.slane %v2349, 4
      %v2351 = vadd.f32 %v2349, %v2350
      %v2352 = vrot.slane %v2351, 2
      %v2353 = vadd.f32 %v2351, %v2352
      %v2354 = vrot.slane %v2353, 1
      %v2355 = vadd.f32 %v2353, %v2354
      %v2356 = vmul.f32 %v2346, 0.17677669
      %v2357 = vmul.f32 %v2355, 0.17677669
      %2358 = vrot.lane.b32.xlu0 %v2314, 64
      %v2359 = vpop.permute.xlu0 %2358
      %2360 = vrot.lane.b32.xlu0 %v2316, 64
      %v2361 = vpop.permute.xlu0 %2360
      %2362 = vrot.lane.b32.xlu0 %v2318, 64
      %v2363 = vpop.permute.xlu0 %2362
      %2364 = vrot.lane.b32.xlu0 %v2320, 64
      %v2365 = vpop.permute.xlu0 %2364
      %2366 = vrot.lane.b32.xlu0 %v2315, 64
      %v2367 = vpop.permute.xlu0 %2366
      %2368 = vrot.lane.b32.xlu0 %v2317, 64
      %v2369 = vpop.permute.xlu0 %2368
      %2370 = vrot.lane.b32.xlu0 %v2319, 64
      %v2371 = vpop.permute.xlu0 %2370
      %2372 = vrot.lane.b32.xlu0 %v2321, 64
      %v2373 = vpop.permute.xlu0 %2372
      %v2374 = vlaneseq
      %v2375 = vand.u32 %v2374, 127
      %vm2376 = vcmp.lt.s32.totalorder %v2375, 64
      %v2377 = vsel %vm2376, %v2359, %v2367
      %v2378 = vsel %vm2376, %v2361, %v2369
      %v2379 = vsel %vm2376, %v2363, %v2371
      %v2380 = vsel %vm2376, %v2365, %v2373
      %v2381 = vsel %vm2376, %v2367, %v2359
      %v2382 = vsel %vm2376, %v2369, %v2361
      %v2383 = vsel %vm2376, %v2371, %v2363
      %v2384 = vsel %vm2376, %v2373, %v2365
      %v2385 = vmul.f32 %v2306, %v2377
      %v2386 = vmul.f32 %v2307, %v2381
      %v2387 = vmul.f32 %v2308, %v2378
      %v2388 = vmul.f32 %v2309, %v2382
      %v2389 = vmul.f32 %v2310, %v2379
      %v2390 = vmul.f32 %v2311, %v2383
      %v2391 = vmul.f32 %v2312, %v2380
      %v2392 = vmul.f32 %v2313, %v2384
      %v2393 = vadd.f32 %v2385, %v2387
      %v2394 = vadd.f32 %v2393, %v2389
      %v2395 = vadd.f32 %v2394, %v2391
      %v2396 = vrot.slane %v2395, 4
      %v2397 = vadd.f32 %v2395, %v2396
      %v2398 = vrot.slane %v2397, 2
      %v2399 = vadd.f32 %v2397, %v2398
      %v2400 = vrot.slane %v2399, 1
      %v2401 = vadd.f32 %v2399, %v2400
      %v2402 = vadd.f32 %v2386, %v2388
      %v2403 = vadd.f32 %v2402, %v2390
      %v2404 = vadd.f32 %v2403, %v2392
      %v2405 = vrot.slane %v2404, 4
      %v2406 = vadd.f32 %v2404, %v2405
      %v2407 = vrot.slane %v2406, 2
      %v2408 = vadd.f32 %v2406, %v2407
      %v2409 = vrot.slane %v2408, 1
      %v2410 = vadd.f32 %v2408, %v2409
      %v2411 = vmul.f32 %v2401, 0.17677669
      %v2412 = vmul.f32 %v2410, 0.17677669
      %v2413 = vmul.f32 %v2306, %v2315
      %v2414 = vmul.f32 %v2307, %v2314
      %v2415 = vmul.f32 %v2308, %v2317
      %v2416 = vmul.f32 %v2309, %v2316
      %v2417 = vmul.f32 %v2310, %v2319
      %v2418 = vmul.f32 %v2311, %v2318
      %v2419 = vmul.f32 %v2312, %v2321
      %v2420 = vmul.f32 %v2313, %v2320
      %v2421 = vadd.f32 %v2413, %v2415
      %v2422 = vadd.f32 %v2421, %v2417
      %v2423 = vadd.f32 %v2422, %v2419
      %v2424 = vrot.slane %v2423, 4
      %v2425 = vadd.f32 %v2423, %v2424
      %v2426 = vrot.slane %v2425, 2
      %v2427 = vadd.f32 %v2425, %v2426
      %v2428 = vrot.slane %v2427, 1
      %v2429 = vadd.f32 %v2427, %v2428
      %v2430 = vadd.f32 %v2414, %v2416
      %v2431 = vadd.f32 %v2430, %v2418
      %v2432 = vadd.f32 %v2431, %v2420
      %v2433 = vrot.slane %v2432, 4
      %v2434 = vadd.f32 %v2432, %v2433
      %v2435 = vrot.slane %v2434, 2
      %v2436 = vadd.f32 %v2434, %v2435
      %v2437 = vrot.slane %v2436, 1
      %v2438 = vadd.f32 %v2436, %v2437
      %v2439 = vmul.f32 %v2429, 0.17677669
      %v2440 = vmul.f32 %v2438, 0.17677669
      %v2441 = vmul.f32 %v2306, %v2381
      %v2442 = vmul.f32 %v2307, %v2377
      %v2443 = vmul.f32 %v2308, %v2382
      %v2444 = vmul.f32 %v2309, %v2378
      %v2445 = vmul.f32 %v2310, %v2383
      %v2446 = vmul.f32 %v2311, %v2379
      %v2447 = vmul.f32 %v2312, %v2384
      %v2448 = vmul.f32 %v2313, %v2380
      %v2449 = vadd.f32 %v2441, %v2443
      %v2450 = vadd.f32 %v2449, %v2445
      %v2451 = vadd.f32 %v2450, %v2447
      %v2452 = vrot.slane %v2451, 4
      %v2453 = vadd.f32 %v2451, %v2452
      %v2454 = vrot.slane %v2453, 2
      %v2455 = vadd.f32 %v2453, %v2454
      %v2456 = vrot.slane %v2455, 1
      %v2457 = vadd.f32 %v2455, %v2456
      %v2458 = vadd.f32 %v2442, %v2444
      %v2459 = vadd.f32 %v2458, %v2446
      %v2460 = vadd.f32 %v2459, %v2448
      %v2461 = vrot.slane %v2460, 4
      %v2462 = vadd.f32 %v2460, %v2461
      %v2463 = vrot.slane %v2462, 2
      %v2464 = vadd.f32 %v2462, %v2463
      %v2465 = vrot.slane %v2464, 1
      %v2466 = vadd.f32 %v2464, %v2465
      %v2467 = vmul.f32 %v2457, 0.17677669
      %v2468 = vmul.f32 %v2466, 0.17677669
      %v2469 = vmax.f32 %v2356, %v2411
      %v2470 = vmax.f32 %v2357, %v2412
      %v2471 = vmax.f32 %v2469, %v2439
      %v2472 = vmax.f32 %v2470, %v2440
      %v2473 = vmax.f32 %v2471, %v2467
      %v2474 = vmax.f32 %v2472, %v2468
      %v2475 = vsub.f32 %v2356, %v2473
      %v2476 = vsub.f32 %v2357, %v2474
      %v2477 = vmul.f32 %v2475, 1.442695
      %v2478 = vpow.pop %v2477
      %v2479 = vmul.f32 %v2476, 1.442695
      %v2480 = vpow.pop %v2479
      %v2481 = vsub.f32 %v2411, %v2473
      %v2482 = vsub.f32 %v2412, %v2474
      %v2483 = vmul.f32 %v2481, 1.442695
      %v2484 = vpow.pop %v2483
      %v2485 = vmul.f32 %v2482, 1.442695
      %v2486 = vpow.pop %v2485
      %v2487 = vsub.f32 %v2439, %v2473
      %v2488 = vsub.f32 %v2440, %v2474
      %v2489 = vmul.f32 %v2487, 1.442695
      %v2490 = vpow.pop %v2489
      %v2491 = vmul.f32 %v2488, 1.442695
      %v2492 = vpow.pop %v2491
      %v2493 = vsub.f32 %v2467, %v2473
      %v2494 = vsub.f32 %v2468, %v2474
      %v2495 = vmul.f32 %v2493, 1.442695
      %v2496 = vpow.pop %v2495
      %v2497 = vmul.f32 %v2494, 1.442695
      %v2498 = vpow.pop %v2497
      %v2499 = vadd.f32 %v2478, %v2484
      %v2500 = vadd.f32 %v2480, %v2486
      %v2501 = vadd.f32 %v2499, %v2490
      %v2502 = vadd.f32 %v2500, %v2492
      %v2503 = vadd.f32 %v2501, %v2496
      %v2504 = vadd.f32 %v2502, %v2498
      %v2505 = vrcp.pop %v2503
      %v2506 = vrcp.pop %v2504
      %v2507 = vmul.f32 %v2478, %v2505
      %v2508 = vmul.f32 %v2480, %v2506
      %v2509 = vmul.f32 %v2507, %v2322
      %v2510 = vmul.f32 %v2508, %v2323
      %v2511 = vmul.f32 %v2507, %v2324
      %v2512 = vmul.f32 %v2508, %v2325
      %v2513 = vmul.f32 %v2507, %v2326
      %v2514 = vmul.f32 %v2508, %v2327
      %v2515 = vmul.f32 %v2507, %v2328
      %v2516 = vmul.f32 %v2508, %v2329
      %2517 = vrot.lane.b32.xlu0 %v2322, 64
      %v2518 = vpop.permute.xlu0 %2517
      %2519 = vrot.lane.b32.xlu0 %v2324, 64
      %v2520 = vpop.permute.xlu0 %2519
      %2521 = vrot.lane.b32.xlu0 %v2326, 64
      %v2522 = vpop.permute.xlu0 %2521
      %2523 = vrot.lane.b32.xlu0 %v2328, 64
      %v2524 = vpop.permute.xlu0 %2523
      %2525 = vrot.lane.b32.xlu0 %v2323, 64
      %v2526 = vpop.permute.xlu0 %2525
      %2527 = vrot.lane.b32.xlu0 %v2325, 64
      %v2528 = vpop.permute.xlu0 %2527
      %2529 = vrot.lane.b32.xlu0 %v2327, 64
      %v2530 = vpop.permute.xlu0 %2529
      %2531 = vrot.lane.b32.xlu0 %v2329, 64
      %v2532 = vpop.permute.xlu0 %2531
      %v2533 = vsel %vm2376, %v2518, %v2526
      %v2534 = vsel %vm2376, %v2520, %v2528
      %v2535 = vsel %vm2376, %v2522, %v2530
      %v2536 = vsel %vm2376, %v2524, %v2532
      %v2537 = vsel %vm2376, %v2526, %v2518
      %v2538 = vsel %vm2376, %v2528, %v2520
      %v2539 = vsel %vm2376, %v2530, %v2522
      %v2540 = vsel %vm2376, %v2532, %v2524
      %v2541 = vmul.f32 %v2484, %v2505
      %v2542 = vmul.f32 %v2486, %v2506
      %v2543 = vmul.f32 %v2541, %v2533
      %v2544 = vmul.f32 %v2542, %v2537
      %v2545 = vmul.f32 %v2541, %v2534
      %v2546 = vmul.f32 %v2542, %v2538
      %v2547 = vmul.f32 %v2541, %v2535
      %v2548 = vmul.f32 %v2542, %v2539
      %v2549 = vmul.f32 %v2541, %v2536
      %v2550 = vmul.f32 %v2542, %v2540
      %v2551 = vadd.f32 %v2509, %v2543
      %v2552 = vadd.f32 %v2510, %v2544
      %v2553 = vadd.f32 %v2511, %v2545
      %v2554 = vadd.f32 %v2512, %v2546
      %v2555 = vadd.f32 %v2513, %v2547
      %v2556 = vadd.f32 %v2514, %v2548
      %v2557 = vadd.f32 %v2515, %v2549
      %v2558 = vadd.f32 %v2516, %v2550
      %v2559 = vmul.f32 %v2490, %v2505
      %v2560 = vmul.f32 %v2492, %v2506
      %v2561 = vmul.f32 %v2559, %v2323
      %v2562 = vmul.f32 %v2560, %v2322
      %v2563 = vmul.f32 %v2559, %v2325
      %v2564 = vmul.f32 %v2560, %v2324
      %v2565 = vmul.f32 %v2559, %v2327
      %v2566 = vmul.f32 %v2560, %v2326
      %v2567 = vmul.f32 %v2559, %v2329
      %v2568 = vmul.f32 %v2560, %v2328
      %v2569 = vadd.f32 %v2551, %v2561
      %v2570 = vadd.f32 %v2552, %v2562
      %v2571 = vadd.f32 %v2553, %v2563
      %v2572 = vadd.f32 %v2554, %v2564
      %v2573 = vadd.f32 %v2555, %v2565
      %v2574 = vadd.f32 %v2556, %v2566
      %v2575 = vadd.f32 %v2557, %v2567
      %v2576 = vadd.f32 %v2558, %v2568
      %v2577 = vmul.f32 %v2496, %v2505
      %v2578 = vmul.f32 %v2498, %v2506
      %v2579 = vmul.f32 %v2577, %v2537
      %v2580 = vmul.f32 %v2578, %v2533
      %v2581 = vmul.f32 %v2577, %v2538
      %v2582 = vmul.f32 %v2578, %v2534
      %v2583 = vmul.f32 %v2577, %v2539
      %v2584 = vmul.f32 %v2578, %v2535
      %v2585 = vmul.f32 %v2577, %v2540
      %v2586 = vmul.f32 %v2578, %v2536
      %v2587 = vadd.f32 %v2569, %v2579
      %v2588 = vadd.f32 %v2570, %v2580
      %v2589 = vadd.f32 %v2571, %v2581
      %v2590 = vadd.f32 %v2572, %v2582
      %v2591 = vadd.f32 %v2573, %v2583
      %v2592 = vadd.f32 %v2574, %v2584
      %v2593 = vadd.f32 %v2575, %v2585
      %v2594 = vadd.f32 %v2576, %v2586
      %v2595 = vld [vmem:[%s719] sm:$0xf]
      %v2596 = vld [vmem:[%s719 + $0x4] sm:$0xf]
      %v2597 = vld [vmem:[%s719 + $0x8] sm:$0xf]
      %v2598 = vld [vmem:[%s719 + $0xc] sm:$0xf]
      %v2599 = vld [vmem:[%s719 + $0x10] sm:$0xf]
      %v2600 = vld [vmem:[%s719 + $0x14] sm:$0xf]
      %v2601 = vld [vmem:[%s719 + $0x18] sm:$0xf]
      %v2602 = vld [vmem:[%s719 + $0x1c] sm:$0xf]
      %v2603 = vpack.c.bf16 %v2589, %v2587
      %v2604 = vpack.c.bf16 %v2590, %v2588
      %v2605 = vpack.c.bf16 %v2593, %v2591
      %v2606 = vpack.c.bf16 %v2594, %v2592
      %v2615 = vunpack.c.l.b16 %v2595
      %v2616 = vunpack.c.l.b16 %v2596
      %v2617 = vunpack.c.l.b16 %v2597
      %v2618 = vunpack.c.l.b16 %v2598
      %v2619 = vunpack.c.l.b16 %v2599
      %v2620 = vunpack.c.l.b16 %v2600
      %v2621 = vunpack.c.l.b16 %v2601
      %v2622 = vunpack.c.l.b16 %v2602
      %v2623 = vpack.c.b16 %v2616, %v2615
      %v2624 = vpack.c.b16 %v2618, %v2617
      %v2625 = vpack.c.b16 %v2620, %v2619
      %v2626 = vpack.c.b16 %v2622, %v2621
      %v2628 = vsel %vm812, %v2623, 0
      %v2631 = vsel %vm812, %v2624, 0
      %v2634 = vsel %vm812, %v2625, 0
      %v2637 = vsel %vm812, %v2626, 0
      %2639 = vmatprep.subr.bf16.mxu0 %v2604
      %2640 = vmatpush1.bf16.msra.mxu0 %v2603
      %2641 = vmatprep.subr.bf16.mxu0 %v2606
      %2642 = vmatpush1.bf16.msra.mxu0 %v2605
      %2643 = vmatprep.subr.bf16.mxu0 0
      %2644 = vmatpush1.bf16.msra.mxu0 0
      %2645 = vmatprep.subr.bf16.mxu0 0
      %2646 = vmatpush1.bf16.msra.mxu0 0
      %2647 = vmatprep.subr.bf16.mxu0 0
      %2648 = vmatpush1.bf16.msra.mxu0 0
      %2649 = vmatprep.subr.bf16.mxu0 0
      %2650 = vmatpush1.bf16.msra.mxu0 0
      %2651 = vmatprep.subr.bf16.mxu0 0
      %2652 = vmatpush1.bf16.msra.mxu0 0
      %2653 = vmatprep.subr.bf16.mxu0 0
      %2654 = vmatpush1.bf16.msra.mxu0 0
      %2655 = vmatprep.subr.bf16.mxu0 0
      %2656 = vmatpush1.bf16.msra.mxu0 0
      %2657 = vmatprep.subr.bf16.mxu0 0
      %2658 = vmatpush1.bf16.msra.mxu0 0
      %2659 = vmatprep.subr.bf16.mxu0 0
      %2660 = vmatpush1.bf16.msra.mxu0 0
      %2661 = vmatprep.subr.bf16.mxu0 0
      %2662 = vmatpush1.bf16.msra.mxu0 0
      %2663 = vmatprep.subr.bf16.mxu0 0
      %2664 = vmatpush1.bf16.msra.mxu0 0
      %2665 = vmatprep.subr.bf16.mxu0 0
      %2666 = vmatpush1.bf16.msra.mxu0 0
      %2667 = vmatprep.subr.bf16.mxu0 0
      %2668 = vmatpush1.bf16.msra.mxu0 0
      %2669 = vmatprep.subr.bf16.mxu0 0
      %2670 = vmatpush1.bf16.msra.mxu0 0
      %2671 = vmatprep.mubr.bf16.mxu0 0
      %2672 = vmatmul.mubr.bf16.gmra.mrb[0].mxu0 %v2628
      %v2673 = vpop.f32.mrb[0].mxu0
      %v2674 = vadd.f32 0.0, %v2673
      %v2675 = vpop.f32.mrb[0].mxu0
      %v2676 = vadd.f32 0.0, %v2675
      %v2677 = vpop.f32.mrb[0].mxu0
      %v2678 = vadd.f32 0.0, %v2677
      %v2679 = vpop.f32.mrb[0].mxu0
      %v2680 = vadd.f32 0.0, %v2679
      %2681 = vmatprep.mubr.bf16.mxu0 0
      %2682 = vmatmul.mubr.bf16.gmra.mrb[0].mxu0 %v2631
      %v2683 = vpop.f32.mrb[0].mxu0
      %v2684 = vadd.f32 0.0, %v2683
      %v2685 = vpop.f32.mrb[0].mxu0
      %v2686 = vadd.f32 0.0, %v2685
      %v2687 = vpop.f32.mrb[0].mxu0
      %v2688 = vadd.f32 0.0, %v2687
      %v2689 = vpop.f32.mrb[0].mxu0
      %v2690 = vadd.f32 0.0, %v2689
      %2691 = vmatprep.mubr.bf16.mxu0 0
      %2692 = vmatmul.mubr.bf16.gmra.mrb[0].mxu0 %v2634
      %v2693 = vpop.f32.mrb[0].mxu0
      %v2694 = vadd.f32 0.0, %v2693
      %v2695 = vpop.f32.mrb[0].mxu0
      %v2696 = vadd.f32 0.0, %v2695
      %v2697 = vpop.f32.mrb[0].mxu0
      %v2698 = vadd.f32 0.0, %v2697
      %v2699 = vpop.f32.mrb[0].mxu0
      %v2700 = vadd.f32 0.0, %v2699
      %2701 = vmatprep.mubr.bf16.mxu0 0
      %2702 = vmatmul.mubr.bf16.gmra.mrb[0].mxu0 %v2637
      %v2703 = vpop.f32.mrb[0].mxu0
      %v2704 = vadd.f32 0.0, %v2703
      %v2705 = vpop.f32.mrb[0].mxu0
      %v2706 = vadd.f32 0.0, %v2705
      %v2707 = vpop.f32.mrb[0].mxu0
      %v2708 = vadd.f32 0.0, %v2707
      %v2709 = vpop.f32.mrb[0].mxu0
      %v2710 = vadd.f32 0.0, %v2709
      %2711 = vdwg.mxu0
      %v2712 = vadd.f32 %v2298, %v2674
      %v2713 = vadd.f32 %v2298, %v2676
      %v2714 = vadd.f32 %v2299, %v2678
      %v2715 = vadd.f32 %v2299, %v2680
      %v2716 = vadd.f32 %v2300, %v2684
      %v2717 = vadd.f32 %v2300, %v2686
      %v2718 = vadd.f32 %v2301, %v2688
      %v2719 = vadd.f32 %v2301, %v2690
      %v2720 = vadd.f32 %v2302, %v2694
      %v2721 = vadd.f32 %v2302, %v2696
      %v2722 = vadd.f32 %v2303, %v2698
      %v2723 = vadd.f32 %v2303, %v2700
      %v2724 = vadd.f32 %v2304, %v2704
      %v2725 = vadd.f32 %v2304, %v2706
      %v2726 = vadd.f32 %v2305, %v2708
      %v2727 = vadd.f32 %v2305, %v2710
      %v2728 = vld [vmem:[#allocation2 + $0x40] sm:$0xff]
      %v2729 = vld [vmem:[#allocation2 + $0x48] sm:$0xff]
      %v2730 = vld [vmem:[#allocation2 + $0x50] sm:$0xff]
      %v2731 = vld [vmem:[#allocation2 + $0x58] sm:$0xff]
      %v2732 = vld [vmem:[#allocation2 + $0x60] sm:$0xff]
      %v2733 = vld [vmem:[#allocation2 + $0x68] sm:$0xff]
      %v2734 = vld [vmem:[#allocation2 + $0x70] sm:$0xff]
      %v2735 = vld [vmem:[#allocation2 + $0x78] sm:$0xff]
      %v2736 = vld [vmem:[#allocation2 + $0xc0] sm:$0xff]
      %v2737 = vld [vmem:[#allocation2 + $0xc8] sm:$0xff]
      %v2738 = vld [vmem:[#allocation2 + $0xd0] sm:$0xff]
      %v2739 = vld [vmem:[#allocation2 + $0xd8] sm:$0xff]
      %v2740 = vld [vmem:[#allocation2 + $0xe0] sm:$0xff]
      %v2741 = vld [vmem:[#allocation2 + $0xe8] sm:$0xff]
      %v2742 = vld [vmem:[#allocation2 + $0xf0] sm:$0xff]
      %v2743 = vld [vmem:[#allocation2 + $0xf8] sm:$0xff]
      %v2744 = vld [vmem:[#allocation2 + $0x140] sm:$0xff]
      %v2745 = vld [vmem:[#allocation2 + $0x148] sm:$0xff]
      %v2746 = vld [vmem:[#allocation2 + $0x150] sm:$0xff]
      %v2747 = vld [vmem:[#allocation2 + $0x158] sm:$0xff]
      %v2748 = vld [vmem:[#allocation2 + $0x160] sm:$0xff]
      %v2749 = vld [vmem:[#allocation2 + $0x168] sm:$0xff]
      %v2750 = vld [vmem:[#allocation2 + $0x170] sm:$0xff]
      %v2751 = vld [vmem:[#allocation2 + $0x178] sm:$0xff]
      %v2752 = vmul.f32 %v2728, %v2736
      %v2753 = vmul.f32 %v2729, %v2737
      %v2754 = vmul.f32 %v2730, %v2738
      %v2755 = vmul.f32 %v2731, %v2739
      %v2756 = vmul.f32 %v2732, %v2740
      %v2757 = vmul.f32 %v2733, %v2741
      %v2758 = vmul.f32 %v2734, %v2742
      %v2759 = vmul.f32 %v2735, %v2743
      %v2760 = vadd.f32 %v2752, %v2754
      %v2761 = vadd.f32 %v2760, %v2756
      %v2762 = vadd.f32 %v2761, %v2758
      %v2763 = vrot.slane %v2762, 4
      %v2764 = vadd.f32 %v2762, %v2763
      %v2765 = vrot.slane %v2764, 2
      %v2766 = vadd.f32 %v2764, %v2765
      %v2767 = vrot.slane %v2766, 1
      %v2768 = vadd.f32 %v2766, %v2767
      %v2769 = vadd.f32 %v2753, %v2755
      %v2770 = vadd.f32 %v2769, %v2757
      %v2771 = vadd.f32 %v2770, %v2759
      %v2772 = vrot.slane %v2771, 4
      %v2773 = vadd.f32 %v2771, %v2772
      %v2774 = vrot.slane %v2773, 2
      %v2775 = vadd.f32 %v2773, %v2774
      %v2776 = vrot.slane %v2775, 1
      %v2777 = vadd.f32 %v2775, %v2776
      %v2778 = vmul.f32 %v2768, 0.17677669
      %v2779 = vmul.f32 %v2777, 0.17677669
      %2780 = vrot.lane.b32.xlu0 %v2736, 64
      %v2781 = vpop.permute.xlu0 %2780
      %2782 = vrot.lane.b32.xlu0 %v2738, 64
      %v2783 = vpop.permute.xlu0 %2782
      %2784 = vrot.lane.b32.xlu0 %v2740, 64
      %v2785 = vpop.permute.xlu0 %2784
      %2786 = vrot.lane.b32.xlu0 %v2742, 64
      %v2787 = vpop.permute.xlu0 %2786
      %2788 = vrot.lane.b32.xlu0 %v2737, 64
      %v2789 = vpop.permute.xlu0 %2788
      %2790 = vrot.lane.b32.xlu0 %v2739, 64
      %v2791 = vpop.permute.xlu0 %2790
      %2792 = vrot.lane.b32.xlu0 %v2741, 64
      %v2793 = vpop.permute.xlu0 %2792
      %2794 = vrot.lane.b32.xlu0 %v2743, 64
      %v2795 = vpop.permute.xlu0 %2794
      %v2796 = vsel %vm2376, %v2781, %v2789
      %v2797 = vsel %vm2376, %v2783, %v2791
      %v2798 = vsel %vm2376, %v2785, %v2793
      %v2799 = vsel %vm2376, %v2787, %v2795
      %v2800 = vsel %vm2376, %v2789, %v2781
      %v2801 = vsel %vm2376, %v2791, %v2783
      %v2802 = vsel %vm2376, %v2793, %v2785
      %v2803 = vsel %vm2376, %v2795, %v2787
      %v2804 = vmul.f32 %v2728, %v2796
      %v2805 = vmul.f32 %v2729, %v2800
      %v2806 = vmul.f32 %v2730, %v2797
      %v2807 = vmul.f32 %v2731, %v2801
      %v2808 = vmul.f32 %v2732, %v2798
      %v2809 = vmul.f32 %v2733, %v2802
      %v2810 = vmul.f32 %v2734, %v2799
      %v2811 = vmul.f32 %v2735, %v2803
      %v2812 = vadd.f32 %v2804, %v2806
      %v2813 = vadd.f32 %v2812, %v2808
      %v2814 = vadd.f32 %v2813, %v2810
      %v2815 = vrot.slane %v2814, 4
      %v2816 = vadd.f32 %v2814, %v2815
      %v2817 = vrot.slane %v2816, 2
      %v2818 = vadd.f32 %v2816, %v2817
      %v2819 = vrot.slane %v2818, 1
      %v2820 = vadd.f32 %v2818, %v2819
      %v2821 = vadd.f32 %v2805, %v2807
      %v2822 = vadd.f32 %v2821, %v2809
      %v2823 = vadd.f32 %v2822, %v2811
      %v2824 = vrot.slane %v2823, 4
      %v2825 = vadd.f32 %v2823, %v2824
      %v2826 = vrot.slane %v2825, 2
      %v2827 = vadd.f32 %v2825, %v2826
      %v2828 = vrot.slane %v2827, 1
      %v2829 = vadd.f32 %v2827, %v2828
      %v2830 = vmul.f32 %v2820, 0.17677669
      %v2831 = vmul.f32 %v2829, 0.17677669
      %v2832 = vmul.f32 %v2728, %v2737
      %v2833 = vmul.f32 %v2729, %v2736
      %v2834 = vmul.f32 %v2730, %v2739
      %v2835 = vmul.f32 %v2731, %v2738
      %v2836 = vmul.f32 %v2732, %v2741
      %v2837 = vmul.f32 %v2733, %v2740
      %v2838 = vmul.f32 %v2734, %v2743
      %v2839 = vmul.f32 %v2735, %v2742
      %v2840 = vadd.f32 %v2832, %v2834
      %v2841 = vadd.f32 %v2840, %v2836
      %v2842 = vadd.f32 %v2841, %v2838
      %v2843 = vrot.slane %v2842, 4
      %v2844 = vadd.f32 %v2842, %v2843
      %v2845 = vrot.slane %v2844, 2
      %v2846 = vadd.f32 %v2844, %v2845
      %v2847 = vrot.slane %v2846, 1
      %v2848 = vadd.f32 %v2846, %v2847
      %v2849 = vadd.f32 %v2833, %v2835
      %v2850 = vadd.f32 %v2849, %v2837
      %v2851 = vadd.f32 %v2850, %v2839
      %v2852 = vrot.slane %v2851, 4
      %v2853 = vadd.f32 %v2851, %v2852
      %v2854 = vrot.slane %v2853, 2
      %v2855 = vadd.f32 %v2853, %v2854
      %v2856 = vrot.slane %v2855, 1
      %v2857 = vadd.f32 %v2855, %v2856
      %v2858 = vmul.f32 %v2848, 0.17677669
      %v2859 = vmul.f32 %v2857, 0.17677669
      %v2860 = vmul.f32 %v2728, %v2800
      %v2861 = vmul.f32 %v2729, %v2796
      %v2862 = vmul.f32 %v2730, %v2801
      %v2863 = vmul.f32 %v2731, %v2797
      %v2864 = vmul.f32 %v2732, %v2802
      %v2865 = vmul.f32 %v2733, %v2798
      %v2866 = vmul.f32 %v2734, %v2803
      %v2867 = vmul.f32 %v2735, %v2799
      %v2868 = vadd.f32 %v2860, %v2862
      %v2869 = vadd.f32 %v2868, %v2864
      %v2870 = vadd.f32 %v2869, %v2866
      %v2871 = vrot.slane %v2870, 4
      %v2872 = vadd.f32 %v2870, %v2871
      %v2873 = vrot.slane %v2872, 2
      %v2874 = vadd.f32 %v2872, %v2873
      %v2875 = vrot.slane %v2874, 1
      %v2876 = vadd.f32 %v2874, %v2875
      %v2877 = vadd.f32 %v2861, %v2863
      %v2878 = vadd.f32 %v2877, %v2865
      %v2879 = vadd.f32 %v2878, %v2867
      %v2880 = vrot.slane %v2879, 4
      %v2881 = vadd.f32 %v2879, %v2880
      %v2882 = vrot.slane %v2881, 2
      %v2883 = vadd.f32 %v2881, %v2882
      %v2884 = vrot.slane %v2883, 1
      %v2885 = vadd.f32 %v2883, %v2884
      %v2886 = vmul.f32 %v2876, 0.17677669
      %v2887 = vmul.f32 %v2885, 0.17677669
      %v2888 = vmax.f32 %v2778, %v2830
      %v2889 = vmax.f32 %v2779, %v2831
      %v2890 = vmax.f32 %v2888, %v2858
      %v2891 = vmax.f32 %v2889, %v2859
      %v2892 = vmax.f32 %v2890, %v2886
      %v2893 = vmax.f32 %v2891, %v2887
      %v2894 = vsub.f32 %v2778, %v2892
      %v2895 = vsub.f32 %v2779, %v2893
      %v2896 = vmul.f32 %v2894, 1.442695
      %v2897 = vpow.pop %v2896
      %v2898 = vmul.f32 %v2895, 1.442695
      %v2899 = vpow.pop %v2898
      %v2900 = vsub.f32 %v2830, %v2892
      %v2901 = vsub.f32 %v2831, %v2893
      %v2902 = vmul.f32 %v2900, 1.442695
      %v2903 = vpow.pop %v2902
      %v2904 = vmul.f32 %v2901, 1.442695
      %v2905 = vpow.pop %v2904
      %v2906 = vsub.f32 %v2858, %v2892
      %v2907 = vsub.f32 %v2859, %v2893
      %v2908 = vmul.f32 %v2906, 1.442695
      %v2909 = vpow.pop %v2908
      %v2910 = vmul.f32 %v2907, 1.442695
      %v2911 = vpow.pop %v2910
      %v2912 = vsub.f32 %v2886, %v2892
      %v2913 = vsub.f32 %v2887, %v2893
      %v2914 = vmul.f32 %v2912, 1.442695
      %v2915 = vpow.pop %v2914
      %v2916 = vmul.f32 %v2913, 1.442695
      %v2917 = vpow.pop %v2916
      %v2918 = vadd.f32 %v2897, %v2903
      %v2919 = vadd.f32 %v2899, %v2905
      %v2920 = vadd.f32 %v2918, %v2909
      %v2921 = vadd.f32 %v2919, %v2911
      %v2922 = vadd.f32 %v2920, %v2915
      %v2923 = vadd.f32 %v2921, %v2917
      %v2924 = vrcp.pop %v2922
      %v2925 = vrcp.pop %v2923
      %v2926 = vmul.f32 %v2897, %v2924
      %v2927 = vmul.f32 %v2899, %v2925
      %v2928 = vmul.f32 %v2926, %v2744
      %v2929 = vmul.f32 %v2927, %v2745
      %v2930 = vmul.f32 %v2926, %v2746
      %v2931 = vmul.f32 %v2927, %v2747
      %v2932 = vmul.f32 %v2926, %v2748
      %v2933 = vmul.f32 %v2927, %v2749
      %v2934 = vmul.f32 %v2926, %v2750
      %v2935 = vmul.f32 %v2927, %v2751
      %2936 = vrot.lane.b32.xlu0 %v2744, 64
      %v2937 = vpop.permute.xlu0 %2936
      %2938 = vrot.lane.b32.xlu0 %v2746, 64
      %v2939 = vpop.permute.xlu0 %2938
      %2940 = vrot.lane.b32.xlu0 %v2748, 64
      %v2941 = vpop.permute.xlu0 %2940
      %2942 = vrot.lane.b32.xlu0 %v2750, 64
      %v2943 = vpop.permute.xlu0 %2942
      %2944 = vrot.lane.b32.xlu0 %v2745, 64
      %v2945 = vpop.permute.xlu0 %2944
      %2946 = vrot.lane.b32.xlu0 %v2747, 64
      %v2947 = vpop.permute.xlu0 %2946
      %2948 = vrot.lane.b32.xlu0 %v2749, 64
      %v2949 = vpop.permute.xlu0 %2948
      %2950 = vrot.lane.b32.xlu0 %v2751, 64
      %v2951 = vpop.permute.xlu0 %2950
      %v2952 = vsel %vm2376, %v2937, %v2945
      %v2953 = vsel %vm2376, %v2939, %v2947
      %v2954 = vsel %vm2376, %v2941, %v2949
      %v2955 = vsel %vm2376, %v2943, %v2951
      %v2956 = vsel %vm2376, %v2945, %v2937
      %v2957 = vsel %vm2376, %v2947, %v2939
      %v2958 = vsel %vm2376, %v2949, %v2941
      %v2959 = vsel %vm2376, %v2951, %v2943
      %v2960 = vmul.f32 %v2903, %v2924
      %v2961 = vmul.f32 %v2905, %v2925
      %v2962 = vmul.f32 %v2960, %v2952
      %v2963 = vmul.f32 %v2961, %v2956
      %v2964 = vmul.f32 %v2960, %v2953
      %v2965 = vmul.f32 %v2961, %v2957
      %v2966 = vmul.f32 %v2960, %v2954
      %v2967 = vmul.f32 %v2961, %v2958
      %v2968 = vmul.f32 %v2960, %v2955
      %v2969 = vmul.f32 %v2961, %v2959
      %v2970 = vadd.f32 %v2928, %v2962
      %v2971 = vadd.f32 %v2929, %v2963
      %v2972 = vadd.f32 %v2930, %v2964
      %v2973 = vadd.f32 %v2931, %v2965
      %v2974 = vadd.f32 %v2932, %v2966
      %v2975 = vadd.f32 %v2933, %v2967
      %v2976 = vadd.f32 %v2934, %v2968
      %v2977 = vadd.f32 %v2935, %v2969
      %v2978 = vmul.f32 %v2909, %v2924
      %v2979 = vmul.f32 %v2911, %v2925
      %v2980 = vmul.f32 %v2978, %v2745
      %v2981 = vmul.f32 %v2979, %v2744
      %v2982 = vmul.f32 %v2978, %v2747
      %v2983 = vmul.f32 %v2979, %v2746
      %v2984 = vmul.f32 %v2978, %v2749
      %v2985 = vmul.f32 %v2979, %v2748
      %v2986 = vmul.f32 %v2978, %v2751
      %v2987 = vmul.f32 %v2979, %v2750
      %v2988 = vadd.f32 %v2970, %v2980
      %v2989 = vadd.f32 %v2971, %v2981
      %v2990 = vadd.f32 %v2972, %v2982
      %v2991 = vadd.f32 %v2973, %v2983
      %v2992 = vadd.f32 %v2974, %v2984
      %v2993 = vadd.f32 %v2975, %v2985
      %v2994 = vadd.f32 %v2976, %v2986
      %v2995 = vadd.f32 %v2977, %v2987
      %v2996 = vmul.f32 %v2915, %v2924
      %v2997 = vmul.f32 %v2917, %v2925
      %v2998 = vmul.f32 %v2996, %v2956
      %v2999 = vmul.f32 %v2997, %v2952
      %v3000 = vmul.f32 %v2996, %v2957
      %v3001 = vmul.f32 %v2997, %v2953
      %v3002 = vmul.f32 %v2996, %v2958
      %v3003 = vmul.f32 %v2997, %v2954
      %v3004 = vmul.f32 %v2996, %v2959
      %v3005 = vmul.f32 %v2997, %v2955
      %v3006 = vadd.f32 %v2988, %v2998
      %v3007 = vadd.f32 %v2989, %v2999
      %v3008 = vadd.f32 %v2990, %v3000
      %v3009 = vadd.f32 %v2991, %v3001
      %v3010 = vadd.f32 %v2992, %v3002
      %v3011 = vadd.f32 %v2993, %v3003
      %v3012 = vadd.f32 %v2994, %v3004
      %v3013 = vadd.f32 %v2995, %v3005
      %s3014 = scalar_lea.vmem %s719, 32
      %v3015 = vld [vmem:[%s3014] sm:$0xf]
      %v3016 = vld [vmem:[%s3014 + $0x4] sm:$0xf]
      %v3017 = vld [vmem:[%s3014 + $0x8] sm:$0xf]
      %v3018 = vld [vmem:[%s3014 + $0xc] sm:$0xf]
      %v3019 = vld [vmem:[%s3014 + $0x10] sm:$0xf]
      %v3020 = vld [vmem:[%s3014 + $0x14] sm:$0xf]
      %v3021 = vld [vmem:[%s3014 + $0x18] sm:$0xf]
      %v3022 = vld [vmem:[%s3014 + $0x1c] sm:$0xf]
      %v3023 = vpack.c.bf16 %v3008, %v3006
      %v3024 = vpack.c.bf16 %v3009, %v3007
      %v3025 = vpack.c.bf16 %v3012, %v3010
      %v3026 = vpack.c.bf16 %v3013, %v3011
      %v3035 = vunpack.c.l.b16 %v3015
      %v3036 = vunpack.c.l.b16 %v3016
      %v3037 = vunpack.c.l.b16 %v3017
      %v3038 = vunpack.c.l.b16 %v3018
      %v3039 = vunpack.c.l.b16 %v3019
      %v3040 = vunpack.c.l.b16 %v3020
      %v3041 = vunpack.c.l.b16 %v3021
      %v3042 = vunpack.c.l.b16 %v3022
      %v3043 = vpack.c.b16 %v3036, %v3035
      %v3044 = vpack.c.b16 %v3038, %v3037
      %v3045 = vpack.c.b16 %v3040, %v3039
      %v3046 = vpack.c.b16 %v3042, %v3041
      %v3048 = vsel %vm812, %v3043, 0
      %v3051 = vsel %vm812, %v3044, 0
      %v3054 = vsel %vm812, %v3045, 0
      %v3057 = vsel %vm812, %v3046, 0
      %3059 = vmatprep.subr.bf16.mxu0 %v3024
      %3060 = vmatpush1.bf16.msra.mxu0 %v3023
      %3061 = vmatprep.subr.bf16.mxu0 %v3026
      %3062 = vmatpush1.bf16.msra.mxu0 %v3025
      %3063 = vmatprep.subr.bf16.mxu0 0
      %3064 = vmatpush1.bf16.msra.mxu0 0
      %3065 = vmatprep.subr.bf16.mxu0 0
      %3066 = vmatpush1.bf16.msra.mxu0 0
      %3067 = vmatprep.subr.bf16.mxu0 0
      %3068 = vmatpush1.bf16.msra.mxu0 0
      %3069 = vmatprep.subr.bf16.mxu0 0
      %3070 = vmatpush1.bf16.msra.mxu0 0
      %3071 = vmatprep.subr.bf16.mxu0 0
      %3072 = vmatpush1.bf16.msra.mxu0 0
      %3073 = vmatprep.subr.bf16.mxu0 0
      %3074 = vmatpush1.bf16.msra.mxu0 0
      %3075 = vmatprep.subr.bf16.mxu0 0
      %3076 = vmatpush1.bf16.msra.mxu0 0
      %3077 = vmatprep.subr.bf16.mxu0 0
      %3078 = vmatpush1.bf16.msra.mxu0 0
      %3079 = vmatprep.subr.bf16.mxu0 0
      %3080 = vmatpush1.bf16.msra.mxu0 0
      %3081 = vmatprep.subr.bf16.mxu0 0
      %3082 = vmatpush1.bf16.msra.mxu0 0
      %3083 = vmatprep.subr.bf16.mxu0 0
      %3084 = vmatpush1.bf16.msra.mxu0 0
      %3085 = vmatprep.subr.bf16.mxu0 0
      %3086 = vmatpush1.bf16.msra.mxu0 0
      %3087 = vmatprep.subr.bf16.mxu0 0
      %3088 = vmatpush1.bf16.msra.mxu0 0
      %3089 = vmatprep.subr.bf16.mxu0 0
      %3090 = vmatpush1.bf16.msra.mxu0 0
      %3091 = vmatprep.mubr.bf16.mxu0 0
      %3092 = vmatmul.mubr.bf16.gmra.mrb[0].mxu0 %v3048
      %v3093 = vpop.f32.mrb[0].mxu0
      %v3094 = vadd.f32 0.0, %v3093
      %v3095 = vpop.f32.mrb[0].mxu0
      %v3096 = vadd.f32 0.0, %v3095
      %v3097 = vpop.f32.mrb[0].mxu0
      %v3098 = vadd.f32 0.0, %v3097
      %v3099 = vpop.f32.mrb[0].mxu0
      %v3100 = vadd.f32 0.0, %v3099
      %3101 = vmatprep.mubr.bf16.mxu0 0
      %3102 = vmatmul.mubr.bf16.gmra.mrb[0].mxu0 %v3051
      %v3103 = vpop.f32.mrb[0].mxu0
      %v3104 = vadd.f32 0.0, %v3103
      %v3105 = vpop.f32.mrb[0].mxu0
      %v3106 = vadd.f32 0.0, %v3105
      %v3107 = vpop.f32.mrb[0].mxu0
      %v3108 = vadd.f32 0.0, %v3107
      %v3109 = vpop.f32.mrb[0].mxu0
      %v3110 = vadd.f32 0.0, %v3109
      %3111 = vmatprep.mubr.bf16.mxu0 0
      %3112 = vmatmul.mubr.bf16.gmra.mrb[0].mxu0 %v3054
      %v3113 = vpop.f32.mrb[0].mxu0
      %v3114 = vadd.f32 0.0, %v3113
      %v3115 = vpop.f32.mrb[0].mxu0
      %v3116 = vadd.f32 0.0, %v3115
      %v3117 = vpop.f32.mrb[0].mxu0
      %v3118 = vadd.f32 0.0, %v3117
      %v3119 = vpop.f32.mrb[0].mxu0
      %v3120 = vadd.f32 0.0, %v3119
      %3121 = vmatprep.mubr.bf16.mxu0 0
      %3122 = vmatmul.mubr.bf16.gmra.mrb[0].mxu0 %v3057
      %v3123 = vpop.f32.mrb[0].mxu0
      %v3124 = vadd.f32 0.0, %v3123
      %v3125 = vpop.f32.mrb[0].mxu0
      %v3126 = vadd.f32 0.0, %v3125
      %v3127 = vpop.f32.mrb[0].mxu0
      %v3128 = vadd.f32 0.0, %v3127
      %v3129 = vpop.f32.mrb[0].mxu0
      %v3130 = vadd.f32 0.0, %v3129
      %3131 = vdwg.mxu0
      %v3132 = vadd.f32 %v2712, %v3094
      %v3133 = vadd.f32 %v2713, %v3096
      %v3134 = vadd.f32 %v2714, %v3098
      %v3135 = vadd.f32 %v2715, %v3100
      %v3136 = vadd.f32 %v2716, %v3104
      %v3137 = vadd.f32 %v2717, %v3106
      %v3138 = vadd.f32 %v2718, %v3108
      %v3139 = vadd.f32 %v2719, %v3110
      %v3140 = vadd.f32 %v2720, %v3114
      %v3141 = vadd.f32 %v2721, %v3116
      %v3142 = vadd.f32 %v2722, %v3118
      %v3143 = vadd.f32 %v2723, %v3120
      %v3144 = vadd.f32 %v2724, %v3124
      %v3145 = vadd.f32 %v2725, %v3126
      %v3146 = vadd.f32 %v2726, %v3128
      %v3147 = vadd.f32 %v2727, %v3130
      %v3148 = vld [vmem:[%s9] sm:$0xf]
      %v3149 = vld [vmem:[%s9 + $0x4] sm:$0xf]
      %v3150 = vld [vmem:[%s9 + $0x8] sm:$0xf]
      %v3151 = vld [vmem:[%s9 + $0xc] sm:$0xf]
      %v3152 = vld [vmem:[%s9 + $0x10] sm:$0xf]
      %v3153 = vld [vmem:[%s9 + $0x14] sm:$0xf]
      %v3154 = vld [vmem:[%s9 + $0x18] sm:$0xf]
      %v3155 = vld [vmem:[%s9 + $0x1c] sm:$0xf]
      %v3156 = vld [vmem:[%s9 + $0x20] sm:$0xf]
      %v3157 = vld [vmem:[%s9 + $0x24] sm:$0xf]
      %v3158 = vld [vmem:[%s9 + $0x28] sm:$0xf]
      %v3159 = vld [vmem:[%s9 + $0x2c] sm:$0xf]
      %v3160 = vld [vmem:[%s9 + $0x30] sm:$0xf]
      %v3161 = vld [vmem:[%s9 + $0x34] sm:$0xf]
      %v3162 = vld [vmem:[%s9 + $0x38] sm:$0xf]
      %v3163 = vld [vmem:[%s9 + $0x3c] sm:$0xf]
      %v3164 = vld [vmem:[%s9 + $0x40] sm:$0xf]
      %v3165 = vld [vmem:[%s9 + $0x44] sm:$0xf]
      %v3166 = vld [vmem:[%s9 + $0x48] sm:$0xf]
      %v3167 = vld [vmem:[%s9 + $0x4c] sm:$0xf]
      %v3168 = vld [vmem:[%s9 + $0x50] sm:$0xf]
      %v3169 = vld [vmem:[%s9 + $0x54] sm:$0xf]
      %v3170 = vld [vmem:[%s9 + $0x58] sm:$0xf]
      %v3171 = vld [vmem:[%s9 + $0x5c] sm:$0xf]
      %v3172 = vld [vmem:[%s9 + $0x60] sm:$0xf]
      %v3173 = vld [vmem:[%s9 + $0x64] sm:$0xf]
      %v3174 = vld [vmem:[%s9 + $0x68] sm:$0xf]
      %v3175 = vld [vmem:[%s9 + $0x6c] sm:$0xf]
      %v3176 = vld [vmem:[%s9 + $0x70] sm:$0xf]
      %v3177 = vld [vmem:[%s9 + $0x74] sm:$0xf]
      %v3178 = vld [vmem:[%s9 + $0x78] sm:$0xf]
      %v3179 = vld [vmem:[%s9 + $0x7c] sm:$0xf]
      %v3180 = vpack.c.bf16 %v3134, %v3132
      %v3181 = vpack.c.bf16 %v3135, %v3133
      %v3182 = vpack.c.bf16 %v3138, %v3136
      %v3183 = vpack.c.bf16 %v3139, %v3137
      %v3184 = vpack.c.bf16 %v3142, %v3140
      %v3185 = vpack.c.bf16 %v3143, %v3141
      %v3186 = vpack.c.bf16 %v3146, %v3144
      %v3187 = vpack.c.bf16 %v3147, %v3145
      %v3220 = vunpack.c.l.b16 %v3148
      %v3221 = vunpack.c.l.b16 %v3149
      %v3222 = vunpack.c.l.b16 %v3150
      %v3223 = vunpack.c.l.b16 %v3151
      %v3224 = vunpack.c.l.b16 %v3152
      %v3225 = vunpack.c.l.b16 %v3153
      %v3226 = vunpack.c.l.b16 %v3154
      %v3227 = vunpack.c.l.b16 %v3155
      %v3228 = vunpack.c.l.b16 %v3156
      %v3229 = vunpack.c.l.b16 %v3157
      %v3230 = vunpack.c.l.b16 %v3158
      %v3231 = vunpack.c.l.b16 %v3159
      %v3232 = vunpack.c.l.b16 %v3160
      %v3233 = vunpack.c.l.b16 %v3161
      %v3234 = vunpack.c.l.b16 %v3162
      %v3235 = vunpack.c.l.b16 %v3163
      %v3236 = vunpack.c.l.b16 %v3164
      %v3237 = vunpack.c.l.b16 %v3165
      %v3238 = vunpack.c.l.b16 %v3166
      %v3239 = vunpack.c.l.b16 %v3167
      %v3240 = vunpack.c.l.b16 %v3168
      %v3241 = vunpack.c.l.b16 %v3169
      %v3242 = vunpack.c.l.b16 %v3170
      %v3243 = vunpack.c.l.b16 %v3171
      %v3244 = vunpack.c.l.b16 %v3172
      %v3245 = vunpack.c.l.b16 %v3173
      %v3246 = vunpack.c.l.b16 %v3174
      %v3247 = vunpack.c.l.b16 %v3175
      %v3248 = vunpack.c.l.b16 %v3176
      %v3249 = vunpack.c.l.b16 %v3177
      %v3250 = vunpack.c.l.b16 %v3178
      %v3251 = vunpack.c.l.b16 %v3179
      %v3252 = vpack.c.b16 %v3221, %v3220
      %v3253 = vpack.c.b16 %v3223, %v3222
      %v3254 = vpack.c.b16 %v3225, %v3224
      %v3255 = vpack.c.b16 %v3227, %v3226
      %v3256 = vpack.c.b16 %v3229, %v3228
      %v3257 = vpack.c.b16 %v3231, %v3230
      %v3258 = vpack.c.b16 %v3233, %v3232
      %v3259 = vpack.c.b16 %v3235, %v3234
      %v3260 = vpack.c.b16 %v3237, %v3236
      %v3261 = vpack.c.b16 %v3239, %v3238
      %v3262 = vpack.c.b16 %v3241, %v3240
      %v3263 = vpack.c.b16 %v3243, %v3242
      %v3264 = vpack.c.b16 %v3245, %v3244
      %v3265 = vpack.c.b16 %v3247, %v3246
      %v3266 = vpack.c.b16 %v3249, %v3248
      %v3267 = vpack.c.b16 %v3251, %v3250
      %3284 = vmatprep.subr.bf16.mxu0 0
      %3285 = vmatpush1.bf16.msra.mxu0 %v3252
      %3286 = vmatprep.subr.bf16.mxu0 0
      %3287 = vmatpush1.bf16.msra.mxu0 %v3253
      %3288 = vmatprep.subr.bf16.mxu0 0
      %3289 = vmatpush1.bf16.msra.mxu0 %v3254
      %3290 = vmatprep.subr.bf16.mxu0 0
      %3291 = vmatpush1.bf16.msra.mxu0 %v3255
      %3292 = vmatprep.subr.bf16.mxu0 0
      %3293 = vmatpush1.bf16.msra.mxu0 %v3256
      %3294 = vmatprep.subr.bf16.mxu0 0
      %3295 = vmatpush1.bf16.msra.mxu0 %v3257
      %3296 = vmatprep.subr.bf16.mxu0 0
      %3297 = vmatpush1.bf16.msra.mxu0 %v3258
      %3298 = vmatprep.subr.bf16.mxu0 0
      %3299 = vmatpush1.bf16.msra.mxu0 %v3259
      %3300 = vmatprep.subr.bf16.mxu0 0
      %3301 = vmatpush1.bf16.msra.mxu0 %v3260
      %3302 = vmatprep.subr.bf16.mxu0 0
      %3303 = vmatpush1.bf16.msra.mxu0 %v3261
      %3304 = vmatprep.subr.bf16.mxu0 0
      %3305 = vmatpush1.bf16.msra.mxu0 %v3262
      %3306 = vmatprep.subr.bf16.mxu0 0
      %3307 = vmatpush1.bf16.msra.mxu0 %v3263
      %3308 = vmatprep.subr.bf16.mxu0 0
      %3309 = vmatpush1.bf16.msra.mxu0 %v3264
      %3310 = vmatprep.subr.bf16.mxu0 0
      %3311 = vmatpush1.bf16.msra.mxu0 %v3265
      %3312 = vmatprep.subr.bf16.mxu0 0
      %3313 = vmatpush1.bf16.msra.mxu0 %v3266
      %3314 = vmatprep.subr.bf16.mxu0 0
      %3315 = vmatpush1.bf16.msra.mxu0 %v3267
      %3316 = vmatprep.mubr.bf16.mxu0 %v3181
      %3317 = vmatmul.mubr.bf16.gmra.mrb[0].mxu0 %v3180
      %v3318 = vpop.f32.mrb[0].mxu0
      %v3319 = vadd.f32 0.0, %v3318
      %v3320 = vpop.f32.mrb[0].mxu0
      %v3321 = vpop.f32.mrb[0].mxu0
      %v3322 = vadd.f32 0.0, %v3321
      %v3323 = vpop.f32.mrb[0].mxu0
      %3324 = vmatprep.mubr.bf16.mxu0 %v3183
      %3325 = vmatmul.mubr.bf16.gmra.mrb[0].mxu0 %v3182
      %v3326 = vpop.f32.mrb[0].mxu0
      %v3327 = vadd.f32 0.0, %v3326
      %v3328 = vpop.f32.mrb[0].mxu0
      %v3329 = vpop.f32.mrb[0].mxu0
      %v3330 = vadd.f32 0.0, %v3329
      %v3331 = vpop.f32.mrb[0].mxu0
      %3332 = vmatprep.mubr.bf16.mxu0 %v3185
      %3333 = vmatmul.mubr.bf16.gmra.mrb[0].mxu0 %v3184
      %v3334 = vpop.f32.mrb[0].mxu0
      %v3335 = vadd.f32 0.0, %v3334
      %v3336 = vpop.f32.mrb[0].mxu0
      %v3337 = vpop.f32.mrb[0].mxu0
      %v3338 = vadd.f32 0.0, %v3337
      %v3339 = vpop.f32.mrb[0].mxu0
      %3340 = vmatprep.mubr.bf16.mxu0 %v3187
      %3341 = vmatmul.mubr.bf16.gmra.mrb[0].mxu0 %v3186
      %v3342 = vpop.f32.mrb[0].mxu0
      %v3343 = vadd.f32 0.0, %v3342
      %v3344 = vpop.f32.mrb[0].mxu0
      %v3345 = vpop.f32.mrb[0].mxu0
      %v3346 = vadd.f32 0.0, %v3345
      %v3347 = vpop.f32.mrb[0].mxu0
      %3348 = vdwg.mxu0
      %v3349 = vld [vmem:[%s729] sm:$0xf]
      %v3350 = vld [vmem:[%s729 + $0x4] sm:$0xf]
      %v3351 = vld [vmem:[%s729 + $0x8] sm:$0xf]
      %v3352 = vld [vmem:[%s729 + $0xc] sm:$0xf]
      %v3353 = vpack.c.bf16 %v3322, %v3319
      %v3354 = vpack.c.bf16 %v3330, %v3327
      %v3355 = vpack.c.bf16 %v3338, %v3335
      %v3356 = vpack.c.bf16 %v3346, %v3343
      %v3357 = vld [vmem:[%s734] sm:$0xff]
      %v3358 = vld [vmem:[%s734 + $0x8] sm:$0xff]
      %v3359 = vld [vmem:[%s734 + $0x10] sm:$0xff]
      %v3360 = vld [vmem:[%s734 + $0x18] sm:$0xff]
      %3362 = vset.pattern.permute.xlu0 0
      %3363 = vperm.xlu0 %3362, %v3357
      %v3364 = vpop.permute.xlu0 %3363
      %3367 = vset.pattern.permute.xlu0 0
      %3368 = vperm.xlu0 %3367, %v3358
      %v3369 = vpop.permute.xlu0 %3368
      %3372 = vset.pattern.permute.xlu0 0
      %3373 = vperm.xlu0 %3372, %v3359
      %v3374 = vpop.permute.xlu0 %3373
      %3377 = vset.pattern.permute.xlu0 0
      %3378 = vperm.xlu0 %3377, %v3360
      %v3379 = vpop.permute.xlu0 %3378
      %v3385 = vunpack.c.l.b16 %v3349
      %v3386 = vunpack.c.l.b16 %v3350
      %v3387 = vunpack.c.l.b16 %v3351
      %v3388 = vunpack.c.l.b16 %v3352
      %v3389 = vpack.c.b16 %v3386, %v3385
      %v3390 = vpack.c.b16 %v3388, %v3387
      %v3392 = vsel %vm2012, %v3389, 0
      %v3395 = vsel %vm2012, %v3390, 0
      %3397 = vmatprep.subr.bf16.mxu0 0
      %3398 = vmatpush1.bf16.msra.mxu0 %v3353
      %3399 = vmatprep.subr.bf16.mxu0 0
      %3400 = vmatpush1.bf16.msra.mxu0 %v3354
      %3401 = vmatprep.subr.bf16.mxu0 0
      %3402 = vmatpush1.bf16.msra.mxu0 %v3355
      %3403 = vmatprep.subr.bf16.mxu0 0
      %3404 = vmatpush1.bf16.msra.mxu0 %v3356
      %3405 = vmatprep.subr.bf16.mxu0 0
      %3406 = vmatpush1.bf16.msra.mxu0 0
      %3407 = vmatprep.subr.bf16.mxu0 0
      %3408 = vmatpush1.bf16.msra.mxu0 0
      %3409 = vmatprep.subr.bf16.mxu0 0
      %3410 = vmatpush1.bf16.msra.mxu0 0
      %3411 = vmatprep.subr.bf16.mxu0 0
      %3412 = vmatpush1.bf16.msra.mxu0 0
      %3413 = vmatprep.subr.bf16.mxu0 0
      %3414 = vmatpush1.bf16.msra.mxu0 0
      %3415 = vmatprep.subr.bf16.mxu0 0
      %3416 = vmatpush1.bf16.msra.mxu0 0
      %3417 = vmatprep.subr.bf16.mxu0 0
      %3418 = vmatpush1.bf16.msra.mxu0 0
      %3419 = vmatprep.subr.bf16.mxu0 0
      %3420 = vmatpush1.bf16.msra.mxu0 0
      %3421 = vmatprep.subr.bf16.mxu0 0
      %3422 = vmatpush1.bf16.msra.mxu0 0
      %3423 = vmatprep.subr.bf16.mxu0 0
      %3424 = vmatpush1.bf16.msra.mxu0 0
      %3425 = vmatprep.subr.bf16.mxu0 0
      %3426 = vmatpush1.bf16.msra.mxu0 0
      %3427 = vmatprep.subr.bf16.mxu0 0
      %3428 = vmatpush1.bf16.msra.mxu0 0
      %3429 = vmatprep.mubr.bf16.mxu0 0
      %3430 = vmatmul.mubr.bf16.gmra.mrb[0].mxu0 %v3392
      %v3431 = vpop.f32.mrb[0].mxu0
      %v3432 = vadd.f32 %v3364, %v3431
      %v3433 = vpop.f32.mrb[0].mxu0
      %v3434 = vpop.f32.mrb[0].mxu0
      %v3435 = vadd.f32 %v3369, %v3434
      %v3436 = vpop.f32.mrb[0].mxu0
      %3437 = vmatprep.mubr.bf16.mxu0 0
      %3438 = vmatmul.mubr.bf16.gmra.mrb[0].mxu0 %v3395
      %v3439 = vpop.f32.mrb[0].mxu0
      %v3440 = vadd.f32 %v3374, %v3439
      %v3441 = vpop.f32.mrb[0].mxu0
      %v3442 = vpop.f32.mrb[0].mxu0
      %v3443 = vadd.f32 %v3379, %v3442
      %v3444 = vpop.f32.mrb[0].mxu0
      %3445 = vdwg.mxu0
      %v3446 = vmax.f32 %v3432, 0.0
      %v3447 = vmax.f32 %v3435, 0.0
      %v3448 = vmax.f32 %v3440, 0.0
      %v3449 = vmax.f32 %v3443, 0.0
      %v3450 = vld [vmem:[%s738] sm:$0x3]
      %v3451 = vpack.c.bf16 %v3447, %v3446
      %v3452 = vpack.c.bf16 %v3449, %v3448
      %v3453 = vld [vmem:[%s742] sm:$0xf]
      %3455 = vset.pattern.permute.xlu0 0
      %3456 = vperm.xlu0 %3455, %v3453
      %v3457 = vpop.permute.xlu0 %3456
      %v3460 = vsel %vm812, %v3450, 0
      %3462 = vmatprep.subr.bf16.mxu0 0
      %3463 = vmatpush1.bf16.msra.mxu0 %v3451
      %3464 = vmatprep.subr.bf16.mxu0 0
      %3465 = vmatpush1.bf16.msra.mxu0 %v3452
      %3466 = vmatprep.subr.bf16.mxu0 0
      %3467 = vmatpush1.bf16.msra.mxu0 0
      %3468 = vmatprep.subr.bf16.mxu0 0
      %3469 = vmatpush1.bf16.msra.mxu0 0
      %3470 = vmatprep.subr.bf16.mxu0 0
      %3471 = vmatpush1.bf16.msra.mxu0 0
      %3472 = vmatprep.subr.bf16.mxu0 0
      %3473 = vmatpush1.bf16.msra.mxu0 0
      %3474 = vmatprep.subr.bf16.mxu0 0
      %3475 = vmatpush1.bf16.msra.mxu0 0
      %3476 = vmatprep.subr.bf16.mxu0 0
      %3477 = vmatpush1.bf16.msra.mxu0 0
      %3478 = vmatprep.subr.bf16.mxu0 0
      %3479 = vmatpush1.bf16.msra.mxu0 0
      %3480 = vmatprep.subr.bf16.mxu0 0
      %3481 = vmatpush1.bf16.msra.mxu0 0
      %3482 = vmatprep.subr.bf16.mxu0 0
      %3483 = vmatpush1.bf16.msra.mxu0 0
      %3484 = vmatprep.subr.bf16.mxu0 0
      %3485 = vmatpush1.bf16.msra.mxu0 0
      %3486 = vmatprep.subr.bf16.mxu0 0
      %3487 = vmatpush1.bf16.msra.mxu0 0
      %3488 = vmatprep.subr.bf16.mxu0 0
      %3489 = vmatpush1.bf16.msra.mxu0 0
      %3490 = vmatprep.subr.bf16.mxu0 0
      %3491 = vmatpush1.bf16.msra.mxu0 0
      %3492 = vmatprep.subr.bf16.mxu0 0
      %3493 = vmatpush1.bf16.msra.mxu0 0
      %3494 = vmatprep.mubr.bf16.mxu0 0
      %3495 = vmatmul.mubr.bf16.gmra.mrb[0].mxu0 %v3460
      %v3496 = vpop.f32.mrb[0].mxu0
      %v3497 = vadd.f32 %v3457, %v3496
      %v3498 = vpop.f32.mrb[0].mxu0
      %v3499 = vpop.f32.mrb[0].mxu0
      %v3500 = vpop.f32.mrb[0].mxu0
      %3501 = vdwg.mxu0
      %v3502 = vld [vmem:[%s745] sm:$0x1]
      %v3503 = vld [vmem:[%s748] sm:$0x1]
      %3505 = vset.pattern.permute.xlu0 0
      %3506 = vperm.xlu0 %3505, %v3503
      %v3507 = vpop.permute.xlu0 %3506
      %v3509 = vlaneseq
      %v3510 = vshrl.u32 %v3509, 7
      %v3511 = vsub.s32 0, %v3510
      %v3512 = vrot.slane %v3507, %v3511
      %v3514 = vsel %vm812, %v3502, 0
      %3516 = vmatprep.subr.bf16.mxu0 0
      %3517 = vmatpush1.bf16.msra.mxu0 %v3451
      %3518 = vmatprep.subr.bf16.mxu0 0
      %3519 = vmatpush1.bf16.msra.mxu0 %v3452
      %3520 = vmatprep.subr.bf16.mxu0 0
      %3521 = vmatpush1.bf16.msra.mxu0 0
      %3522 = vmatprep.subr.bf16.mxu0 0
      %3523 = vmatpush1.bf16.msra.mxu0 0
      %3524 = vmatprep.subr.bf16.mxu0 0
      %3525 = vmatpush1.bf16.msra.mxu0 0
      %3526 = vmatprep.subr.bf16.mxu0 0
      %3527 = vmatpush1.bf16.msra.mxu0 0
      %3528 = vmatprep.subr.bf16.mxu0 0
      %3529 = vmatpush1.bf16.msra.mxu0 0
      %3530 = vmatprep.subr.bf16.mxu0 0
      %3531 = vmatpush1.bf16.msra.mxu0 0
      %3532 = vmatprep.subr.bf16.mxu0 0
      %3533 = vmatpush1.bf16.msra.mxu0 0
      %3534 = vmatprep.subr.bf16.mxu0 0
      %3535 = vmatpush1.bf16.msra.mxu0 0
      %3536 = vmatprep.subr.bf16.mxu0 0
      %3537 = vmatpush1.bf16.msra.mxu0 0
      %3538 = vmatprep.subr.bf16.mxu0 0
      %3539 = vmatpush1.bf16.msra.mxu0 0
      %3540 = vmatprep.subr.bf16.mxu0 0
      %3541 = vmatpush1.bf16.msra.mxu0 0
      %3542 = vmatprep.subr.bf16.mxu0 0
      %3543 = vmatpush1.bf16.msra.mxu0 0
      %3544 = vmatprep.subr.bf16.mxu0 0
      %3545 = vmatpush1.bf16.msra.mxu0 0
      %3546 = vmatprep.subr.bf16.mxu0 0
      %3547 = vmatpush1.bf16.msra.mxu0 0
      %3548 = vmatprep.mubr.bf16.mxu0 0
      %3549 = vmatmul.mubr.bf16.gmra.mrb[0].mxu0 %v3514
      %v3550 = vpop.f32.mrb[0].mxu0
      %v3551 = vadd.f32 %v3512, %v3550
      %v3552 = vpop.f32.mrb[0].mxu0
      %v3553 = vpop.f32.mrb[0].mxu0
      %v3554 = vpop.f32.mrb[0].mxu0
      %3555 = vdwg.mxu0
      %v3556 = vlaneseq
      %v3557 = vshrl.u32 %v3556, 7
      %v3558 = vsub.s32 0, %v3557
      %v3559 = vrot.slane %v3551, %v3558
      %v3560 = vadd.f32 %v3559, %v3497
      %vm3561 = vcmask 11264
      %v3562 = vsel %vm3561, %v3497, 0.0
      %v3563 = vrot.slane %v3562, 4
      %v3564 = vadd.f32 %v3562, %v3563
      %v3565 = vrot.slane %v3564, 2
      %v3566 = vadd.f32 %v3564, %v3565
      %v3567 = vrot.slane %v3566, 1
      %v3568 = vadd.f32 %v3566, %v3567
      %v3569 = vrcp.pop 4.0
      %v3570 = vmul.f32 %v3568, %v3569
      %v3571 = vsub.f32 %v3560, %v3570
      %3572 = vst.msk [vmem:[%s752] sm:$0xf] %vm3561, %v3571
      %p3573 = scmp.lt.s32.totalorder %s27, 1
      %s3574 = scalar_select %p3573, %s27, 1
      %s3575 = smul.addr %s3574, 4
      %s3576 = scalar_lea.vmem %s16, %s3575
      // Predicated region
      $region85: #{tpu_custom_call.1} parent=83 // pred_check
        %p3577 = pneg %p451
      $region86: #{tpu_custom_call.1} parent=83 // pred_check_branch
        %3579 = sbr.rel (%p3577) target = $region88
      $region87: #{tpu_custom_call.1} parent=83 // pred_region
        _
      $region88: #{tpu_custom_call.1} parent=83 // pred_fallthru
        _
    $region84: #{tpu_custom_call.1} parent=5 // pred_fallthru
      _
    %p3580 = scmp.le.s32.totalorder 2, %s22
    // Predicated region
    $region89: #{tpu_custom_call.1} parent=5 // pred_check
      %p3581 = pneg %p3580
    $region90: #{tpu_custom_call.1} parent=5 // pred_check_branch
      %3583 = sbr.rel (%p3581) target = $region92
    $region91: #{tpu_custom_call.1} parent=5 // pred_region
      %s3584 = ssub.s32 %s22, 2
      // Predicated region
      $region93: #{tpu_custom_call.1} parent=91 // pred_check
        %p3585 = pneg %p457
      $region94: #{tpu_custom_call.1} parent=91 // pred_check_branch
        %3587 = sbr.rel (%p3585) target = $region96
      $region95: #{tpu_custom_call.1} parent=91 // pred_region
        %p3588 = scmp.lt.s32.totalorder %s28, 1
        %s3589 = scalar_select %p3588, %s28, 1
        %s3590 = smul.addr %s3589, 4
        %s3591 = scalar_lea.vmem %s16, %s3590
      $region96: #{tpu_custom_call.1} parent=91 // pred_fallthru
        _
    $region92: #{tpu_custom_call.1} parent=5 // pred_fallthru
      _
  $region6: #{tpu_custom_call.1} parent=0 // loop_footer
    %s26 = sadd.s32 1, %s22
  $region7: #{tpu_custom_call.1} parent=0 // loop_footer_branch
    %21 = sbr.rel target = $region3
  $region8: #{tpu_custom_call.1} parent=0 // loop_exit
    _

</llo_original>
